<compile_context>
chip_gen: v6e
topology: v6e:2x2x1
jax: 0.10.0
libtpu: 0.0.40
codegen_flags: <defaults>
</compile_context>

<pallas_src>
import functools

import jax
import jax.numpy as jnp
from jax.experimental import pallas as pl
from jax.experimental.pallas import tpu as pltpu

LANE = 128
SUBLANE = 8


# ---------------------------------------------------------------------------
# Fused kernel: layer-1 LSTM -> layer-2 LSTM -> Linear, all resident in VMEM.
# ---------------------------------------------------------------------------
def _fused_lstm_mlp_kernel(
    x_ref,                        # (T*Bp, in_dim)
    wih1_ref, whh1_ref, b1_ref,   # (in_dim,4H), (H,4H), (1,4H)   gates [i,f,o,g]
    w2_ref, b2_ref,               # (2H,4H) = [Wih2;Whh2], (1,4H)  gates [i,f,o,g]
    mlpw_ref, mlpb_ref,           # (H, n_pad), (1, n_pad)
    out_ref,                      # (T*Bp, n_pad)
    gx1_scr,                      # (T*Bp, 4H)  hoisted layer-1 gate inputs
    h2_scr,                       # (T*Bp, H)   layer-2 hidden states
    *, seq_len, batch, hidden, in_dim,
):
    T, B, H = seq_len, batch, hidden
    f32 = jnp.float32

    # Layer-1 input projection hoisted out of the recurrence.  K = in_dim (=2)
    # is far too small for the MXU, so use VPU broadcast multiply-adds instead.
    x = x_ref[...]
    gx1 = x[:, 0:1] * wih1_ref[0:1, :] + b1_ref[...]
    for d in range(1, in_dim):
        gx1 = gx1 + x[:, d:d + 1] * wih1_ref[d:d + 1, :]
    gx1_scr[...] = gx1

    def gates(g):
        # Gate columns pre-permuted host-side to [i, f, o, g]:
        # ONE sigmoid over a contiguous (B, 3H) slice + ONE tanh over (B, H).
        sg = jax.nn.sigmoid(g[:, 0:3 * H])
        return (sg[:, 0:H], sg[:, H:2 * H], sg[:, 2 * H:3 * H],
                jnp.tanh(g[:, 3 * H:4 * H]))

    h1 = jnp.zeros((B, H), f32)
    c1 = jnp.zeros((B, H), f32)
    h2 = jnp.zeros((B, H), f32)
    c2 = jnp.zeros((B, H), f32)

    # T is static -> fully unrolled: one basic block, so layer-1 step t and
    # layer-2 step t-1 (independent) overlap under the LLO scheduler.
    for t in range(T):
        # ---- layer-1 step t: only the serial part (h1 @ Whh1 + gx1[t]).
        g1 = gx1_scr[pl.ds(t * B, B), :] + jnp.dot(
            h1, whh1_ref[...], preferred_element_type=f32)
        i1, f1, o1, gg1 = gates(g1)
        c1 = f1 * c1 + i1 * gg1
        h1 = o1 * jnp.tanh(c1)

        # ---- layer-2 step t: input projection fused into the recurrence
        # matmul -> single (B, 2H) @ (2H, 4H) MXU pass per step.
        x2 = jnp.concatenate([h1, h2], axis=1)          # (B, 2H)
        g2 = jnp.dot(x2, w2_ref[...], preferred_element_type=f32) + b2_ref[...]
        i2, f2, o2, gg2 = gates(g2)
        c2 = f2 * c2 + i2 * gg2
        h2 = o2 * jnp.tanh(c2)
        h2_scr[pl.ds(t * B, B), :] = h2                  # full-tile (8,128) store

    # Final Linear epilogue: one batched (T*Bp, H) @ (H, n_pad) matmul.
    # n_pad is a multiple of 128 -> lane-dense, unmasked output stores.
    out_ref[...] = (
        jnp.dot(h2_scr[...], mlpw_ref[...], preferred_element_type=f32)
        + mlpb_ref[...]
    )


def fused_forward(x2d, kp, *, seq_len, batch_pad, hidden, in_dim):
    T, B, H = seq_len, batch_pad, hidden
    n_pad = kp["mlp_w_pad"].shape[1]
    kernel = functools.partial(
        _fused_lstm_mlp_kernel, seq_len=T, batch=B, hidden=H, in_dim=in_dim)
    return pl.pallas_call(
        kernel,
        out_shape=jax.ShapeDtypeStruct((T * B, n_pad), jnp.float32),
        grid_spec=pltpu.PrefetchScalarGridSpec(
            num_scalar_prefetch=0,
            grid=(1,),
            in_specs=[
                pl.BlockSpec((T * B, in_dim), lambda i: (0, 0)),
                pl.BlockSpec((in_dim, 4 * H), lambda i: (0, 0)),
                pl.BlockSpec((H, 4 * H), lambda i: (0, 0)),
                pl.BlockSpec((1, 4 * H), lambda i: (0, 0)),
                pl.BlockSpec((2 * H, 4 * H), lambda i: (0, 0)),
                pl.BlockSpec((1, 4 * H), lambda i: (0, 0)),
                pl.BlockSpec((H, n_pad), lambda i: (0, 0)),
                pl.BlockSpec((1, n_pad), lambda i: (0, 0)),
            ],
            out_specs=pl.BlockSpec((T * B, n_pad), lambda i: (0, 0)),
            scratch_shapes=[
                pltpu.VMEM((T * B, 4 * H), jnp.float32),   # gx1
                pltpu.VMEM((T * B, H), jnp.float32),       # h2 sequence
            ],
        ),
        compiler_params=pltpu.CompilerParams(dimension_semantics=("arbitrary",)),
    )(x2d, kp["wih1_t"], kp["whh1_t"], kp["b1"],
      kp["w2_cat"], kp["b2"], kp["mlp_w_pad"], kp["mlp_b_pad"])


# ---------------------------------------------------------------------------
# Parameter construction (PyTorch nn.LSTM / nn.Linear conventions) and the
# host-side re-layout into the kernel's format.
# ---------------------------------------------------------------------------
def init_params(key, input_size, hidden_size, num_layers):
    params = {"lstm": []}
    k = 1.0 / jnp.sqrt(hidden_size)
    in_dim = input_size
    for _ in range(num_layers):
        key, k1, k2, k3, k4 = jax.random.split(key, 5)
        params["lstm"].append({
            # PyTorch layout: rows grouped [i, f, g, o].
            "w_ih": jax.random.uniform(k1, (4 * hidden_size, in_dim), jnp.float32, -k, k),
            "w_hh": jax.random.uniform(k2, (4 * hidden_size, hidden_size), jnp.float32, -k, k),
            "b_ih": jax.random.uniform(k3, (4 * hidden_size,), jnp.float32, -k, k),
            "b_hh": jax.random.uniform(k4, (4 * hidden_size,), jnp.float32, -k, k),
        })
        in_dim = hidden_size
    key, k5, k6 = jax.random.split(key, 3)
    params["mlp_w"] = jax.random.uniform(k5, (input_size, hidden_size), jnp.float32, -k, k)
    params["mlp_b"] = jax.random.uniform(k6, (input_size,), jnp.float32, -k, k)
    return params


def _permute_gate_rows(w, H):
    # PyTorch gate row order [i, f, g, o] -> kernel order [i, f, o, g].
    return jnp.concatenate(
        [w[0 * H:1 * H], w[1 * H:2 * H], w[3 * H:4 * H], w[2 * H:3 * H]], axis=0)


def prepare_kernel_params(params, hidden_size, input_size):
    assert len(params["lstm"]) == 2, "fused kernel implements num_layers=2"
    H = hidden_size
    p1, p2 = params["lstm"]
    kp = {}
    kp["wih1_t"] = _permute_gate_rows(p1["w_ih"], H).T                       # (in, 4H)
    kp["whh1_t"] = _permute_gate_rows(p1["w_hh"], H).T                       # (H, 4H)
    kp["b1"] = _permute_gate_rows((p1["b_ih"] + p1["b_hh"])[:, None], H).T   # (1, 4H)
    wih2_t = _permute_gate_rows(p2["w_ih"], H).T                             # (H, 4H)
    whh2_t = _permute_gate_rows(p2["w_hh"], H).T                             # (H, 4H)
    kp["w2_cat"] = jnp.concatenate([wih2_t, whh2_t], axis=0)                 # (2H, 4H)
    kp["b2"] = _permute_gate_rows((p2["b_ih"] + p2["b_hh"])[:, None], H).T   # (1, 4H)
    n_pad = max(LANE, ((input_size + LANE - 1) // LANE) * LANE)
    mlp_w_t = params["mlp_w"].T                                              # (H, in)
    kp["mlp_w_pad"] = jnp.zeros((H, n_pad), jnp.float32).at[:, :input_size].set(mlp_w_t)
    kp["mlp_b_pad"] = jnp.zeros((1, n_pad), jnp.float32).at[0, :input_size].set(params["mlp_b"])
    return kp


# ---------------------------------------------------------------------------
# Full model forward (matches PyTorch Model.forward, flag='LSTM', 2 layers).
# ---------------------------------------------------------------------------
def model_forward(obs_traj_rel, params, kernel_params, hidden):
    T, B, in_dim = obs_traj_rel.shape
    # Pad batch to a full sublane tile so every per-step access is (8, *).
    B_pad = max(SUBLANE, ((B + SUBLANE - 1) // SUBLANE) * SUBLANE)
    x_p = jnp.zeros((T, B_pad, in_dim), jnp.float32).at[:, :B, :].set(obs_traj_rel)
    x2d = x_p.reshape(T * B_pad, in_dim)                 # row-major, matches .view
    out_pad = fused_forward(
        x2d, kernel_params,
        seq_len=T, batch_pad=B_pad, hidden=hidden, in_dim=in_dim)
    n_out = params["mlp_w"].shape[0]
    return out_pad.reshape(T, B_pad, -1)[:, :B, :n_out]


# Pure-JAX reference (standard PyTorch i,f,g,o conventions) for correctness.
def ref_forward(x, params, hidden):
    H = hidden

    def layer(x, p):
        T, B, _ = x.shape
        h = jnp.zeros((B, H), jnp.float32)
        c = jnp.zeros((B, H), jnp.float32)
        w_ih_t, w_hh_t = p["w_ih"].T, p["w_hh"].T
        b = (p["b_ih"] + p["b_hh"])[None, :]
        outs = []
        for t in range(T):
            g = x[t] @ w_ih_t + h @ w_hh_t + b
            i = jax.nn.sigmoid(g[:, :H])
            f = jax.nn.sigmoid(g[:, H:2 * H])
            gg = jnp.tanh(g[:, 2 * H:3 * H])
            o = jax.nn.sigmoid(g[:, 3 * H:])
            c = f * c + i * gg
            h = o * jnp.tanh(c)
            outs.append(h)
        return jnp.stack(outs, axis=0)

    for p in params["lstm"]:
        x = layer(x, p)
    T, B, _ = x.shape
    out = x.reshape(T * B, H) @ params["mlp_w"].T + params["mlp_b"][None, :]
    return out.reshape(T, B, -1)


if __name__ == "__main__":
    LENGTH, BATCH, INPUT_SIZE, HIDDEN, NUM_LAYERS = 8, 4, 2, 128, 2

    key = jax.random.PRNGKey(0)
    key, kx = jax.random.split(key)
    obs_traj_rel = jax.random.normal(kx, (LENGTH, BATCH, INPUT_SIZE), jnp.float32)

    params = init_params(key, INPUT_SIZE, HIDDEN, NUM_LAYERS)
    kparams = prepare_kernel_params(params, HIDDEN, INPUT_SIZE)

    out = model_forward(obs_traj_rel, params, kparams, HIDDEN)
    out = jax.block_until_ready(out)

    ref = ref_forward(obs_traj_rel, params, HIDDEN)
    assert out.shape == (LENGTH, BATCH, INPUT_SIZE)
    assert jnp.allclose(out, ref, atol=1e-4, rtol=1e-4), float(jnp.max(jnp.abs(out - ref)))

    print("KERNEL_OK")
</pallas_src>

<mosaic_0001>
module attributes {stable_mosaic.version = 11 : i64} {
  func.func @_fused_lstm_mlp_kernel(%arg0: i32, %arg1: memref<64x2xf32, #tpu.memory_space<vmem>>, %arg2: memref<2x512xf32, #tpu.memory_space<vmem>>, %arg3: memref<128x512xf32, #tpu.memory_space<vmem>>, %arg4: memref<1x512xf32, #tpu.memory_space<vmem>>, %arg5: memref<256x512xf32, #tpu.memory_space<vmem>>, %arg6: memref<1x512xf32, #tpu.memory_space<vmem>>, %arg7: memref<128x128xf32, #tpu.memory_space<vmem>>, %arg8: memref<1x128xf32, #tpu.memory_space<vmem>>, %arg9: memref<64x128xf32, #tpu.memory_space<vmem>>, %arg10: memref<64x512xf32, #tpu.memory_space<vmem>>, %arg11: memref<64x128xf32, #tpu.memory_space<vmem>>) attributes {dimension_semantics = [#tpu.dimension_semantics<arbitrary>], iteration_bounds = array<i64: 1>, scalar_prefetch = 0 : i64, scratch_operands = 2 : i64, tpu.core_type = #tpu.core_type<tc>, window_params = [{pipeline_mode = #tpu.pipeline_mode<synchronous>, transform_indices = @transform_0, window_bounds = array<i64: 64, 2>}, {pipeline_mode = #tpu.pipeline_mode<synchronous>, transform_indices = @transform_1, window_bounds = array<i64: 2, 512>}, {pipeline_mode = #tpu.pipeline_mode<synchronous>, transform_indices = @transform_2, window_bounds = array<i64: 128, 512>}, {pipeline_mode = #tpu.pipeline_mode<synchronous>, transform_indices = @transform_3, window_bounds = array<i64: 1, 512>}, {pipeline_mode = #tpu.pipeline_mode<synchronous>, transform_indices = @transform_4, window_bounds = array<i64: 256, 512>}, {pipeline_mode = #tpu.pipeline_mode<synchronous>, transform_indices = @transform_5, window_bounds = array<i64: 1, 512>}, {pipeline_mode = #tpu.pipeline_mode<synchronous>, transform_indices = @transform_6, window_bounds = array<i64: 128, 128>}, {pipeline_mode = #tpu.pipeline_mode<synchronous>, transform_indices = @transform_7, window_bounds = array<i64: 1, 128>}, {pipeline_mode = #tpu.pipeline_mode<synchronous>, transform_indices = @transform_8, window_bounds = array<i64: 64, 128>}]} {
    %c0 = arith.constant 0 : index
    %c0_0 = arith.constant 0 : index
    %0 = vector.load %arg1[%c0, %c0_0] : memref<64x2xf32, #tpu.memory_space<vmem>>, vector<64x2xf32>
    %1 = vector.extract_strided_slice %0 {offsets = [0, 0], sizes = [64, 1], strides = [1, 1]} : vector<64x2xf32> to vector<64x1xf32>
    %c0_1 = arith.constant 0 : index
    %c0_2 = arith.constant 0 : index
    %2 = vector.load %arg2[%c0_1, %c0_2] : memref<2x512xf32, #tpu.memory_space<vmem>>, vector<1x512xf32>
    %3 = vector.broadcast %1 : vector<64x1xf32> to vector<64x512xf32>
    %4 = vector.broadcast %2 : vector<1x512xf32> to vector<64x512xf32>
    %5 = arith.mulf %3, %4 : vector<64x512xf32>
    %c0_3 = arith.constant 0 : index
    %c0_4 = arith.constant 0 : index
    %6 = vector.load %arg4[%c0_3, %c0_4] : memref<1x512xf32, #tpu.memory_space<vmem>>, vector<1x512xf32>
    %7 = vector.broadcast %6 : vector<1x512xf32> to vector<64x512xf32>
    %8 = arith.addf %5, %7 : vector<64x512xf32>
    %9 = vector.extract_strided_slice %0 {offsets = [0, 1], sizes = [64, 1], strides = [1, 1]} : vector<64x2xf32> to vector<64x1xf32>
    %c1 = arith.constant 1 : index
    %c0_5 = arith.constant 0 : index
    %10 = vector.load %arg2[%c1, %c0_5] : memref<2x512xf32, #tpu.memory_space<vmem>>, vector<1x512xf32>
    %11 = vector.broadcast %9 : vector<64x1xf32> to vector<64x512xf32>
    %12 = vector.broadcast %10 : vector<1x512xf32> to vector<64x512xf32>
    %13 = arith.mulf %11, %12 : vector<64x512xf32>
    %14 = arith.addf %8, %13 : vector<64x512xf32>
    %c0_6 = arith.constant 0 : index
    %c0_7 = arith.constant 0 : index
    %15 = vector.load %arg10[%c0_6, %c0_7] : memref<64x512xf32, #tpu.memory_space<vmem>>, vector<64x512xf32>
    tpu.vector_store %arg10[%c0_6, %c0_7], %14 {strides = array<i32>} : memref<64x512xf32, #tpu.memory_space<vmem>>, vector<64x512xf32>,
    %cst = arith.constant 0.000000e+00 : f32
    %16 = vector.broadcast %cst : f32 to vector<8x128xf32>
    %cst_8 = arith.constant 0.000000e+00 : f32
    %17 = vector.broadcast %cst_8 : f32 to vector<8x128xf32>
    %cst_9 = arith.constant 0.000000e+00 : f32
    %18 = vector.broadcast %cst_9 : f32 to vector<8x128xf32>
    %cst_10 = arith.constant 0.000000e+00 : f32
    %19 = vector.broadcast %cst_10 : f32 to vector<8x128xf32>
    %c0_11 = arith.constant 0 : index
    %c0_12 = arith.constant 0 : index
    %20 = vector.load %arg10[%c0_11, %c0_12] : memref<64x512xf32, #tpu.memory_space<vmem>>, vector<8x512xf32>
    %c0_13 = arith.constant 0 : index
    %c0_14 = arith.constant 0 : index
    %21 = vector.load %arg3[%c0_13, %c0_14] : memref<128x512xf32, #tpu.memory_space<vmem>>, vector<128x512xf32>
    %cst_15 = arith.constant dense<0.000000e+00> : vector<8x512xf32>
    %22 = tpu.matmul %16, %21, %cst_15 {dimension_numbers = #tpu.dot_dimension_numbers<[1], [0], [0], [1], [0, 0, 1, 1], [], []>} : vector<8x128xf32>, vector<128x512xf32>, vector<8x512xf32> -> vector<8x512xf32>
    %23 = arith.addf %20, %22 : vector<8x512xf32>
    %24 = vector.extract_strided_slice %23 {offsets = [0, 0], sizes = [8, 384], strides = [1, 1]} : vector<8x512xf32> to vector<8x384xf32>
    %25 = arith.negf %24 : vector<8x384xf32>
    %26 = math.exp %25 : vector<8x384xf32>
    %cst_16 = arith.constant 1.000000e+00 : f32
    %27 = vector.broadcast %cst_16 : f32 to vector<8x384xf32>
    %28 = arith.addf %27, %26 : vector<8x384xf32>
    %29 = arith.divf %27, %28 : vector<8x384xf32>
    %30 = vector.extract_strided_slice %29 {offsets = [0, 0], sizes = [8, 128], strides = [1, 1]} : vector<8x384xf32> to vector<8x128xf32>
    %31 = vector.extract_strided_slice %29 {offsets = [0, 128], sizes = [8, 128], strides = [1, 1]} : vector<8x384xf32> to vector<8x128xf32>
    %32 = vector.extract_strided_slice %29 {offsets = [0, 256], sizes = [8, 128], strides = [1, 1]} : vector<8x384xf32> to vector<8x128xf32>
    %33 = vector.extract_strided_slice %23 {offsets = [0, 384], sizes = [8, 128], strides = [1, 1]} : vector<8x512xf32> to vector<8x128xf32>
    %34 = math.tanh %33 : vector<8x128xf32>
    %35 = arith.mulf %31, %17 : vector<8x128xf32>
    %36 = arith.mulf %30, %34 : vector<8x128xf32>
    %37 = arith.addf %35, %36 : vector<8x128xf32>
    %38 = math.tanh %37 : vector<8x128xf32>
    %39 = arith.mulf %32, %38 : vector<8x128xf32>
    %40 = tpu.concatenate %39, %18 in 1 : vector<8x128xf32>, vector<8x128xf32> -> vector<8x256xf32>
    %c0_17 = arith.constant 0 : index
    %c0_18 = arith.constant 0 : index
    %41 = vector.load %arg5[%c0_17, %c0_18] : memref<256x512xf32, #tpu.memory_space<vmem>>, vector<256x512xf32>
    %cst_19 = arith.constant dense<0.000000e+00> : vector<8x512xf32>
    %42 = tpu.matmul %40, %41, %cst_19 {dimension_numbers = #tpu.dot_dimension_numbers<[1], [0], [0], [1], [0, 0, 1, 1], [], []>} : vector<8x256xf32>, vector<256x512xf32>, vector<8x512xf32> -> vector<8x512xf32>
    %c0_20 = arith.constant 0 : index
    %c0_21 = arith.constant 0 : index
    %43 = vector.load %arg6[%c0_20, %c0_21] : memref<1x512xf32, #tpu.memory_space<vmem>>, vector<1x512xf32>
    %44 = vector.broadcast %43 : vector<1x512xf32> to vector<8x512xf32>
    %45 = arith.addf %42, %44 : vector<8x512xf32>
    %46 = vector.extract_strided_slice %45 {offsets = [0, 0], sizes = [8, 384], strides = [1, 1]} : vector<8x512xf32> to vector<8x384xf32>
    %47 = arith.negf %46 : vector<8x384xf32>
    %48 = math.exp %47 : vector<8x384xf32>
    %cst_22 = arith.constant 1.000000e+00 : f32
    %49 = vector.broadcast %cst_22 : f32 to vector<8x384xf32>
    %50 = arith.addf %49, %48 : vector<8x384xf32>
    %51 = arith.divf %49, %50 : vector<8x384xf32>
    %52 = vector.extract_strided_slice %51 {offsets = [0, 0], sizes = [8, 128], strides = [1, 1]} : vector<8x384xf32> to vector<8x128xf32>
    %53 = vector.extract_strided_slice %51 {offsets = [0, 128], sizes = [8, 128], strides = [1, 1]} : vector<8x384xf32> to vector<8x128xf32>
    %54 = vector.extract_strided_slice %51 {offsets = [0, 256], sizes = [8, 128], strides = [1, 1]} : vector<8x384xf32> to vector<8x128xf32>
    %55 = vector.extract_strided_slice %45 {offsets = [0, 384], sizes = [8, 128], strides = [1, 1]} : vector<8x512xf32> to vector<8x128xf32>
    %56 = math.tanh %55 : vector<8x128xf32>
    %57 = arith.mulf %53, %19 : vector<8x128xf32>
    %58 = arith.mulf %52, %56 : vector<8x128xf32>
    %59 = arith.addf %57, %58 : vector<8x128xf32>
    %60 = math.tanh %59 : vector<8x128xf32>
    %61 = arith.mulf %54, %60 : vector<8x128xf32>
    %c0_23 = arith.constant 0 : index
    %c0_24 = arith.constant 0 : index
    %62 = vector.load %arg11[%c0_23, %c0_24] : memref<64x128xf32, #tpu.memory_space<vmem>>, vector<8x128xf32>
    tpu.vector_store %arg11[%c0_23, %c0_24], %61 {strides = array<i32>} : memref<64x128xf32, #tpu.memory_space<vmem>>, vector<8x128xf32>,
    %c8 = arith.constant 8 : index
    %c0_25 = arith.constant 0 : index
    %63 = vector.load %arg10[%c8, %c0_25] : memref<64x512xf32, #tpu.memory_space<vmem>>, vector<8x512xf32>
    %c0_26 = arith.constant 0 : index
    %c0_27 = arith.constant 0 : index
    %64 = vector.load %arg3[%c0_26, %c0_27] : memref<128x512xf32, #tpu.memory_space<vmem>>, vector<128x512xf32>
    %cst_28 = arith.constant dense<0.000000e+00> : vector<8x512xf32>
    %65 = tpu.matmul %39, %64, %cst_28 {dimension_numbers = #tpu.dot_dimension_numbers<[1], [0], [0], [1], [0, 0, 1, 1], [], []>} : vector<8x128xf32>, vector<128x512xf32>, vector<8x512xf32> -> vector<8x512xf32>
    %66 = arith.addf %63, %65 : vector<8x512xf32>
    %67 = vector.extract_strided_slice %66 {offsets = [0, 0], sizes = [8, 384], strides = [1, 1]} : vector<8x512xf32> to vector<8x384xf32>
    %68 = arith.negf %67 : vector<8x384xf32>
    %69 = math.exp %68 : vector<8x384xf32>
    %cst_29 = arith.constant 1.000000e+00 : f32
    %70 = vector.broadcast %cst_29 : f32 to vector<8x384xf32>
    %71 = arith.addf %70, %69 : vector<8x384xf32>
    %72 = arith.divf %70, %71 : vector<8x384xf32>
    %73 = vector.extract_strided_slice %72 {offsets = [0, 0], sizes = [8, 128], strides = [1, 1]} : vector<8x384xf32> to vector<8x128xf32>
    %74 = vector.extract_strided_slice %72 {offsets = [0, 128], sizes = [8, 128], strides = [1, 1]} : vector<8x384xf32> to vector<8x128xf32>
    %75 = vector.extract_strided_slice %72 {offsets = [0, 256], sizes = [8, 128], strides = [1, 1]} : vector<8x384xf32> to vector<8x128xf32>
    %76 = vector.extract_strided_slice %66 {offsets = [0, 384], sizes = [8, 128], strides = [1, 1]} : vector<8x512xf32> to vector<8x128xf32>
    %77 = math.tanh %76 : vector<8x128xf32>
    %78 = arith.mulf %74, %37 : vector<8x128xf32>
    %79 = arith.mulf %73, %77 : vector<8x128xf32>
    %80 = arith.addf %78, %79 : vector<8x128xf32>
    %81 = math.tanh %80 : vector<8x128xf32>
    %82 = arith.mulf %75, %81 : vector<8x128xf32>
    %83 = tpu.concatenate %82, %61 in 1 : vector<8x128xf32>, vector<8x128xf32> -> vector<8x256xf32>
    %c0_30 = arith.constant 0 : index
    %c0_31 = arith.constant 0 : index
    %84 = vector.load %arg5[%c0_30, %c0_31] : memref<256x512xf32, #tpu.memory_space<vmem>>, vector<256x512xf32>
    %cst_32 = arith.constant dense<0.000000e+00> : vector<8x512xf32>
    %85 = tpu.matmul %83, %84, %cst_32 {dimension_numbers = #tpu.dot_dimension_numbers<[1], [0], [0], [1], [0, 0, 1, 1], [], []>} : vector<8x256xf32>, vector<256x512xf32>, vector<8x512xf32> -> vector<8x512xf32>
    %c0_33 = arith.constant 0 : index
    %c0_34 = arith.constant 0 : index
    %86 = vector.load %arg6[%c0_33, %c0_34] : memref<1x512xf32, #tpu.memory_space<vmem>>, vector<1x512xf32>
    %87 = vector.broadcast %86 : vector<1x512xf32> to vector<8x512xf32>
    %88 = arith.addf %85, %87 : vector<8x512xf32>
    %89 = vector.extract_strided_slice %88 {offsets = [0, 0], sizes = [8, 384], strides = [1, 1]} : vector<8x512xf32> to vector<8x384xf32>
    %90 = arith.negf %89 : vector<8x384xf32>
    %91 = math.exp %90 : vector<8x384xf32>
    %cst_35 = arith.constant 1.000000e+00 : f32
    %92 = vector.broadcast %cst_35 : f32 to vector<8x384xf32>
    %93 = arith.addf %92, %91 : vector<8x384xf32>
    %94 = arith.divf %92, %93 : vector<8x384xf32>
    %95 = vector.extract_strided_slice %94 {offsets = [0, 0], sizes = [8, 128], strides = [1, 1]} : vector<8x384xf32> to vector<8x128xf32>
    %96 = vector.extract_strided_slice %94 {offsets = [0, 128], sizes = [8, 128], strides = [1, 1]} : vector<8x384xf32> to vector<8x128xf32>
    %97 = vector.extract_strided_slice %94 {offsets = [0, 256], sizes = [8, 128], strides = [1, 1]} : vector<8x384xf32> to vector<8x128xf32>
    %98 = vector.extract_strided_slice %88 {offsets = [0, 384], sizes = [8, 128], strides = [1, 1]} : vector<8x512xf32> to vector<8x128xf32>
    %99 = math.tanh %98 : vector<8x128xf32>
    %100 = arith.mulf %96, %59 : vector<8x128xf32>
    %101 = arith.mulf %95, %99 : vector<8x128xf32>
    %102 = arith.addf %100, %101 : vector<8x128xf32>
    %103 = math.tanh %102 : vector<8x128xf32>
    %104 = arith.mulf %97, %103 : vector<8x128xf32>
    %c8_36 = arith.constant 8 : index
    %c0_37 = arith.constant 0 : index
    %105 = vector.load %arg11[%c8_36, %c0_37] : memref<64x128xf32, #tpu.memory_space<vmem>>, vector<8x128xf32>
    tpu.vector_store %arg11[%c8_36, %c0_37], %104 {strides = array<i32>} : memref<64x128xf32, #tpu.memory_space<vmem>>, vector<8x128xf32>,
    %c16 = arith.constant 16 : index
    %c0_38 = arith.constant 0 : index
    %106 = vector.load %arg10[%c16, %c0_38] : memref<64x512xf32, #tpu.memory_space<vmem>>, vector<8x512xf32>
    %c0_39 = arith.constant 0 : index
    %c0_40 = arith.constant 0 : index
    %107 = vector.load %arg3[%c0_39, %c0_40] : memref<128x512xf32, #tpu.memory_space<vmem>>, vector<128x512xf32>
    %cst_41 = arith.constant dense<0.000000e+00> : vector<8x512xf32>
    %108 = tpu.matmul %82, %107, %cst_41 {dimension_numbers = #tpu.dot_dimension_numbers<[1], [0], [0], [1], [0, 0, 1, 1], [], []>} : vector<8x128xf32>, vector<128x512xf32>, vector<8x512xf32> -> vector<8x512xf32>
    %109 = arith.addf %106, %108 : vector<8x512xf32>
    %110 = vector.extract_strided_slice %109 {offsets = [0, 0], sizes = [8, 384], strides = [1, 1]} : vector<8x512xf32> to vector<8x384xf32>
    %111 = arith.negf %110 : vector<8x384xf32>
    %112 = math.exp %111 : vector<8x384xf32>
    %cst_42 = arith.constant 1.000000e+00 : f32
    %113 = vector.broadcast %cst_42 : f32 to vector<8x384xf32>
    %114 = arith.addf %113, %112 : vector<8x384xf32>
    %115 = arith.divf %113, %114 : vector<8x384xf32>
    %116 = vector.extract_strided_slice %115 {offsets = [0, 0], sizes = [8, 128], strides = [1, 1]} : vector<8x384xf32> to vector<8x128xf32>
    %117 = vector.extract_strided_slice %115 {offsets = [0, 128], sizes = [8, 128], strides = [1, 1]} : vector<8x384xf32> to vector<8x128xf32>
    %118 = vector.extract_strided_slice %115 {offsets = [0, 256], sizes = [8, 128], strides = [1, 1]} : vector<8x384xf32> to vector<8x128xf32>
    %119 = vector.extract_strided_slice %109 {offsets = [0, 384], sizes = [8, 128], strides = [1, 1]} : vector<8x512xf32> to vector<8x128xf32>
    %120 = math.tanh %119 : vector<8x128xf32>
    %121 = arith.mulf %117, %80 : vector<8x128xf32>
    %122 = arith.mulf %116, %120 : vector<8x128xf32>
    %123 = arith.addf %121, %122 : vector<8x128xf32>
    %124 = math.tanh %123 : vector<8x128xf32>
    %125 = arith.mulf %118, %124 : vector<8x128xf32>
    %126 = tpu.concatenate %125, %104 in 1 : vector<8x128xf32>, vector<8x128xf32> -> vector<8x256xf32>
    %c0_43 = arith.constant 0 : index
    %c0_44 = arith.constant 0 : index
    %127 = vector.load %arg5[%c0_43, %c0_44] : memref<256x512xf32, #tpu.memory_space<vmem>>, vector<256x512xf32>
    %cst_45 = arith.constant dense<0.000000e+00> : vector<8x512xf32>
    %128 = tpu.matmul %126, %127, %cst_45 {dimension_numbers = #tpu.dot_dimension_numbers<[1], [0], [0], [1], [0, 0, 1, 1], [], []>} : vector<8x256xf32>, vector<256x512xf32>, vector<8x512xf32> -> vector<8x512xf32>
    %c0_46 = arith.constant 0 : index
    %c0_47 = arith.constant 0 : index
    %129 = vector.load %arg6[%c0_46, %c0_47] : memref<1x512xf32, #tpu.memory_space<vmem>>, vector<1x512xf32>
    %130 = vector.broadcast %129 : vector<1x512xf32> to vector<8x512xf32>
    %131 = arith.addf %128, %130 : vector<8x512xf32>
    %132 = vector.extract_strided_slice %131 {offsets = [0, 0], sizes = [8, 384], strides = [1, 1]} : vector<8x512xf32> to vector<8x384xf32>
    %133 = arith.negf %132 : vector<8x384xf32>
    %134 = math.exp %133 : vector<8x384xf32>
    %cst_48 = arith.constant 1.000000e+00 : f32
    %135 = vector.broadcast %cst_48 : f32 to vector<8x384xf32>
    %136 = arith.addf %135, %134 : vector<8x384xf32>
    %137 = arith.divf %135, %136 : vector<8x384xf32>
    %138 = vector.extract_strided_slice %137 {offsets = [0, 0], sizes = [8, 128], strides = [1, 1]} : vector<8x384xf32> to vector<8x128xf32>
    %139 = vector.extract_strided_slice %137 {offsets = [0, 128], sizes = [8, 128], strides = [1, 1]} : vector<8x384xf32> to vector<8x128xf32>
    %140 = vector.extract_strided_slice %137 {offsets = [0, 256], sizes = [8, 128], strides = [1, 1]} : vector<8x384xf32> to vector<8x128xf32>
    %141 = vector.extract_strided_slice %131 {offsets = [0, 384], sizes = [8, 128], strides = [1, 1]} : vector<8x512xf32> to vector<8x128xf32>
    %142 = math.tanh %141 : vector<8x128xf32>
    %143 = arith.mulf %139, %102 : vector<8x128xf32>
    %144 = arith.mulf %138, %142 : vector<8x128xf32>
    %145 = arith.addf %143, %144 : vector<8x128xf32>
    %146 = math.tanh %145 : vector<8x128xf32>
    %147 = arith.mulf %140, %146 : vector<8x128xf32>
    %c16_49 = arith.constant 16 : index
    %c0_50 = arith.constant 0 : index
    %148 = vector.load %arg11[%c16_49, %c0_50] : memref<64x128xf32, #tpu.memory_space<vmem>>, vector<8x128xf32>
    tpu.vector_store %arg11[%c16_49, %c0_50], %147 {strides = array<i32>} : memref<64x128xf32, #tpu.memory_space<vmem>>, vector<8x128xf32>,
    %c24 = arith.constant 24 : index
    %c0_51 = arith.constant 0 : index
    %149 = vector.load %arg10[%c24, %c0_51] : memref<64x512xf32, #tpu.memory_space<vmem>>, vector<8x512xf32>
    %c0_52 = arith.constant 0 : index
    %c0_53 = arith.constant 0 : index
    %150 = vector.load %arg3[%c0_52, %c0_53] : memref<128x512xf32, #tpu.memory_space<vmem>>, vector<128x512xf32>
    %cst_54 = arith.constant dense<0.000000e+00> : vector<8x512xf32>
    %151 = tpu.matmul %125, %150, %cst_54 {dimension_numbers = #tpu.dot_dimension_numbers<[1], [0], [0], [1], [0, 0, 1, 1], [], []>} : vector<8x128xf32>, vector<128x512xf32>, vector<8x512xf32> -> vector<8x512xf32>
    %152 = arith.addf %149, %151 : vector<8x512xf32>
    %153 = vector.extract_strided_slice %152 {offsets = [0, 0], sizes = [8, 384], strides = [1, 1]} : vector<8x512xf32> to vector<8x384xf32>
    %154 = arith.negf %153 : vector<8x384xf32>
    %155 = math.exp %154 : vector<8x384xf32>
    %cst_55 = arith.constant 1.000000e+00 : f32
    %156 = vector.broadcast %cst_55 : f32 to vector<8x384xf32>
    %157 = arith.addf %156, %155 : vector<8x384xf32>
    %158 = arith.divf %156, %157 : vector<8x384xf32>
    %159 = vector.extract_strided_slice %158 {offsets = [0, 0], sizes = [8, 128], strides = [1, 1]} : vector<8x384xf32> to vector<8x128xf32>
    %160 = vector.extract_strided_slice %158 {offsets = [0, 128], sizes = [8, 128], strides = [1, 1]} : vector<8x384xf32> to vector<8x128xf32>
    %161 = vector.extract_strided_slice %158 {offsets = [0, 256], sizes = [8, 128], strides = [1, 1]} : vector<8x384xf32> to vector<8x128xf32>
    %162 = vector.extract_strided_slice %152 {offsets = [0, 384], sizes = [8, 128], strides = [1, 1]} : vector<8x512xf32> to vector<8x128xf32>
    %163 = math.tanh %162 : vector<8x128xf32>
    %164 = arith.mulf %160, %123 : vector<8x128xf32>
    %165 = arith.mulf %159, %163 : vector<8x128xf32>
    %166 = arith.addf %164, %165 : vector<8x128xf32>
    %167 = math.tanh %166 : vector<8x128xf32>
    %168 = arith.mulf %161, %167 : vector<8x128xf32>
    %169 = tpu.concatenate %168, %147 in 1 : vector<8x128xf32>, vector<8x128xf32> -> vector<8x256xf32>
    %c0_56 = arith.constant 0 : index
    %c0_57 = arith.constant 0 : index
    %170 = vector.load %arg5[%c0_56, %c0_57] : memref<256x512xf32, #tpu.memory_space<vmem>>, vector<256x512xf32>
    %cst_58 = arith.constant dense<0.000000e+00> : vector<8x512xf32>
    %171 = tpu.matmul %169, %170, %cst_58 {dimension_numbers = #tpu.dot_dimension_numbers<[1], [0], [0], [1], [0, 0, 1, 1], [], []>} : vector<8x256xf32>, vector<256x512xf32>, vector<8x512xf32> -> vector<8x512xf32>
    %c0_59 = arith.constant 0 : index
    %c0_60 = arith.constant 0 : index
    %172 = vector.load %arg6[%c0_59, %c0_60] : memref<1x512xf32, #tpu.memory_space<vmem>>, vector<1x512xf32>
    %173 = vector.broadcast %172 : vector<1x512xf32> to vector<8x512xf32>
    %174 = arith.addf %171, %173 : vector<8x512xf32>
    %175 = vector.extract_strided_slice %174 {offsets = [0, 0], sizes = [8, 384], strides = [1, 1]} : vector<8x512xf32> to vector<8x384xf32>
    %176 = arith.negf %175 : vector<8x384xf32>
    %177 = math.exp %176 : vector<8x384xf32>
    %cst_61 = arith.constant 1.000000e+00 : f32
    %178 = vector.broadcast %cst_61 : f32 to vector<8x384xf32>
    %179 = arith.addf %178, %177 : vector<8x384xf32>
    %180 = arith.divf %178, %179 : vector<8x384xf32>
    %181 = vector.extract_strided_slice %180 {offsets = [0, 0], sizes = [8, 128], strides = [1, 1]} : vector<8x384xf32> to vector<8x128xf32>
    %182 = vector.extract_strided_slice %180 {offsets = [0, 128], sizes = [8, 128], strides = [1, 1]} : vector<8x384xf32> to vector<8x128xf32>
    %183 = vector.extract_strided_slice %180 {offsets = [0, 256], sizes = [8, 128], strides = [1, 1]} : vector<8x384xf32> to vector<8x128xf32>
    %184 = vector.extract_strided_slice %174 {offsets = [0, 384], sizes = [8, 128], strides = [1, 1]} : vector<8x512xf32> to vector<8x128xf32>
    %185 = math.tanh %184 : vector<8x128xf32>
    %186 = arith.mulf %182, %145 : vector<8x128xf32>
    %187 = arith.mulf %181, %185 : vector<8x128xf32>
    %188 = arith.addf %186, %187 : vector<8x128xf32>
    %189 = math.tanh %188 : vector<8x128xf32>
    %190 = arith.mulf %183, %189 : vector<8x128xf32>
    %c24_62 = arith.constant 24 : index
    %c0_63 = arith.constant 0 : index
    %191 = vector.load %arg11[%c24_62, %c0_63] : memref<64x128xf32, #tpu.memory_space<vmem>>, vector<8x128xf32>
    tpu.vector_store %arg11[%c24_62, %c0_63], %190 {strides = array<i32>} : memref<64x128xf32, #tpu.memory_space<vmem>>, vector<8x128xf32>,
    %c32 = arith.constant 32 : index
    %c0_64 = arith.constant 0 : index
    %192 = vector.load %arg10[%c32, %c0_64] : memref<64x512xf32, #tpu.memory_space<vmem>>, vector<8x512xf32>
    %c0_65 = arith.constant 0 : index
    %c0_66 = arith.constant 0 : index
    %193 = vector.load %arg3[%c0_65, %c0_66] : memref<128x512xf32, #tpu.memory_space<vmem>>, vector<128x512xf32>
    %cst_67 = arith.constant dense<0.000000e+00> : vector<8x512xf32>
    %194 = tpu.matmul %168, %193, %cst_67 {dimension_numbers = #tpu.dot_dimension_numbers<[1], [0], [0], [1], [0, 0, 1, 1], [], []>} : vector<8x128xf32>, vector<128x512xf32>, vector<8x512xf32> -> vector<8x512xf32>
    %195 = arith.addf %192, %194 : vector<8x512xf32>
    %196 = vector.extract_strided_slice %195 {offsets = [0, 0], sizes = [8, 384], strides = [1, 1]} : vector<8x512xf32> to vector<8x384xf32>
    %197 = arith.negf %196 : vector<8x384xf32>
    %198 = math.exp %197 : vector<8x384xf32>
    %cst_68 = arith.constant 1.000000e+00 : f32
    %199 = vector.broadcast %cst_68 : f32 to vector<8x384xf32>
    %200 = arith.addf %199, %198 : vector<8x384xf32>
    %201 = arith.divf %199, %200 : vector<8x384xf32>
    %202 = vector.extract_strided_slice %201 {offsets = [0, 0], sizes = [8, 128], strides = [1, 1]} : vector<8x384xf32> to vector<8x128xf32>
    %203 = vector.extract_strided_slice %201 {offsets = [0, 128], sizes = [8, 128], strides = [1, 1]} : vector<8x384xf32> to vector<8x128xf32>
    %204 = vector.extract_strided_slice %201 {offsets = [0, 256], sizes = [8, 128], strides = [1, 1]} : vector<8x384xf32> to vector<8x128xf32>
    %205 = vector.extract_strided_slice %195 {offsets = [0, 384], sizes = [8, 128], strides = [1, 1]} : vector<8x512xf32> to vector<8x128xf32>
    %206 = math.tanh %205 : vector<8x128xf32>
    %207 = arith.mulf %203, %166 : vector<8x128xf32>
    %208 = arith.mulf %202, %206 : vector<8x128xf32>
    %209 = arith.addf %207, %208 : vector<8x128xf32>
    %210 = math.tanh %209 : vector<8x128xf32>
    %211 = arith.mulf %204, %210 : vector<8x128xf32>
    %212 = tpu.concatenate %211, %190 in 1 : vector<8x128xf32>, vector<8x128xf32> -> vector<8x256xf32>
    %c0_69 = arith.constant 0 : index
    %c0_70 = arith.constant 0 : index
    %213 = vector.load %arg5[%c0_69, %c0_70] : memref<256x512xf32, #tpu.memory_space<vmem>>, vector<256x512xf32>
    %cst_71 = arith.constant dense<0.000000e+00> : vector<8x512xf32>
    %214 = tpu.matmul %212, %213, %cst_71 {dimension_numbers = #tpu.dot_dimension_numbers<[1], [0], [0], [1], [0, 0, 1, 1], [], []>} : vector<8x256xf32>, vector<256x512xf32>, vector<8x512xf32> -> vector<8x512xf32>
    %c0_72 = arith.constant 0 : index
    %c0_73 = arith.constant 0 : index
    %215 = vector.load %arg6[%c0_72, %c0_73] : memref<1x512xf32, #tpu.memory_space<vmem>>, vector<1x512xf32>
    %216 = vector.broadcast %215 : vector<1x512xf32> to vector<8x512xf32>
    %217 = arith.addf %214, %216 : vector<8x512xf32>
    %218 = vector.extract_strided_slice %217 {offsets = [0, 0], sizes = [8, 384], strides = [1, 1]} : vector<8x512xf32> to vector<8x384xf32>
    %219 = arith.negf %218 : vector<8x384xf32>
    %220 = math.exp %219 : vector<8x384xf32>
    %cst_74 = arith.constant 1.000000e+00 : f32
    %221 = vector.broadcast %cst_74 : f32 to vector<8x384xf32>
    %222 = arith.addf %221, %220 : vector<8x384xf32>
    %223 = arith.divf %221, %222 : vector<8x384xf32>
    %224 = vector.extract_strided_slice %223 {offsets = [0, 0], sizes = [8, 128], strides = [1, 1]} : vector<8x384xf32> to vector<8x128xf32>
    %225 = vector.extract_strided_slice %223 {offsets = [0, 128], sizes = [8, 128], strides = [1, 1]} : vector<8x384xf32> to vector<8x128xf32>
    %226 = vector.extract_strided_slice %223 {offsets = [0, 256], sizes = [8, 128], strides = [1, 1]} : vector<8x384xf32> to vector<8x128xf32>
    %227 = vector.extract_strided_slice %217 {offsets = [0, 384], sizes = [8, 128], strides = [1, 1]} : vector<8x512xf32> to vector<8x128xf32>
    %228 = math.tanh %227 : vector<8x128xf32>
    %229 = arith.mulf %225, %188 : vector<8x128xf32>
    %230 = arith.mulf %224, %228 : vector<8x128xf32>
    %231 = arith.addf %229, %230 : vector<8x128xf32>
    %232 = math.tanh %231 : vector<8x128xf32>
    %233 = arith.mulf %226, %232 : vector<8x128xf32>
    %c32_75 = arith.constant 32 : index
    %c0_76 = arith.constant 0 : index
    %234 = vector.load %arg11[%c32_75, %c0_76] : memref<64x128xf32, #tpu.memory_space<vmem>>, vector<8x128xf32>
    tpu.vector_store %arg11[%c32_75, %c0_76], %233 {strides = array<i32>} : memref<64x128xf32, #tpu.memory_space<vmem>>, vector<8x128xf32>,
    %c40 = arith.constant 40 : index
    %c0_77 = arith.constant 0 : index
    %235 = vector.load %arg10[%c40, %c0_77] : memref<64x512xf32, #tpu.memory_space<vmem>>, vector<8x512xf32>
    %c0_78 = arith.constant 0 : index
    %c0_79 = arith.constant 0 : index
    %236 = vector.load %arg3[%c0_78, %c0_79] : memref<128x512xf32, #tpu.memory_space<vmem>>, vector<128x512xf32>
    %cst_80 = arith.constant dense<0.000000e+00> : vector<8x512xf32>
    %237 = tpu.matmul %211, %236, %cst_80 {dimension_numbers = #tpu.dot_dimension_numbers<[1], [0], [0], [1], [0, 0, 1, 1], [], []>} : vector<8x128xf32>, vector<128x512xf32>, vector<8x512xf32> -> vector<8x512xf32>
    %238 = arith.addf %235, %237 : vector<8x512xf32>
    %239 = vector.extract_strided_slice %238 {offsets = [0, 0], sizes = [8, 384], strides = [1, 1]} : vector<8x512xf32> to vector<8x384xf32>
    %240 = arith.negf %239 : vector<8x384xf32>
    %241 = math.exp %240 : vector<8x384xf32>
    %cst_81 = arith.constant 1.000000e+00 : f32
    %242 = vector.broadcast %cst_81 : f32 to vector<8x384xf32>
    %243 = arith.addf %242, %241 : vector<8x384xf32>
    %244 = arith.divf %242, %243 : vector<8x384xf32>
    %245 = vector.extract_strided_slice %244 {offsets = [0, 0], sizes = [8, 128], strides = [1, 1]} : vector<8x384xf32> to vector<8x128xf32>
    %246 = vector.extract_strided_slice %244 {offsets = [0, 128], sizes = [8, 128], strides = [1, 1]} : vector<8x384xf32> to vector<8x128xf32>
    %247 = vector.extract_strided_slice %244 {offsets = [0, 256], sizes = [8, 128], strides = [1, 1]} : vector<8x384xf32> to vector<8x128xf32>
    %248 = vector.extract_strided_slice %238 {offsets = [0, 384], sizes = [8, 128], strides = [1, 1]} : vector<8x512xf32> to vector<8x128xf32>
    %249 = math.tanh %248 : vector<8x128xf32>
    %250 = arith.mulf %246, %209 : vector<8x128xf32>
    %251 = arith.mulf %245, %249 : vector<8x128xf32>
    %252 = arith.addf %250, %251 : vector<8x128xf32>
    %253 = math.tanh %252 : vector<8x128xf32>
    %254 = arith.mulf %247, %253 : vector<8x128xf32>
    %255 = tpu.concatenate %254, %233 in 1 : vector<8x128xf32>, vector<8x128xf32> -> vector<8x256xf32>
    %c0_82 = arith.constant 0 : index
    %c0_83 = arith.constant 0 : index
    %256 = vector.load %arg5[%c0_82, %c0_83] : memref<256x512xf32, #tpu.memory_space<vmem>>, vector<256x512xf32>
    %cst_84 = arith.constant dense<0.000000e+00> : vector<8x512xf32>
    %257 = tpu.matmul %255, %256, %cst_84 {dimension_numbers = #tpu.dot_dimension_numbers<[1], [0], [0], [1], [0, 0, 1, 1], [], []>} : vector<8x256xf32>, vector<256x512xf32>, vector<8x512xf32> -> vector<8x512xf32>
    %c0_85 = arith.constant 0 : index
    %c0_86 = arith.constant 0 : index
    %258 = vector.load %arg6[%c0_85, %c0_86] : memref<1x512xf32, #tpu.memory_space<vmem>>, vector<1x512xf32>
    %259 = vector.broadcast %258 : vector<1x512xf32> to vector<8x512xf32>
    %260 = arith.addf %257, %259 : vector<8x512xf32>
    %261 = vector.extract_strided_slice %260 {offsets = [0, 0], sizes = [8, 384], strides = [1, 1]} : vector<8x512xf32> to vector<8x384xf32>
    %262 = arith.negf %261 : vector<8x384xf32>
    %263 = math.exp %262 : vector<8x384xf32>
    %cst_87 = arith.constant 1.000000e+00 : f32
    %264 = vector.broadcast %cst_87 : f32 to vector<8x384xf32>
    %265 = arith.addf %264, %263 : vector<8x384xf32>
    %266 = arith.divf %264, %265 : vector<8x384xf32>
    %267 = vector.extract_strided_slice %266 {offsets = [0, 0], sizes = [8, 128], strides = [1, 1]} : vector<8x384xf32> to vector<8x128xf32>
    %268 = vector.extract_strided_slice %266 {offsets = [0, 128], sizes = [8, 128], strides = [1, 1]} : vector<8x384xf32> to vector<8x128xf32>
    %269 = vector.extract_strided_slice %266 {offsets = [0, 256], sizes = [8, 128], strides = [1, 1]} : vector<8x384xf32> to vector<8x128xf32>
    %270 = vector.extract_strided_slice %260 {offsets = [0, 384], sizes = [8, 128], strides = [1, 1]} : vector<8x512xf32> to vector<8x128xf32>
    %271 = math.tanh %270 : vector<8x128xf32>
    %272 = arith.mulf %268, %231 : vector<8x128xf32>
    %273 = arith.mulf %267, %271 : vector<8x128xf32>
    %274 = arith.addf %272, %273 : vector<8x128xf32>
    %275 = math.tanh %274 : vector<8x128xf32>
    %276 = arith.mulf %269, %275 : vector<8x128xf32>
    %c40_88 = arith.constant 40 : index
    %c0_89 = arith.constant 0 : index
    %277 = vector.load %arg11[%c40_88, %c0_89] : memref<64x128xf32, #tpu.memory_space<vmem>>, vector<8x128xf32>
    tpu.vector_store %arg11[%c40_88, %c0_89], %276 {strides = array<i32>} : memref<64x128xf32, #tpu.memory_space<vmem>>, vector<8x128xf32>,
    %c48 = arith.constant 48 : index
    %c0_90 = arith.constant 0 : index
    %278 = vector.load %arg10[%c48, %c0_90] : memref<64x512xf32, #tpu.memory_space<vmem>>, vector<8x512xf32>
    %c0_91 = arith.constant 0 : index
    %c0_92 = arith.constant 0 : index
    %279 = vector.load %arg3[%c0_91, %c0_92] : memref<128x512xf32, #tpu.memory_space<vmem>>, vector<128x512xf32>
    %cst_93 = arith.constant dense<0.000000e+00> : vector<8x512xf32>
    %280 = tpu.matmul %254, %279, %cst_93 {dimension_numbers = #tpu.dot_dimension_numbers<[1], [0], [0], [1], [0, 0, 1, 1], [], []>} : vector<8x128xf32>, vector<128x512xf32>, vector<8x512xf32> -> vector<8x512xf32>
    %281 = arith.addf %278, %280 : vector<8x512xf32>
    %282 = vector.extract_strided_slice %281 {offsets = [0, 0], sizes = [8, 384], strides = [1, 1]} : vector<8x512xf32> to vector<8x384xf32>
    %283 = arith.negf %282 : vector<8x384xf32>
    %284 = math.exp %283 : vector<8x384xf32>
    %cst_94 = arith.constant 1.000000e+00 : f32
    %285 = vector.broadcast %cst_94 : f32 to vector<8x384xf32>
    %286 = arith.addf %285, %284 : vector<8x384xf32>
    %287 = arith.divf %285, %286 : vector<8x384xf32>
    %288 = vector.extract_strided_slice %287 {offsets = [0, 0], sizes = [8, 128], strides = [1, 1]} : vector<8x384xf32> to vector<8x128xf32>
    %289 = vector.extract_strided_slice %287 {offsets = [0, 128], sizes = [8, 128], strides = [1, 1]} : vector<8x384xf32> to vector<8x128xf32>
    %290 = vector.extract_strided_slice %287 {offsets = [0, 256], sizes = [8, 128], strides = [1, 1]} : vector<8x384xf32> to vector<8x128xf32>
    %291 = vector.extract_strided_slice %281 {offsets = [0, 384], sizes = [8, 128], strides = [1, 1]} : vector<8x512xf32> to vector<8x128xf32>
    %292 = math.tanh %291 : vector<8x128xf32>
    %293 = arith.mulf %289, %252 : vector<8x128xf32>
    %294 = arith.mulf %288, %292 : vector<8x128xf32>
    %295 = arith.addf %293, %294 : vector<8x128xf32>
    %296 = math.tanh %295 : vector<8x128xf32>
    %297 = arith.mulf %290, %296 : vector<8x128xf32>
    %298 = tpu.concatenate %297, %276 in 1 : vector<8x128xf32>, vector<8x128xf32> -> vector<8x256xf32>
    %c0_95 = arith.constant 0 : index
    %c0_96 = arith.constant 0 : index
    %299 = vector.load %arg5[%c0_95, %c0_96] : memref<256x512xf32, #tpu.memory_space<vmem>>, vector<256x512xf32>
    %cst_97 = arith.constant dense<0.000000e+00> : vector<8x512xf32>
    %300 = tpu.matmul %298, %299, %cst_97 {dimension_numbers = #tpu.dot_dimension_numbers<[1], [0], [0], [1], [0, 0, 1, 1], [], []>} : vector<8x256xf32>, vector<256x512xf32>, vector<8x512xf32> -> vector<8x512xf32>
    %c0_98 = arith.constant 0 : index
    %c0_99 = arith.constant 0 : index
    %301 = vector.load %arg6[%c0_98, %c0_99] : memref<1x512xf32, #tpu.memory_space<vmem>>, vector<1x512xf32>
    %302 = vector.broadcast %301 : vector<1x512xf32> to vector<8x512xf32>
    %303 = arith.addf %300, %302 : vector<8x512xf32>
    %304 = vector.extract_strided_slice %303 {offsets = [0, 0], sizes = [8, 384], strides = [1, 1]} : vector<8x512xf32> to vector<8x384xf32>
    %305 = arith.negf %304 : vector<8x384xf32>
    %306 = math.exp %305 : vector<8x384xf32>
    %cst_100 = arith.constant 1.000000e+00 : f32
    %307 = vector.broadcast %cst_100 : f32 to vector<8x384xf32>
    %308 = arith.addf %307, %306 : vector<8x384xf32>
    %309 = arith.divf %307, %308 : vector<8x384xf32>
    %310 = vector.extract_strided_slice %309 {offsets = [0, 0], sizes = [8, 128], strides = [1, 1]} : vector<8x384xf32> to vector<8x128xf32>
    %311 = vector.extract_strided_slice %309 {offsets = [0, 128], sizes = [8, 128], strides = [1, 1]} : vector<8x384xf32> to vector<8x128xf32>
    %312 = vector.extract_strided_slice %309 {offsets = [0, 256], sizes = [8, 128], strides = [1, 1]} : vector<8x384xf32> to vector<8x128xf32>
    %313 = vector.extract_strided_slice %303 {offsets = [0, 384], sizes = [8, 128], strides = [1, 1]} : vector<8x512xf32> to vector<8x128xf32>
    %314 = math.tanh %313 : vector<8x128xf32>
    %315 = arith.mulf %311, %274 : vector<8x128xf32>
    %316 = arith.mulf %310, %314 : vector<8x128xf32>
    %317 = arith.addf %315, %316 : vector<8x128xf32>
    %318 = math.tanh %317 : vector<8x128xf32>
    %319 = arith.mulf %312, %318 : vector<8x128xf32>
    %c48_101 = arith.constant 48 : index
    %c0_102 = arith.constant 0 : index
    %320 = vector.load %arg11[%c48_101, %c0_102] : memref<64x128xf32, #tpu.memory_space<vmem>>, vector<8x128xf32>
    tpu.vector_store %arg11[%c48_101, %c0_102], %319 {strides = array<i32>} : memref<64x128xf32, #tpu.memory_space<vmem>>, vector<8x128xf32>,
    %c56 = arith.constant 56 : index
    %c0_103 = arith.constant 0 : index
    %321 = vector.load %arg10[%c56, %c0_103] : memref<64x512xf32, #tpu.memory_space<vmem>>, vector<8x512xf32>
    %c0_104 = arith.constant 0 : index
    %c0_105 = arith.constant 0 : index
    %322 = vector.load %arg3[%c0_104, %c0_105] : memref<128x512xf32, #tpu.memory_space<vmem>>, vector<128x512xf32>
    %cst_106 = arith.constant dense<0.000000e+00> : vector<8x512xf32>
    %323 = tpu.matmul %297, %322, %cst_106 {dimension_numbers = #tpu.dot_dimension_numbers<[1], [0], [0], [1], [0, 0, 1, 1], [], []>} : vector<8x128xf32>, vector<128x512xf32>, vector<8x512xf32> -> vector<8x512xf32>
    %324 = arith.addf %321, %323 : vector<8x512xf32>
    %325 = vector.extract_strided_slice %324 {offsets = [0, 0], sizes = [8, 384], strides = [1, 1]} : vector<8x512xf32> to vector<8x384xf32>
    %326 = arith.negf %325 : vector<8x384xf32>
    %327 = math.exp %326 : vector<8x384xf32>
    %cst_107 = arith.constant 1.000000e+00 : f32
    %328 = vector.broadcast %cst_107 : f32 to vector<8x384xf32>
    %329 = arith.addf %328, %327 : vector<8x384xf32>
    %330 = arith.divf %328, %329 : vector<8x384xf32>
    %331 = vector.extract_strided_slice %330 {offsets = [0, 0], sizes = [8, 128], strides = [1, 1]} : vector<8x384xf32> to vector<8x128xf32>
    %332 = vector.extract_strided_slice %330 {offsets = [0, 128], sizes = [8, 128], strides = [1, 1]} : vector<8x384xf32> to vector<8x128xf32>
    %333 = vector.extract_strided_slice %330 {offsets = [0, 256], sizes = [8, 128], strides = [1, 1]} : vector<8x384xf32> to vector<8x128xf32>
    %334 = vector.extract_strided_slice %324 {offsets = [0, 384], sizes = [8, 128], strides = [1, 1]} : vector<8x512xf32> to vector<8x128xf32>
    %335 = math.tanh %334 : vector<8x128xf32>
    %336 = arith.mulf %332, %295 : vector<8x128xf32>
    %337 = arith.mulf %331, %335 : vector<8x128xf32>
    %338 = arith.addf %336, %337 : vector<8x128xf32>
    %339 = math.tanh %338 : vector<8x128xf32>
    %340 = arith.mulf %333, %339 : vector<8x128xf32>
    %341 = tpu.concatenate %340, %319 in 1 : vector<8x128xf32>, vector<8x128xf32> -> vector<8x256xf32>
    %c0_108 = arith.constant 0 : index
    %c0_109 = arith.constant 0 : index
    %342 = vector.load %arg5[%c0_108, %c0_109] : memref<256x512xf32, #tpu.memory_space<vmem>>, vector<256x512xf32>
    %cst_110 = arith.constant dense<0.000000e+00> : vector<8x512xf32>
    %343 = tpu.matmul %341, %342, %cst_110 {dimension_numbers = #tpu.dot_dimension_numbers<[1], [0], [0], [1], [0, 0, 1, 1], [], []>} : vector<8x256xf32>, vector<256x512xf32>, vector<8x512xf32> -> vector<8x512xf32>
    %c0_111 = arith.constant 0 : index
    %c0_112 = arith.constant 0 : index
    %344 = vector.load %arg6[%c0_111, %c0_112] : memref<1x512xf32, #tpu.memory_space<vmem>>, vector<1x512xf32>
    %345 = vector.broadcast %344 : vector<1x512xf32> to vector<8x512xf32>
    %346 = arith.addf %343, %345 : vector<8x512xf32>
    %347 = vector.extract_strided_slice %346 {offsets = [0, 0], sizes = [8, 384], strides = [1, 1]} : vector<8x512xf32> to vector<8x384xf32>
    %348 = arith.negf %347 : vector<8x384xf32>
    %349 = math.exp %348 : vector<8x384xf32>
    %cst_113 = arith.constant 1.000000e+00 : f32
    %350 = vector.broadcast %cst_113 : f32 to vector<8x384xf32>
    %351 = arith.addf %350, %349 : vector<8x384xf32>
    %352 = arith.divf %350, %351 : vector<8x384xf32>
    %353 = vector.extract_strided_slice %352 {offsets = [0, 0], sizes = [8, 128], strides = [1, 1]} : vector<8x384xf32> to vector<8x128xf32>
    %354 = vector.extract_strided_slice %352 {offsets = [0, 128], sizes = [8, 128], strides = [1, 1]} : vector<8x384xf32> to vector<8x128xf32>
    %355 = vector.extract_strided_slice %352 {offsets = [0, 256], sizes = [8, 128], strides = [1, 1]} : vector<8x384xf32> to vector<8x128xf32>
    %356 = vector.extract_strided_slice %346 {offsets = [0, 384], sizes = [8, 128], strides = [1, 1]} : vector<8x512xf32> to vector<8x128xf32>
    %357 = math.tanh %356 : vector<8x128xf32>
    %358 = arith.mulf %354, %317 : vector<8x128xf32>
    %359 = arith.mulf %353, %357 : vector<8x128xf32>
    %360 = arith.addf %358, %359 : vector<8x128xf32>
    %361 = math.tanh %360 : vector<8x128xf32>
    %362 = arith.mulf %355, %361 : vector<8x128xf32>
    %c56_114 = arith.constant 56 : index
    %c0_115 = arith.constant 0 : index
    %363 = vector.load %arg11[%c56_114, %c0_115] : memref<64x128xf32, #tpu.memory_space<vmem>>, vector<8x128xf32>
    tpu.vector_store %arg11[%c56_114, %c0_115], %362 {strides = array<i32>} : memref<64x128xf32, #tpu.memory_space<vmem>>, vector<8x128xf32>,
    %c0_116 = arith.constant 0 : index
    %c0_117 = arith.constant 0 : index
    %364 = vector.load %arg11[%c0_116, %c0_117] : memref<64x128xf32, #tpu.memory_space<vmem>>, vector<64x128xf32>
    %c0_118 = arith.constant 0 : index
    %c0_119 = arith.constant 0 : index
    %365 = vector.load %arg7[%c0_118, %c0_119] : memref<128x128xf32, #tpu.memory_space<vmem>>, vector<128x128xf32>
    %cst_120 = arith.constant dense<0.000000e+00> : vector<64x128xf32>
    %366 = tpu.matmul %364, %365, %cst_120 {dimension_numbers = #tpu.dot_dimension_numbers<[1], [0], [0], [1], [0, 0, 1, 1], [], []>} : vector<64x128xf32>, vector<128x128xf32>, vector<64x128xf32> -> vector<64x128xf32>
    %c0_121 = arith.constant 0 : index
    %c0_122 = arith.constant 0 : index
    %367 = vector.load %arg8[%c0_121, %c0_122] : memref<1x128xf32, #tpu.memory_space<vmem>>, vector<1x128xf32>
    %368 = vector.broadcast %367 : vector<1x128xf32> to vector<64x128xf32>
    %369 = arith.addf %366, %368 : vector<64x128xf32>
    %c0_123 = arith.constant 0 : index
    %c0_124 = arith.constant 0 : index
    %370 = vector.load %arg9[%c0_123, %c0_124] : memref<64x128xf32, #tpu.memory_space<vmem>>, vector<64x128xf32>
    tpu.vector_store %arg9[%c0_123, %c0_124], %369 {strides = array<i32>} : memref<64x128xf32, #tpu.memory_space<vmem>>, vector<64x128xf32>,
    return
  }
  func.func @transform_0(%arg0: i32) -> (i32, i32) {
    %c0_i32 = arith.constant 0 : i32
    %c0_i32_0 = arith.constant 0 : i32
    %c0_i32_1 = arith.constant 0 : i32
    return %c0_i32, %c0_i32_0 : i32, i32
  }
  func.func @transform_1(%arg0: i32) -> (i32, i32) {
    %c0_i32 = arith.constant 0 : i32
    %c0_i32_0 = arith.constant 0 : i32
    %c0_i32_1 = arith.constant 0 : i32
    return %c0_i32, %c0_i32_0 : i32, i32
  }
  func.func @transform_2(%arg0: i32) -> (i32, i32) {
    %c0_i32 = arith.constant 0 : i32
    %c0_i32_0 = arith.constant 0 : i32
    %c0_i32_1 = arith.constant 0 : i32
    return %c0_i32, %c0_i32_0 : i32, i32
  }
  func.func @transform_3(%arg0: i32) -> (i32, i32) {
    %c0_i32 = arith.constant 0 : i32
    %c0_i32_0 = arith.constant 0 : i32
    %c0_i32_1 = arith.constant 0 : i32
    return %c0_i32, %c0_i32_0 : i32, i32
  }
  func.func @transform_4(%arg0: i32) -> (i32, i32) {
    %c0_i32 = arith.constant 0 : i32
    %c0_i32_0 = arith.constant 0 : i32
    %c0_i32_1 = arith.constant 0 : i32
    return %c0_i32, %c0_i32_0 : i32, i32
  }
  func.func @transform_5(%arg0: i32) -> (i32, i32) {
    %c0_i32 = arith.constant 0 : i32
    %c0_i32_0 = arith.constant 0 : i32
    %c0_i32_1 = arith.constant 0 : i32
    return %c0_i32, %c0_i32_0 : i32, i32
  }
  func.func @transform_6(%arg0: i32) -> (i32, i32) {
    %c0_i32 = arith.constant 0 : i32
    %c0_i32_0 = arith.constant 0 : i32
    %c0_i32_1 = arith.constant 0 : i32
    return %c0_i32, %c0_i32_0 : i32, i32
  }
  func.func @transform_7(%arg0: i32) -> (i32, i32) {
    %c0_i32 = arith.constant 0 : i32
    %c0_i32_0 = arith.constant 0 : i32
    %c0_i32_1 = arith.constant 0 : i32
    return %c0_i32, %c0_i32_0 : i32, i32
  }
  func.func @transform_8(%arg0: i32) -> (i32, i32) {
    %c0_i32 = arith.constant 0 : i32
    %c0_i32_0 = arith.constant 0 : i32
    %c0_i32_1 = arith.constant 0 : i32
    return %c0_i32, %c0_i32_0 : i32, i32
  }
}

</mosaic_0001>

<llo_original>
// kernel: tpu_custom_call.1
$region0: #{tpu_custom_call.1}
  #allocation0 [shape = 'u32[]', space=smem, size = 0x4, offset = 0x4, fixed_abs, tag = 'smem constant byte address 0x4 - core index']
  #allocation1 [shape = 'u32[144,128]{1,0:T(1,128)}', space=vmem, size = 0x12000, scoped, tag = 'internal scratch']
  #allocation2 [shape = 'f32[64,512]{1,0:T(8,128)}', space=vmem, size = 0x20000, scoped, tag = 'scratch operand']
  #allocation3 [shape = 'f32[64,128]{1,0:T(8,128)}', space=vmem, size = 0x8000, scoped, tag = 'scratch operand']
  %s0 = inlined_call_operand.vmem [shape: f32[64,2], index: 0, kind: input, shape index: {}]
  %s1 = inlined_call_operand.vmem [shape: f32[2,512], index: 1, kind: input, shape index: {}]
  %s2 = inlined_call_operand.hbm [shape: f32[128,512], index: 2, kind: input, shape index: {}]
  %s3 = inlined_call_operand.vmem [shape: f32[1,512], index: 3, kind: input, shape index: {}]
  %s4 = inlined_call_operand.hbm [shape: f32[256,512], index: 4, kind: input, shape index: {}]
  %s5 = inlined_call_operand.vmem [shape: f32[1,512], index: 5, kind: input, shape index: {}]
  %s6 = inlined_call_operand.hbm [shape: f32[128,128], index: 6, kind: input, shape index: {}]
  %s7 = inlined_call_operand.vmem [shape: f32[1,128], index: 7, kind: input, shape index: {}]
  %s8 = inlined_call_operand.hbm [shape: f32[64,128], index: 8, kind: output, shape index: {}]
  %s9 = sld [smem:[#allocation0]]
  $region54: #{tpu_custom_call.1} parent=0
    _
  %s11 = ssub.s32 1, %s9
  %s12 = scalar_select 0, %s11, %s9
  $region1: #{tpu_custom_call.1} parent=0
    #allocation4 [shape = 'u8[262144]{0}', space=vmem, size = 0x40000, scoped, tag = 'input window, operand 2, single buffered']
    #allocation5 [shape = 's32[1]{0}', space=sflag, size = 0x4, scoped, tag = 'scoped memory for tpu_custom_call.1']
    #allocation6 [shape = 's32[1]{0}', space=sflag, size = 0x4, scoped, tag = 'scoped memory for tpu_custom_call.1']
    #allocation7 [shape = 'u8[524288]{0}', space=vmem, size = 0x80000, scoped, tag = 'input window, operand 4, single buffered']
    #allocation8 [shape = 's32[1]{0}', space=sflag, size = 0x4, scoped, tag = 'scoped memory for tpu_custom_call.1']
    #allocation9 [shape = 'u8[65536]{0}', space=vmem, size = 0x10000, scoped, tag = 'input window, operand 6, single buffered']
    #allocation10 [shape = 'u8[32768]{0}', space=vmem, size = 0x8000, scoped, tag = 'output window, operand 0, single buffered']
    %13 = vsyncpa [#allocation5], 0
    %14 = vsyncpa [#allocation8], 0
    %15 = vsyncpa [#allocation6], 0
    // Predicated region
    $region2: #{tpu_custom_call.1} parent=1 // pred_check
      _
    $region3: #{tpu_custom_call.1} parent=1 // pred_check_branch
      %17 = sbr.rel (0) target = $region5
    $region4: #{tpu_custom_call.1} parent=1 // pred_region
      _
    $region5: #{tpu_custom_call.1} parent=1 // pred_fallthru
      _
    // Predicated region
    $region6: #{tpu_custom_call.1} parent=1 // pred_check
      _
    $region7: #{tpu_custom_call.1} parent=1 // pred_check_branch
      %19 = sbr.rel (0) target = $region9
    $region8: #{tpu_custom_call.1} parent=1 // pred_region
      _
    $region9: #{tpu_custom_call.1} parent=1 // pred_fallthru
      _
    // Predicated region
    $region10: #{tpu_custom_call.1} parent=1 // pred_check
      _
    $region11: #{tpu_custom_call.1} parent=1 // pred_check_branch
      %21 = sbr.rel (0) target = $region13
    $region12: #{tpu_custom_call.1} parent=1 // pred_region
      %s23 = ssub.s32 8192, 8192
      %24 = vsyncadd [#allocation5], %s23
      %s25 = sshll.u32 [#allocation4], 4
      %s26 = int_to_ptr.vmem [resolvable:$true] %s25
      %31 = dma.hbm_to_vmem [thread:$0]  %s2, 8192, %s26, [#allocation5], 512, 512, 32
    $region13: #{tpu_custom_call.1} parent=1 // pred_fallthru
      _
    // Predicated region
    $region14: #{tpu_custom_call.1} parent=1 // pred_check
      _
    $region15: #{tpu_custom_call.1} parent=1 // pred_check_branch
      %33 = sbr.rel (0) target = $region17
    $region16: #{tpu_custom_call.1} parent=1 // pred_region
      _
    $region17: #{tpu_custom_call.1} parent=1 // pred_fallthru
      _
    // Predicated region
    $region18: #{tpu_custom_call.1} parent=1 // pred_check
      _
    $region19: #{tpu_custom_call.1} parent=1 // pred_check_branch
      %35 = sbr.rel (0) target = $region21
    $region20: #{tpu_custom_call.1} parent=1 // pred_region
      %s37 = ssub.s32 16384, 16384
      %38 = vsyncadd [#allocation8], %s37
      %s39 = sshll.u32 [#allocation7], 4
      %s40 = int_to_ptr.vmem [resolvable:$true] %s39
      %45 = dma.hbm_to_vmem [thread:$0]  %s4, 16384, %s40, [#allocation8], 512, 512, 32
    $region21: #{tpu_custom_call.1} parent=1 // pred_fallthru
      _
    // Predicated region
    $region22: #{tpu_custom_call.1} parent=1 // pred_check
      _
    $region23: #{tpu_custom_call.1} parent=1 // pred_check_branch
      %47 = sbr.rel (0) target = $region25
    $region24: #{tpu_custom_call.1} parent=1 // pred_region
      _
    $region25: #{tpu_custom_call.1} parent=1 // pred_fallthru
      _
    // Predicated region
    $region26: #{tpu_custom_call.1} parent=1 // pred_check
      _
    $region27: #{tpu_custom_call.1} parent=1 // pred_check_branch
      %49 = sbr.rel (0) target = $region29
    $region28: #{tpu_custom_call.1} parent=1 // pred_region
      %s51 = ssub.s32 2048, 2048
      %52 = vsyncadd [#allocation8], %s51
      %s53 = sshll.u32 [#allocation9], 4
      %s54 = int_to_ptr.vmem [resolvable:$true] %s53
      %59 = dma.hbm_to_vmem [thread:$0]  %s6, 2048, %s54, [#allocation8], 128, 128, 8
    $region29: #{tpu_custom_call.1} parent=1 // pred_fallthru
      _
    // Predicated region
    $region30: #{tpu_custom_call.1} parent=1 // pred_check
      _
    $region31: #{tpu_custom_call.1} parent=1 // pred_check_branch
      %61 = sbr.rel (0) target = $region33
    $region32: #{tpu_custom_call.1} parent=1 // pred_region
      _
    $region33: #{tpu_custom_call.1} parent=1 // pred_fallthru
      _
    // Predicated region
    $region34: #{tpu_custom_call.1} parent=1 // pred_check
      _
    $region35: #{tpu_custom_call.1} parent=1 // pred_check_branch
      %63 = sbr.rel (0) target = $region37
    $region36: #{tpu_custom_call.1} parent=1 // pred_region
      %64 = dma.done [#allocation5], 8192
    $region37: #{tpu_custom_call.1} parent=1 // pred_fallthru
      _
    // Predicated region
    $region38: #{tpu_custom_call.1} parent=1 // pred_check
      _
    $region39: #{tpu_custom_call.1} parent=1 // pred_check_branch
      %66 = sbr.rel (0) target = $region41
    $region40: #{tpu_custom_call.1} parent=1 // pred_region
      %67 = dma.done [#allocation8], 16384
    $region41: #{tpu_custom_call.1} parent=1 // pred_fallthru
      _
    // Predicated region
    $region42: #{tpu_custom_call.1} parent=1 // pred_check
      _
    $region43: #{tpu_custom_call.1} parent=1 // pred_check_branch
      %69 = sbr.rel (0) target = $region45
    $region44: #{tpu_custom_call.1} parent=1 // pred_region
      %70 = dma.done [#allocation8], 2048
    $region45: #{tpu_custom_call.1} parent=1 // pred_fallthru
      _
    %v71 = vld [vmem:[%s0] sm:$0xff]
    %v72 = vld [vmem:[%s0 + $0x8] sm:$0xff]
    %v73 = vld [vmem:[%s0 + $0x10] sm:$0xff]
    %v74 = vld [vmem:[%s0 + $0x18] sm:$0xff]
    %v75 = vld [vmem:[%s0 + $0x20] sm:$0xff]
    %v76 = vld [vmem:[%s0 + $0x28] sm:$0xff]
    %v77 = vld [vmem:[%s0 + $0x30] sm:$0xff]
    %v78 = vld [vmem:[%s0 + $0x38] sm:$0xff]
    %v79 = vld [vmem:[%s1] ss:$2 sm:$0xf]
    %81 = vset.pattern.permute.xlu0 0
    %82 = vperm.xlu0 %81, %v71
    %v83 = vpop.permute.xlu0 %82
    %86 = vset.pattern.permute.xlu0 0
    %87 = vperm.xlu0 %86, %v72
    %v88 = vpop.permute.xlu0 %87
    %91 = vset.pattern.permute.xlu0 0
    %92 = vperm.xlu0 %91, %v73
    %v93 = vpop.permute.xlu0 %92
    %96 = vset.pattern.permute.xlu0 0
    %97 = vperm.xlu0 %96, %v74
    %v98 = vpop.permute.xlu0 %97
    %101 = vset.pattern.permute.xlu0 0
    %102 = vperm.xlu0 %101, %v75
    %v103 = vpop.permute.xlu0 %102
    %106 = vset.pattern.permute.xlu0 0
    %107 = vperm.xlu0 %106, %v76
    %v108 = vpop.permute.xlu0 %107
    %111 = vset.pattern.permute.xlu0 0
    %112 = vperm.xlu0 %111, %v77
    %v113 = vpop.permute.xlu0 %112
    %116 = vset.pattern.permute.xlu0 0
    %117 = vperm.xlu0 %116, %v78
    %v118 = vpop.permute.xlu0 %117
    %v121 = vlaneseq
    %v122 = vshrl.u32 %v121, 7
    %v123 = vsub.s32 0, %v122
    %v124 = vrot.slane %v79, %v123
    %v125 = vlaneseq
    %v126 = vshrl.u32 %v125, 7
    %v127 = vsub.s32 1, %v126
    %v128 = vrot.slane %v79, %v127
    %v129 = vlaneseq
    %v130 = vshrl.u32 %v129, 7
    %v131 = vsub.s32 2, %v130
    %v132 = vrot.slane %v79, %v131
    %v133 = vlaneseq
    %v134 = vshrl.u32 %v133, 7
    %v135 = vsub.s32 3, %v134
    %v136 = vrot.slane %v79, %v135
    %v141 = vmul.f32 %v83, %v124
    %v142 = vmul.f32 %v83, %v128
    %v143 = vmul.f32 %v83, %v132
    %v144 = vmul.f32 %v83, %v136
    %v145 = vmul.f32 %v88, %v124
    %v146 = vmul.f32 %v88, %v128
    %v147 = vmul.f32 %v88, %v132
    %v148 = vmul.f32 %v88, %v136
    %v149 = vmul.f32 %v93, %v124
    %v150 = vmul.f32 %v93, %v128
    %v151 = vmul.f32 %v93, %v132
    %v152 = vmul.f32 %v93, %v136
    %v153 = vmul.f32 %v98, %v124
    %v154 = vmul.f32 %v98, %v128
    %v155 = vmul.f32 %v98, %v132
    %v156 = vmul.f32 %v98, %v136
    %v157 = vmul.f32 %v103, %v124
    %v158 = vmul.f32 %v103, %v128
    %v159 = vmul.f32 %v103, %v132
    %v160 = vmul.f32 %v103, %v136
    %v161 = vmul.f32 %v108, %v124
    %v162 = vmul.f32 %v108, %v128
    %v163 = vmul.f32 %v108, %v132
    %v164 = vmul.f32 %v108, %v136
    %v165 = vmul.f32 %v113, %v124
    %v166 = vmul.f32 %v113, %v128
    %v167 = vmul.f32 %v113, %v132
    %v168 = vmul.f32 %v113, %v136
    %v169 = vmul.f32 %v118, %v124
    %v170 = vmul.f32 %v118, %v128
    %v171 = vmul.f32 %v118, %v132
    %v172 = vmul.f32 %v118, %v136
    %v173 = vld [vmem:[%s3] sm:$0xf]
    %v175 = vlaneseq
    %v176 = vshrl.u32 %v175, 7
    %v177 = vsub.s32 0, %v176
    %v178 = vrot.slane %v173, %v177
    %v179 = vlaneseq
    %v180 = vshrl.u32 %v179, 7
    %v181 = vsub.s32 1, %v180
    %v182 = vrot.slane %v173, %v181
    %v183 = vlaneseq
    %v184 = vshrl.u32 %v183, 7
    %v185 = vsub.s32 2, %v184
    %v186 = vrot.slane %v173, %v185
    %v187 = vlaneseq
    %v188 = vshrl.u32 %v187, 7
    %v189 = vsub.s32 3, %v188
    %v190 = vrot.slane %v173, %v189
    %v195 = vadd.f32 %v141, %v178
    %v196 = vadd.f32 %v142, %v182
    %v197 = vadd.f32 %v143, %v186
    %v198 = vadd.f32 %v144, %v190
    %v199 = vadd.f32 %v145, %v178
    %v200 = vadd.f32 %v146, %v182
    %v201 = vadd.f32 %v147, %v186
    %v202 = vadd.f32 %v148, %v190
    %v203 = vadd.f32 %v149, %v178
    %v204 = vadd.f32 %v150, %v182
    %v205 = vadd.f32 %v151, %v186
    %v206 = vadd.f32 %v152, %v190
    %v207 = vadd.f32 %v153, %v178
    %v208 = vadd.f32 %v154, %v182
    %v209 = vadd.f32 %v155, %v186
    %v210 = vadd.f32 %v156, %v190
    %v211 = vadd.f32 %v157, %v178
    %v212 = vadd.f32 %v158, %v182
    %v213 = vadd.f32 %v159, %v186
    %v214 = vadd.f32 %v160, %v190
    %v215 = vadd.f32 %v161, %v178
    %v216 = vadd.f32 %v162, %v182
    %v217 = vadd.f32 %v163, %v186
    %v218 = vadd.f32 %v164, %v190
    %v219 = vadd.f32 %v165, %v178
    %v220 = vadd.f32 %v166, %v182
    %v221 = vadd.f32 %v167, %v186
    %v222 = vadd.f32 %v168, %v190
    %v223 = vadd.f32 %v169, %v178
    %v224 = vadd.f32 %v170, %v182
    %v225 = vadd.f32 %v171, %v186
    %v226 = vadd.f32 %v172, %v190
    %s227 = scalar_lea.vmem %s1, 1
    %v228 = vld [vmem:[%s227] ss:$2 sm:$0xf]
    %229 = vset.pattern.permute.xlu0 1
    %230 = vperm.xlu0 %229, %v71
    %v231 = vpop.permute.xlu0 %230
    %233 = vset.pattern.permute.xlu0 1
    %234 = vperm.xlu0 %233, %v72
    %v235 = vpop.permute.xlu0 %234
    %237 = vset.pattern.permute.xlu0 1
    %238 = vperm.xlu0 %237, %v73
    %v239 = vpop.permute.xlu0 %238
    %241 = vset.pattern.permute.xlu0 1
    %242 = vperm.xlu0 %241, %v74
    %v243 = vpop.permute.xlu0 %242
    %245 = vset.pattern.permute.xlu0 1
    %246 = vperm.xlu0 %245, %v75
    %v247 = vpop.permute.xlu0 %246
    %249 = vset.pattern.permute.xlu0 1
    %250 = vperm.xlu0 %249, %v76
    %v251 = vpop.permute.xlu0 %250
    %253 = vset.pattern.permute.xlu0 1
    %254 = vperm.xlu0 %253, %v77
    %v255 = vpop.permute.xlu0 %254
    %257 = vset.pattern.permute.xlu0 1
    %258 = vperm.xlu0 %257, %v78
    %v259 = vpop.permute.xlu0 %258
    %v262 = vlaneseq
    %v263 = vshrl.u32 %v262, 7
    %v264 = vsub.s32 0, %v263
    %v265 = vrot.slane %v228, %v264
    %v266 = vlaneseq
    %v267 = vshrl.u32 %v266, 7
    %v268 = vsub.s32 1, %v267
    %v269 = vrot.slane %v228, %v268
    %v270 = vlaneseq
    %v271 = vshrl.u32 %v270, 7
    %v272 = vsub.s32 2, %v271
    %v273 = vrot.slane %v228, %v272
    %v274 = vlaneseq
    %v275 = vshrl.u32 %v274, 7
    %v276 = vsub.s32 3, %v275
    %v277 = vrot.slane %v228, %v276
    %v282 = vmul.f32 %v231, %v265
    %v283 = vmul.f32 %v231, %v269
    %v284 = vmul.f32 %v231, %v273
    %v285 = vmul.f32 %v231, %v277
    %v286 = vmul.f32 %v235, %v265
    %v287 = vmul.f32 %v235, %v269
    %v288 = vmul.f32 %v235, %v273
    %v289 = vmul.f32 %v235, %v277
    %v290 = vmul.f32 %v239, %v265
    %v291 = vmul.f32 %v239, %v269
    %v292 = vmul.f32 %v239, %v273
    %v293 = vmul.f32 %v239, %v277
    %v294 = vmul.f32 %v243, %v265
    %v295 = vmul.f32 %v243, %v269
    %v296 = vmul.f32 %v243, %v273
    %v297 = vmul.f32 %v243, %v277
    %v298 = vmul.f32 %v247, %v265
    %v299 = vmul.f32 %v247, %v269
    %v300 = vmul.f32 %v247, %v273
    %v301 = vmul.f32 %v247, %v277
    %v302 = vmul.f32 %v251, %v265
    %v303 = vmul.f32 %v251, %v269
    %v304 = vmul.f32 %v251, %v273
    %v305 = vmul.f32 %v251, %v277
    %v306 = vmul.f32 %v255, %v265
    %v307 = vmul.f32 %v255, %v269
    %v308 = vmul.f32 %v255, %v273
    %v309 = vmul.f32 %v255, %v277
    %v310 = vmul.f32 %v259, %v265
    %v311 = vmul.f32 %v259, %v269
    %v312 = vmul.f32 %v259, %v273
    %v313 = vmul.f32 %v259, %v277
    %v314 = vadd.f32 %v195, %v282
    %v315 = vadd.f32 %v196, %v283
    %v316 = vadd.f32 %v197, %v284
    %v317 = vadd.f32 %v198, %v285
    %v318 = vadd.f32 %v199, %v286
    %v319 = vadd.f32 %v200, %v287
    %v320 = vadd.f32 %v201, %v288
    %v321 = vadd.f32 %v202, %v289
    %v322 = vadd.f32 %v203, %v290
    %v323 = vadd.f32 %v204, %v291
    %v324 = vadd.f32 %v205, %v292
    %v325 = vadd.f32 %v206, %v293
    %v326 = vadd.f32 %v207, %v294
    %v327 = vadd.f32 %v208, %v295
    %v328 = vadd.f32 %v209, %v296
    %v329 = vadd.f32 %v210, %v297
    %v330 = vadd.f32 %v211, %v298
    %v331 = vadd.f32 %v212, %v299
    %v332 = vadd.f32 %v213, %v300
    %v333 = vadd.f32 %v214, %v301
    %v334 = vadd.f32 %v215, %v302
    %v335 = vadd.f32 %v216, %v303
    %v336 = vadd.f32 %v217, %v304
    %v337 = vadd.f32 %v218, %v305
    %v338 = vadd.f32 %v219, %v306
    %v339 = vadd.f32 %v220, %v307
    %v340 = vadd.f32 %v221, %v308
    %v341 = vadd.f32 %v222, %v309
    %v342 = vadd.f32 %v223, %v310
    %v343 = vadd.f32 %v224, %v311
    %v344 = vadd.f32 %v225, %v312
    %v345 = vadd.f32 %v226, %v313
    %346 = vst [vmem:[#allocation2] sm:$0xff] %v314
    %347 = vst [vmem:[#allocation2 + $0x8] sm:$0xff] %v315
    %348 = vst [vmem:[#allocation2 + $0x10] sm:$0xff] %v316
    %349 = vst [vmem:[#allocation2 + $0x18] sm:$0xff] %v317
    %350 = vst [vmem:[#allocation2 + $0x20] sm:$0xff] %v318
    %351 = vst [vmem:[#allocation2 + $0x28] sm:$0xff] %v319
    %352 = vst [vmem:[#allocation2 + $0x30] sm:$0xff] %v320
    %353 = vst [vmem:[#allocation2 + $0x38] sm:$0xff] %v321
    %354 = vst [vmem:[#allocation2 + $0x40] sm:$0xff] %v322
    %355 = vst [vmem:[#allocation2 + $0x48] sm:$0xff] %v323
    %356 = vst [vmem:[#allocation2 + $0x50] sm:$0xff] %v324
    %357 = vst [vmem:[#allocation2 + $0x58] sm:$0xff] %v325
    %358 = vst [vmem:[#allocation2 + $0x60] sm:$0xff] %v326
    %359 = vst [vmem:[#allocation2 + $0x68] sm:$0xff] %v327
    %360 = vst [vmem:[#allocation2 + $0x70] sm:$0xff] %v328
    %361 = vst [vmem:[#allocation2 + $0x78] sm:$0xff] %v329
    %362 = vst [vmem:[#allocation2 + $0x80] sm:$0xff] %v330
    %363 = vst [vmem:[#allocation2 + $0x88] sm:$0xff] %v331
    %364 = vst [vmem:[#allocation2 + $0x90] sm:$0xff] %v332
    %365 = vst [vmem:[#allocation2 + $0x98] sm:$0xff] %v333
    %366 = vst [vmem:[#allocation2 + $0xa0] sm:$0xff] %v334
    %367 = vst [vmem:[#allocation2 + $0xa8] sm:$0xff] %v335
    %368 = vst [vmem:[#allocation2 + $0xb0] sm:$0xff] %v336
    %369 = vst [vmem:[#allocation2 + $0xb8] sm:$0xff] %v337
    %370 = vst [vmem:[#allocation2 + $0xc0] sm:$0xff] %v338
    %371 = vst [vmem:[#allocation2 + $0xc8] sm:$0xff] %v339
    %372 = vst [vmem:[#allocation2 + $0xd0] sm:$0xff] %v340
    %373 = vst [vmem:[#allocation2 + $0xd8] sm:$0xff] %v341
    %374 = vst [vmem:[#allocation2 + $0xe0] sm:$0xff] %v342
    %375 = vst [vmem:[#allocation2 + $0xe8] sm:$0xff] %v343
    %376 = vst [vmem:[#allocation2 + $0xf0] sm:$0xff] %v344
    %377 = vst [vmem:[#allocation2 + $0xf8] sm:$0xff] %v345
    %v378 = vld [vmem:[#allocation2] sm:$0xff]
    %v379 = vld [vmem:[#allocation2 + $0x8] sm:$0xff]
    %v380 = vld [vmem:[#allocation2 + $0x10] sm:$0xff]
    %v381 = vld [vmem:[#allocation2 + $0x18] sm:$0xff]
    %v382 = vld [vmem:[#allocation4] sm:$0xff]
    %v383 = vld [vmem:[#allocation4 + $0x8] sm:$0xff]
    %v384 = vld [vmem:[#allocation4 + $0x10] sm:$0xff]
    %v385 = vld [vmem:[#allocation4 + $0x18] sm:$0xff]
    %v386 = vld [vmem:[#allocation4 + $0x20] sm:$0xff]
    %v387 = vld [vmem:[#allocation4 + $0x28] sm:$0xff]
    %v388 = vld [vmem:[#allocation4 + $0x30] sm:$0xff]
    %v389 = vld [vmem:[#allocation4 + $0x38] sm:$0xff]
    %v390 = vld [vmem:[#allocation4 + $0x40] sm:$0xff]
    %v391 = vld [vmem:[#allocation4 + $0x48] sm:$0xff]
    %v392 = vld [vmem:[#allocation4 + $0x50] sm:$0xff]
    %v393 = vld [vmem:[#allocation4 + $0x58] sm:$0xff]
    %v394 = vld [vmem:[#allocation4 + $0x60] sm:$0xff]
    %v395 = vld [vmem:[#allocation4 + $0x68] sm:$0xff]
    %v396 = vld [vmem:[#allocation4 + $0x70] sm:$0xff]
    %v397 = vld [vmem:[#allocation4 + $0x78] sm:$0xff]
    %v398 = vld [vmem:[#allocation4 + $0x80] sm:$0xff]
    %v399 = vld [vmem:[#allocation4 + $0x88] sm:$0xff]
    %v400 = vld [vmem:[#allocation4 + $0x90] sm:$0xff]
    %v401 = vld [vmem:[#allocation4 + $0x98] sm:$0xff]
    %v402 = vld [vmem:[#allocation4 + $0xa0] sm:$0xff]
    %v403 = vld [vmem:[#allocation4 + $0xa8] sm:$0xff]
    %v404 = vld [vmem:[#allocation4 + $0xb0] sm:$0xff]
    %v405 = vld [vmem:[#allocation4 + $0xb8] sm:$0xff]
    %v406 = vld [vmem:[#allocation4 + $0xc0] sm:$0xff]
    %v407 = vld [vmem:[#allocation4 + $0xc8] sm:$0xff]
    %v408 = vld [vmem:[#allocation4 + $0xd0] sm:$0xff]
    %v409 = vld [vmem:[#allocation4 + $0xd8] sm:$0xff]
    %v410 = vld [vmem:[#allocation4 + $0xe0] sm:$0xff]
    %v411 = vld [vmem:[#allocation4 + $0xe8] sm:$0xff]
    %v412 = vld [vmem:[#allocation4 + $0xf0] sm:$0xff]
    %v413 = vld [vmem:[#allocation4 + $0xf8] sm:$0xff]
    %v414 = vld [vmem:[#allocation4 + $0x100] sm:$0xff]
    %v415 = vld [vmem:[#allocation4 + $0x108] sm:$0xff]
    %v416 = vld [vmem:[#allocation4 + $0x110] sm:$0xff]
    %v417 = vld [vmem:[#allocation4 + $0x118] sm:$0xff]
    %v418 = vld [vmem:[#allocation4 + $0x120] sm:$0xff]
    %v419 = vld [vmem:[#allocation4 + $0x128] sm:$0xff]
    %v420 = vld [vmem:[#allocation4 + $0x130] sm:$0xff]
    %v421 = vld [vmem:[#allocation4 + $0x138] sm:$0xff]
    %v422 = vld [vmem:[#allocation4 + $0x140] sm:$0xff]
    %v423 = vld [vmem:[#allocation4 + $0x148] sm:$0xff]
    %v424 = vld [vmem:[#allocation4 + $0x150] sm:$0xff]
    %v425 = vld [vmem:[#allocation4 + $0x158] sm:$0xff]
    %v426 = vld [vmem:[#allocation4 + $0x160] sm:$0xff]
    %v427 = vld [vmem:[#allocation4 + $0x168] sm:$0xff]
    %v428 = vld [vmem:[#allocation4 + $0x170] sm:$0xff]
    %v429 = vld [vmem:[#allocation4 + $0x178] sm:$0xff]
    %v430 = vld [vmem:[#allocation4 + $0x180] sm:$0xff]
    %v431 = vld [vmem:[#allocation4 + $0x188] sm:$0xff]
    %v432 = vld [vmem:[#allocation4 + $0x190] sm:$0xff]
    %v433 = vld [vmem:[#allocation4 + $0x198] sm:$0xff]
    %v434 = vld [vmem:[#allocation4 + $0x1a0] sm:$0xff]
    %v435 = vld [vmem:[#allocation4 + $0x1a8] sm:$0xff]
    %v436 = vld [vmem:[#allocation4 + $0x1b0] sm:$0xff]
    %v437 = vld [vmem:[#allocation4 + $0x1b8] sm:$0xff]
    %v438 = vld [vmem:[#allocation4 + $0x1c0] sm:$0xff]
    %v439 = vld [vmem:[#allocation4 + $0x1c8] sm:$0xff]
    %v440 = vld [vmem:[#allocation4 + $0x1d0] sm:$0xff]
    %v441 = vld [vmem:[#allocation4 + $0x1d8] sm:$0xff]
    %v442 = vld [vmem:[#allocation4 + $0x1e0] sm:$0xff]
    %v443 = vld [vmem:[#allocation4 + $0x1e8] sm:$0xff]
    %v444 = vld [vmem:[#allocation4 + $0x1f0] sm:$0xff]
    %v445 = vld [vmem:[#allocation4 + $0x1f8] sm:$0xff]
    %446 = vmatprep.subr.mxu0 %v443
    %447 = vmatpush1.msra.mxu0 %v442
    %448 = vmatprep.subr.mxu0 %v439
    %449 = vmatpush1.msra.mxu0 %v438
    %450 = vmatprep.subr.mxu0 %v435
    %451 = vmatpush1.msra.mxu0 %v434
    %452 = vmatprep.subr.mxu0 %v431
    %453 = vmatpush1.msra.mxu0 %v430
    %454 = vmatprep.subr.mxu0 %v427
    %455 = vmatpush1.msra.mxu0 %v426
    %456 = vmatprep.subr.mxu0 %v423
    %457 = vmatpush1.msra.mxu0 %v422
    %458 = vmatprep.subr.mxu0 %v419
    %459 = vmatpush1.msra.mxu0 %v418
    %460 = vmatprep.subr.mxu0 %v415
    %461 = vmatpush1.msra.mxu0 %v414
    %462 = vmatprep.subr.mxu0 %v411
    %463 = vmatpush1.msra.mxu0 %v410
    %464 = vmatprep.subr.mxu0 %v407
    %465 = vmatpush1.msra.mxu0 %v406
    %466 = vmatprep.subr.mxu0 %v403
    %467 = vmatpush1.msra.mxu0 %v402
    %468 = vmatprep.subr.mxu0 %v399
    %469 = vmatpush1.msra.mxu0 %v398
    %470 = vmatprep.subr.mxu0 %v395
    %471 = vmatpush1.msra.mxu0 %v394
    %472 = vmatprep.subr.mxu0 %v391
    %473 = vmatpush1.msra.mxu0 %v390
    %474 = vmatprep.subr.mxu0 %v387
    %475 = vmatpush1.msra.mxu0 %v386
    %476 = vmatprep.subr.mxu0 %v383
    %477 = vmatpush1.msra.mxu0 %v382
    %478 = vmatprep.subr.mxu0 0.0
    %479 = vmatpush2.msra.mxu0 0.0
    %480 = vmatprep.subr.mxu0 0.0
    %481 = vmatpush2.msra.mxu0 0.0
    %482 = vmatprep.subr.mxu0 0.0
    %483 = vmatpush2.msra.mxu0 0.0
    %484 = vmatprep.subr.mxu0 0.0
    %485 = vmatpush2.msra.mxu0 0.0
    %486 = vmatprep.subr.mxu0 0.0
    %487 = vmatpush2.msra.mxu0 0.0
    %488 = vmatprep.subr.mxu0 0.0
    %489 = vmatpush2.msra.mxu0 0.0
    %490 = vmatprep.subr.mxu0 0.0
    %491 = vmatpush2.msra.mxu0 0.0
    %492 = vmatprep.subr.mxu0 0.0
    %493 = vmatpush2.msra.mxu0 0.0
    %494 = vmatprep.subr.mxu0 0.0
    %495 = vmatpush2.msra.mxu0 0.0
    %496 = vmatprep.subr.mxu0 0.0
    %497 = vmatpush2.msra.mxu0 0.0
    %498 = vmatprep.subr.mxu0 0.0
    %499 = vmatpush2.msra.mxu0 0.0
    %500 = vmatprep.subr.mxu0 0.0
    %501 = vmatpush2.msra.mxu0 0.0
    %502 = vmatprep.subr.mxu0 0.0
    %503 = vmatpush2.msra.mxu0 0.0
    %504 = vmatprep.subr.mxu0 0.0
    %505 = vmatpush2.msra.mxu0 0.0
    %506 = vmatprep.subr.mxu0 0.0
    %507 = vmatpush2.msra.mxu0 0.0
    %508 = vmatprep.subr.mxu0 0.0
    %509 = vmatpush2.msra.mxu0 0.0
    %510 = vmatprep.mubr.f32.mxu0 0.0
    %511 = vmatmul.mubr.f32.gmra.mxu0 0.0
    %v512 = vpop.f32.mrf.mxu0
    %v513 = vadd.f32 0.0, %v512
    %v514 = vpop.f32.mrf.mxu0
    %v515 = vadd.f32 0.0, %v514
    %516 = vdwg.mxu0
    %517 = vmatprep.subr.mxu0 %v445
    %518 = vmatpush1.msra.mxu0 %v444
    %519 = vmatprep.subr.mxu0 %v441
    %520 = vmatpush1.msra.mxu0 %v440
    %521 = vmatprep.subr.mxu0 %v437
    %522 = vmatpush1.msra.mxu0 %v436
    %523 = vmatprep.subr.mxu0 %v433
    %524 = vmatpush1.msra.mxu0 %v432
    %525 = vmatprep.subr.mxu0 %v429
    %526 = vmatpush1.msra.mxu0 %v428
    %527 = vmatprep.subr.mxu0 %v425
    %528 = vmatpush1.msra.mxu0 %v424
    %529 = vmatprep.subr.mxu0 %v421
    %530 = vmatpush1.msra.mxu0 %v420
    %531 = vmatprep.subr.mxu0 %v417
    %532 = vmatpush1.msra.mxu0 %v416
    %533 = vmatprep.subr.mxu0 %v413
    %534 = vmatpush1.msra.mxu0 %v412
    %535 = vmatprep.subr.mxu0 %v409
    %536 = vmatpush1.msra.mxu0 %v408
    %537 = vmatprep.subr.mxu0 %v405
    %538 = vmatpush1.msra.mxu0 %v404
    %539 = vmatprep.subr.mxu0 %v401
    %540 = vmatpush1.msra.mxu0 %v400
    %541 = vmatprep.subr.mxu0 %v397
    %542 = vmatpush1.msra.mxu0 %v396
    %543 = vmatprep.subr.mxu0 %v393
    %544 = vmatpush1.msra.mxu0 %v392
    %545 = vmatprep.subr.mxu0 %v389
    %546 = vmatpush1.msra.mxu0 %v388
    %547 = vmatprep.subr.mxu0 %v385
    %548 = vmatpush1.msra.mxu0 %v384
    %549 = vmatprep.subr.mxu0 0.0
    %550 = vmatpush2.msra.mxu0 0.0
    %551 = vmatprep.subr.mxu0 0.0
    %552 = vmatpush2.msra.mxu0 0.0
    %553 = vmatprep.subr.mxu0 0.0
    %554 = vmatpush2.msra.mxu0 0.0
    %555 = vmatprep.subr.mxu0 0.0
    %556 = vmatpush2.msra.mxu0 0.0
    %557 = vmatprep.subr.mxu0 0.0
    %558 = vmatpush2.msra.mxu0 0.0
    %559 = vmatprep.subr.mxu0 0.0
    %560 = vmatpush2.msra.mxu0 0.0
    %561 = vmatprep.subr.mxu0 0.0
    %562 = vmatpush2.msra.mxu0 0.0
    %563 = vmatprep.subr.mxu0 0.0
    %564 = vmatpush2.msra.mxu0 0.0
    %565 = vmatprep.subr.mxu0 0.0
    %566 = vmatpush2.msra.mxu0 0.0
    %567 = vmatprep.subr.mxu0 0.0
    %568 = vmatpush2.msra.mxu0 0.0
    %569 = vmatprep.subr.mxu0 0.0
    %570 = vmatpush2.msra.mxu0 0.0
    %571 = vmatprep.subr.mxu0 0.0
    %572 = vmatpush2.msra.mxu0 0.0
    %573 = vmatprep.subr.mxu0 0.0
    %574 = vmatpush2.msra.mxu0 0.0
    %575 = vmatprep.subr.mxu0 0.0
    %576 = vmatpush2.msra.mxu0 0.0
    %577 = vmatprep.subr.mxu0 0.0
    %578 = vmatpush2.msra.mxu0 0.0
    %579 = vmatprep.subr.mxu0 0.0
    %580 = vmatpush2.msra.mxu0 0.0
    %581 = vmatprep.mubr.f32.mxu0 0.0
    %582 = vmatmul.mubr.f32.gmra.mxu0 0.0
    %v583 = vpop.f32.mrf.mxu0
    %v584 = vadd.f32 0.0, %v583
    %v585 = vpop.f32.mrf.mxu0
    %v586 = vadd.f32 0.0, %v585
    %587 = vdwg.mxu0
    %v588 = vadd.f32 %v378, %v513
    %v589 = vadd.f32 %v379, %v515
    %v590 = vadd.f32 %v380, %v584
    %v591 = vadd.f32 %v381, %v586
    %v592 = vxor.u32 %v588, 2147483648
    %v593 = vxor.u32 %v589, 2147483648
    %v594 = vxor.u32 %v590, 2147483648
    %v595 = vmul.f32 %v592, 1.442695
    %v596 = vpow.pop %v595
    %v597 = vmul.f32 %v593, 1.442695
    %v598 = vpow.pop %v597
    %v599 = vmul.f32 %v594, 1.442695
    %v600 = vpow.pop %v599
    %v601 = vadd.f32 %v596, 1.0
    %v602 = vadd.f32 %v598, 1.0
    %v603 = vadd.f32 %v600, 1.0
    %v604 = vrcp.pop %v601
    %v605 = vmul.f32 1.0, %v604
    %v606 = vrcp.pop %v602
    %v607 = vmul.f32 1.0, %v606
    %v608 = vrcp.pop %v603
    %v609 = vmul.f32 1.0, %v608
    %v610 = vtanh.pop %v591
    %v611 = vmul.f32 %v607, 0.0
    %v612 = vmul.f32 %v605, %v610
    %v613 = vadd.f32 %v611, %v612
    %v614 = vtanh.pop %v613
    %v615 = vmul.f32 %v609, %v614
    %v616 = vld [vmem:[#allocation7] sm:$0xff]
    %v617 = vld [vmem:[#allocation7 + $0x8] sm:$0xff]
    %v618 = vld [vmem:[#allocation7 + $0x10] sm:$0xff]
    %v619 = vld [vmem:[#allocation7 + $0x18] sm:$0xff]
    %v620 = vld [vmem:[#allocation7 + $0x20] sm:$0xff]
    %v621 = vld [vmem:[#allocation7 + $0x28] sm:$0xff]
    %v622 = vld [vmem:[#allocation7 + $0x30] sm:$0xff]
    %v623 = vld [vmem:[#allocation7 + $0x38] sm:$0xff]
    %v624 = vld [vmem:[#allocation7 + $0x40] sm:$0xff]
    %v625 = vld [vmem:[#allocation7 + $0x48] sm:$0xff]
    %v626 = vld [vmem:[#allocation7 + $0x50] sm:$0xff]
    %v627 = vld [vmem:[#allocation7 + $0x58] sm:$0xff]
    %v628 = vld [vmem:[#allocation7 + $0x60] sm:$0xff]
    %v629 = vld [vmem:[#allocation7 + $0x68] sm:$0xff]
    %v630 = vld [vmem:[#allocation7 + $0x70] sm:$0xff]
    %v631 = vld [vmem:[#allocation7 + $0x78] sm:$0xff]
    %v632 = vld [vmem:[#allocation7 + $0x80] sm:$0xff]
    %v633 = vld [vmem:[#allocation7 + $0x88] sm:$0xff]
    %v634 = vld [vmem:[#allocation7 + $0x90] sm:$0xff]
    %v635 = vld [vmem:[#allocation7 + $0x98] sm:$0xff]
    %v636 = vld [vmem:[#allocation7 + $0xa0] sm:$0xff]
    %v637 = vld [vmem:[#allocation7 + $0xa8] sm:$0xff]
    %v638 = vld [vmem:[#allocation7 + $0xb0] sm:$0xff]
    %v639 = vld [vmem:[#allocation7 + $0xb8] sm:$0xff]
    %v640 = vld [vmem:[#allocation7 + $0xc0] sm:$0xff]
    %v641 = vld [vmem:[#allocation7 + $0xc8] sm:$0xff]
    %v642 = vld [vmem:[#allocation7 + $0xd0] sm:$0xff]
    %v643 = vld [vmem:[#allocation7 + $0xd8] sm:$0xff]
    %v644 = vld [vmem:[#allocation7 + $0xe0] sm:$0xff]
    %v645 = vld [vmem:[#allocation7 + $0xe8] sm:$0xff]
    %v646 = vld [vmem:[#allocation7 + $0xf0] sm:$0xff]
    %v647 = vld [vmem:[#allocation7 + $0xf8] sm:$0xff]
    %v648 = vld [vmem:[#allocation7 + $0x100] sm:$0xff]
    %v649 = vld [vmem:[#allocation7 + $0x108] sm:$0xff]
    %v650 = vld [vmem:[#allocation7 + $0x110] sm:$0xff]
    %v651 = vld [vmem:[#allocation7 + $0x118] sm:$0xff]
    %v652 = vld [vmem:[#allocation7 + $0x120] sm:$0xff]
    %v653 = vld [vmem:[#allocation7 + $0x128] sm:$0xff]
    %v654 = vld [vmem:[#allocation7 + $0x130] sm:$0xff]
    %v655 = vld [vmem:[#allocation7 + $0x138] sm:$0xff]
    %v656 = vld [vmem:[#allocation7 + $0x140] sm:$0xff]
    %v657 = vld [vmem:[#allocation7 + $0x148] sm:$0xff]
    %v658 = vld [vmem:[#allocation7 + $0x150] sm:$0xff]
    %v659 = vld [vmem:[#allocation7 + $0x158] sm:$0xff]
    %v660 = vld [vmem:[#allocation7 + $0x160] sm:$0xff]
    %v661 = vld [vmem:[#allocation7 + $0x168] sm:$0xff]
    %v662 = vld [vmem:[#allocation7 + $0x170] sm:$0xff]
    %v663 = vld [vmem:[#allocation7 + $0x178] sm:$0xff]
    %v664 = vld [vmem:[#allocation7 + $0x180] sm:$0xff]
    %v665 = vld [vmem:[#allocation7 + $0x188] sm:$0xff]
    %v666 = vld [vmem:[#allocation7 + $0x190] sm:$0xff]
    %v667 = vld [vmem:[#allocation7 + $0x198] sm:$0xff]
    %v668 = vld [vmem:[#allocation7 + $0x1a0] sm:$0xff]
    %v669 = vld [vmem:[#allocation7 + $0x1a8] sm:$0xff]
    %v670 = vld [vmem:[#allocation7 + $0x1b0] sm:$0xff]
    %v671 = vld [vmem:[#allocation7 + $0x1b8] sm:$0xff]
    %v672 = vld [vmem:[#allocation7 + $0x1c0] sm:$0xff]
    %v673 = vld [vmem:[#allocation7 + $0x1c8] sm:$0xff]
    %v674 = vld [vmem:[#allocation7 + $0x1d0] sm:$0xff]
    %v675 = vld [vmem:[#allocation7 + $0x1d8] sm:$0xff]
    %v676 = vld [vmem:[#allocation7 + $0x1e0] sm:$0xff]
    %v677 = vld [vmem:[#allocation7 + $0x1e8] sm:$0xff]
    %v678 = vld [vmem:[#allocation7 + $0x1f0] sm:$0xff]
    %v679 = vld [vmem:[#allocation7 + $0x1f8] sm:$0xff]
    %v680 = vld [vmem:[#allocation7 + $0x200] sm:$0xff]
    %v681 = vld [vmem:[#allocation7 + $0x208] sm:$0xff]
    %v682 = vld [vmem:[#allocation7 + $0x210] sm:$0xff]
    %v683 = vld [vmem:[#allocation7 + $0x218] sm:$0xff]
    %v684 = vld [vmem:[#allocation7 + $0x220] sm:$0xff]
    %v685 = vld [vmem:[#allocation7 + $0x228] sm:$0xff]
    %v686 = vld [vmem:[#allocation7 + $0x230] sm:$0xff]
    %v687 = vld [vmem:[#allocation7 + $0x238] sm:$0xff]
    %v688 = vld [vmem:[#allocation7 + $0x240] sm:$0xff]
    %v689 = vld [vmem:[#allocation7 + $0x248] sm:$0xff]
    %v690 = vld [vmem:[#allocation7 + $0x250] sm:$0xff]
    %v691 = vld [vmem:[#allocation7 + $0x258] sm:$0xff]
    %v692 = vld [vmem:[#allocation7 + $0x260] sm:$0xff]
    %v693 = vld [vmem:[#allocation7 + $0x268] sm:$0xff]
    %v694 = vld [vmem:[#allocation7 + $0x270] sm:$0xff]
    %v695 = vld [vmem:[#allocation7 + $0x278] sm:$0xff]
    %v696 = vld [vmem:[#allocation7 + $0x280] sm:$0xff]
    %v697 = vld [vmem:[#allocation7 + $0x288] sm:$0xff]
    %v698 = vld [vmem:[#allocation7 + $0x290] sm:$0xff]
    %v699 = vld [vmem:[#allocation7 + $0x298] sm:$0xff]
    %v700 = vld [vmem:[#allocation7 + $0x2a0] sm:$0xff]
    %v701 = vld [vmem:[#allocation7 + $0x2a8] sm:$0xff]
    %v702 = vld [vmem:[#allocation7 + $0x2b0] sm:$0xff]
    %v703 = vld [vmem:[#allocation7 + $0x2b8] sm:$0xff]
    %v704 = vld [vmem:[#allocation7 + $0x2c0] sm:$0xff]
    %v705 = vld [vmem:[#allocation7 + $0x2c8] sm:$0xff]
    %v706 = vld [vmem:[#allocation7 + $0x2d0] sm:$0xff]
    %v707 = vld [vmem:[#allocation7 + $0x2d8] sm:$0xff]
    %v708 = vld [vmem:[#allocation7 + $0x2e0] sm:$0xff]
    %v709 = vld [vmem:[#allocation7 + $0x2e8] sm:$0xff]
    %v710 = vld [vmem:[#allocation7 + $0x2f0] sm:$0xff]
    %v711 = vld [vmem:[#allocation7 + $0x2f8] sm:$0xff]
    %v712 = vld [vmem:[#allocation7 + $0x300] sm:$0xff]
    %v713 = vld [vmem:[#allocation7 + $0x308] sm:$0xff]
    %v714 = vld [vmem:[#allocation7 + $0x310] sm:$0xff]
    %v715 = vld [vmem:[#allocation7 + $0x318] sm:$0xff]
    %v716 = vld [vmem:[#allocation7 + $0x320] sm:$0xff]
    %v717 = vld [vmem:[#allocation7 + $0x328] sm:$0xff]
    %v718 = vld [vmem:[#allocation7 + $0x330] sm:$0xff]
    %v719 = vld [vmem:[#allocation7 + $0x338] sm:$0xff]
    %v720 = vld [vmem:[#allocation7 + $0x340] sm:$0xff]
    %v721 = vld [vmem:[#allocation7 + $0x348] sm:$0xff]
    %v722 = vld [vmem:[#allocation7 + $0x350] sm:$0xff]
    %v723 = vld [vmem:[#allocation7 + $0x358] sm:$0xff]
    %v724 = vld [vmem:[#allocation7 + $0x360] sm:$0xff]
    %v725 = vld [vmem:[#allocation7 + $0x368] sm:$0xff]
    %v726 = vld [vmem:[#allocation7 + $0x370] sm:$0xff]
    %v727 = vld [vmem:[#allocation7 + $0x378] sm:$0xff]
    %v728 = vld [vmem:[#allocation7 + $0x380] sm:$0xff]
    %v729 = vld [vmem:[#allocation7 + $0x388] sm:$0xff]
    %v730 = vld [vmem:[#allocation7 + $0x390] sm:$0xff]
    %v731 = vld [vmem:[#allocation7 + $0x398] sm:$0xff]
    %v732 = vld [vmem:[#allocation7 + $0x3a0] sm:$0xff]
    %v733 = vld [vmem:[#allocation7 + $0x3a8] sm:$0xff]
    %v734 = vld [vmem:[#allocation7 + $0x3b0] sm:$0xff]
    %v735 = vld [vmem:[#allocation7 + $0x3b8] sm:$0xff]
    %v736 = vld [vmem:[#allocation7 + $0x3c0] sm:$0xff]
    %v737 = vld [vmem:[#allocation7 + $0x3c8] sm:$0xff]
    %v738 = vld [vmem:[#allocation7 + $0x3d0] sm:$0xff]
    %v739 = vld [vmem:[#allocation7 + $0x3d8] sm:$0xff]
    %v740 = vld [vmem:[#allocation7 + $0x3e0] sm:$0xff]
    %v741 = vld [vmem:[#allocation7 + $0x3e8] sm:$0xff]
    %v742 = vld [vmem:[#allocation7 + $0x3f0] sm:$0xff]
    %v743 = vld [vmem:[#allocation7 + $0x3f8] sm:$0xff]
    %v744 = vld [vmem:[%s5] sm:$0xf]
    %v746 = vlaneseq
    %v747 = vshrl.u32 %v746, 7
    %v748 = vsub.s32 0, %v747
    %v749 = vrot.slane %v744, %v748
    %v750 = vlaneseq
    %v751 = vshrl.u32 %v750, 7
    %v752 = vsub.s32 1, %v751
    %v753 = vrot.slane %v744, %v752
    %v754 = vlaneseq
    %v755 = vshrl.u32 %v754, 7
    %v756 = vsub.s32 2, %v755
    %v757 = vrot.slane %v744, %v756
    %v758 = vlaneseq
    %v759 = vshrl.u32 %v758, 7
    %v760 = vsub.s32 3, %v759
    %v761 = vrot.slane %v744, %v760
    %766 = vmatprep.subr.mxu0 %v677
    %767 = vmatpush1.msra.mxu0 %v676
    %768 = vmatprep.subr.mxu0 %v673
    %769 = vmatpush1.msra.mxu0 %v672
    %770 = vmatprep.subr.mxu0 %v669
    %771 = vmatpush1.msra.mxu0 %v668
    %772 = vmatprep.subr.mxu0 %v665
    %773 = vmatpush1.msra.mxu0 %v664
    %774 = vmatprep.subr.mxu0 %v661
    %775 = vmatpush1.msra.mxu0 %v660
    %776 = vmatprep.subr.mxu0 %v657
    %777 = vmatpush1.msra.mxu0 %v656
    %778 = vmatprep.subr.mxu0 %v653
    %779 = vmatpush1.msra.mxu0 %v652
    %780 = vmatprep.subr.mxu0 %v649
    %781 = vmatpush1.msra.mxu0 %v648
    %782 = vmatprep.subr.mxu0 %v645
    %783 = vmatpush1.msra.mxu0 %v644
    %784 = vmatprep.subr.mxu0 %v641
    %785 = vmatpush1.msra.mxu0 %v640
    %786 = vmatprep.subr.mxu0 %v637
    %787 = vmatpush1.msra.mxu0 %v636
    %788 = vmatprep.subr.mxu0 %v633
    %789 = vmatpush1.msra.mxu0 %v632
    %790 = vmatprep.subr.mxu0 %v629
    %791 = vmatpush1.msra.mxu0 %v628
    %792 = vmatprep.subr.mxu0 %v625
    %793 = vmatpush1.msra.mxu0 %v624
    %794 = vmatprep.subr.mxu0 %v621
    %795 = vmatpush1.msra.mxu0 %v620
    %796 = vmatprep.subr.mxu0 %v617
    %797 = vmatpush1.msra.mxu0 %v616
    %798 = vmatprep.subr.mxu0 %v741
    %799 = vmatpush2.msra.mxu0 %v740
    %800 = vmatprep.subr.mxu0 %v737
    %801 = vmatpush2.msra.mxu0 %v736
    %802 = vmatprep.subr.mxu0 %v733
    %803 = vmatpush2.msra.mxu0 %v732
    %804 = vmatprep.subr.mxu0 %v729
    %805 = vmatpush2.msra.mxu0 %v728
    %806 = vmatprep.subr.mxu0 %v725
    %807 = vmatpush2.msra.mxu0 %v724
    %808 = vmatprep.subr.mxu0 %v721
    %809 = vmatpush2.msra.mxu0 %v720
    %810 = vmatprep.subr.mxu0 %v717
    %811 = vmatpush2.msra.mxu0 %v716
    %812 = vmatprep.subr.mxu0 %v713
    %813 = vmatpush2.msra.mxu0 %v712
    %814 = vmatprep.subr.mxu0 %v709
    %815 = vmatpush2.msra.mxu0 %v708
    %816 = vmatprep.subr.mxu0 %v705
    %817 = vmatpush2.msra.mxu0 %v704
    %818 = vmatprep.subr.mxu0 %v701
    %819 = vmatpush2.msra.mxu0 %v700
    %820 = vmatprep.subr.mxu0 %v697
    %821 = vmatpush2.msra.mxu0 %v696
    %822 = vmatprep.subr.mxu0 %v693
    %823 = vmatpush2.msra.mxu0 %v692
    %824 = vmatprep.subr.mxu0 %v689
    %825 = vmatpush2.msra.mxu0 %v688
    %826 = vmatprep.subr.mxu0 %v685
    %827 = vmatpush2.msra.mxu0 %v684
    %828 = vmatprep.subr.mxu0 %v681
    %829 = vmatpush2.msra.mxu0 %v680
    %830 = vmatprep.mubr.f32.mxu0 0.0
    %831 = vmatmul.mubr.f32.gmra.mxu0 %v615
    %v832 = vpop.f32.mrf.mxu0
    %v833 = vadd.f32 %v749, %v832
    %v834 = vpop.f32.mrf.mxu0
    %v835 = vadd.f32 %v753, %v834
    %836 = vdwg.mxu0
    %837 = vmatprep.subr.mxu0 %v679
    %838 = vmatpush1.msra.mxu0 %v678
    %839 = vmatprep.subr.mxu0 %v675
    %840 = vmatpush1.msra.mxu0 %v674
    %841 = vmatprep.subr.mxu0 %v671
    %842 = vmatpush1.msra.mxu0 %v670
    %843 = vmatprep.subr.mxu0 %v667
    %844 = vmatpush1.msra.mxu0 %v666
    %845 = vmatprep.subr.mxu0 %v663
    %846 = vmatpush1.msra.mxu0 %v662
    %847 = vmatprep.subr.mxu0 %v659
    %848 = vmatpush1.msra.mxu0 %v658
    %849 = vmatprep.subr.mxu0 %v655
    %850 = vmatpush1.msra.mxu0 %v654
    %851 = vmatprep.subr.mxu0 %v651
    %852 = vmatpush1.msra.mxu0 %v650
    %853 = vmatprep.subr.mxu0 %v647
    %854 = vmatpush1.msra.mxu0 %v646
    %855 = vmatprep.subr.mxu0 %v643
    %856 = vmatpush1.msra.mxu0 %v642
    %857 = vmatprep.subr.mxu0 %v639
    %858 = vmatpush1.msra.mxu0 %v638
    %859 = vmatprep.subr.mxu0 %v635
    %860 = vmatpush1.msra.mxu0 %v634
    %861 = vmatprep.subr.mxu0 %v631
    %862 = vmatpush1.msra.mxu0 %v630
    %863 = vmatprep.subr.mxu0 %v627
    %864 = vmatpush1.msra.mxu0 %v626
    %865 = vmatprep.subr.mxu0 %v623
    %866 = vmatpush1.msra.mxu0 %v622
    %867 = vmatprep.subr.mxu0 %v619
    %868 = vmatpush1.msra.mxu0 %v618
    %869 = vmatprep.subr.mxu0 %v743
    %870 = vmatpush2.msra.mxu0 %v742
    %871 = vmatprep.subr.mxu0 %v739
    %872 = vmatpush2.msra.mxu0 %v738
    %873 = vmatprep.subr.mxu0 %v735
    %874 = vmatpush2.msra.mxu0 %v734
    %875 = vmatprep.subr.mxu0 %v731
    %876 = vmatpush2.msra.mxu0 %v730
    %877 = vmatprep.subr.mxu0 %v727
    %878 = vmatpush2.msra.mxu0 %v726
    %879 = vmatprep.subr.mxu0 %v723
    %880 = vmatpush2.msra.mxu0 %v722
    %881 = vmatprep.subr.mxu0 %v719
    %882 = vmatpush2.msra.mxu0 %v718
    %883 = vmatprep.subr.mxu0 %v715
    %884 = vmatpush2.msra.mxu0 %v714
    %885 = vmatprep.subr.mxu0 %v711
    %886 = vmatpush2.msra.mxu0 %v710
    %887 = vmatprep.subr.mxu0 %v707
    %888 = vmatpush2.msra.mxu0 %v706
    %889 = vmatprep.subr.mxu0 %v703
    %890 = vmatpush2.msra.mxu0 %v702
    %891 = vmatprep.subr.mxu0 %v699
    %892 = vmatpush2.msra.mxu0 %v698
    %893 = vmatprep.subr.mxu0 %v695
    %894 = vmatpush2.msra.mxu0 %v694
    %895 = vmatprep.subr.mxu0 %v691
    %896 = vmatpush2.msra.mxu0 %v690
    %897 = vmatprep.subr.mxu0 %v687
    %898 = vmatpush2.msra.mxu0 %v686
    %899 = vmatprep.subr.mxu0 %v683
    %900 = vmatpush2.msra.mxu0 %v682
    %901 = vmatprep.mubr.f32.mxu0 0.0
    %902 = vmatmul.mubr.f32.gmra.mxu0 %v615
    %v903 = vpop.f32.mrf.mxu0
    %v904 = vadd.f32 %v757, %v903
    %v905 = vpop.f32.mrf.mxu0
    %v906 = vadd.f32 %v761, %v905
    %907 = vdwg.mxu0
    %v908 = vxor.u32 %v833, 2147483648
    %v909 = vxor.u32 %v835, 2147483648
    %v910 = vxor.u32 %v904, 2147483648
    %v911 = vmul.f32 %v908, 1.442695
    %v912 = vpow.pop %v911
    %v913 = vmul.f32 %v909, 1.442695
    %v914 = vpow.pop %v913
    %v915 = vmul.f32 %v910, 1.442695
    %v916 = vpow.pop %v915
    %v917 = vadd.f32 %v912, 1.0
    %v918 = vadd.f32 %v914, 1.0
    %v919 = vadd.f32 %v916, 1.0
    %v920 = vrcp.pop %v917
    %v921 = vmul.f32 1.0, %v920
    %v922 = vrcp.pop %v918
    %v923 = vmul.f32 1.0, %v922
    %v924 = vrcp.pop %v919
    %v925 = vmul.f32 1.0, %v924
    %v926 = vtanh.pop %v906
    %v927 = vmul.f32 %v923, 0.0
    %v928 = vmul.f32 %v921, %v926
    %v929 = vadd.f32 %v927, %v928
    %v930 = vtanh.pop %v929
    %v931 = vmul.f32 %v925, %v930
    %932 = vst [vmem:[#allocation3] sm:$0xff] %v931
    %v933 = vld [vmem:[#allocation2 + $0x20] sm:$0xff]
    %v934 = vld [vmem:[#allocation2 + $0x28] sm:$0xff]
    %v935 = vld [vmem:[#allocation2 + $0x30] sm:$0xff]
    %v936 = vld [vmem:[#allocation2 + $0x38] sm:$0xff]
    %v937 = vld [vmem:[#allocation4] sm:$0xff]
    %v938 = vld [vmem:[#allocation4 + $0x8] sm:$0xff]
    %v939 = vld [vmem:[#allocation4 + $0x10] sm:$0xff]
    %v940 = vld [vmem:[#allocation4 + $0x18] sm:$0xff]
    %v941 = vld [vmem:[#allocation4 + $0x20] sm:$0xff]
    %v942 = vld [vmem:[#allocation4 + $0x28] sm:$0xff]
    %v943 = vld [vmem:[#allocation4 + $0x30] sm:$0xff]
    %v944 = vld [vmem:[#allocation4 + $0x38] sm:$0xff]
    %v945 = vld [vmem:[#allocation4 + $0x40] sm:$0xff]
    %v946 = vld [vmem:[#allocation4 + $0x48] sm:$0xff]
    %v947 = vld [vmem:[#allocation4 + $0x50] sm:$0xff]
    %v948 = vld [vmem:[#allocation4 + $0x58] sm:$0xff]
    %v949 = vld [vmem:[#allocation4 + $0x60] sm:$0xff]
    %v950 = vld [vmem:[#allocation4 + $0x68] sm:$0xff]
    %v951 = vld [vmem:[#allocation4 + $0x70] sm:$0xff]
    %v952 = vld [vmem:[#allocation4 + $0x78] sm:$0xff]
    %v953 = vld [vmem:[#allocation4 + $0x80] sm:$0xff]
    %v954 = vld [vmem:[#allocation4 + $0x88] sm:$0xff]
    %v955 = vld [vmem:[#allocation4 + $0x90] sm:$0xff]
    %v956 = vld [vmem:[#allocation4 + $0x98] sm:$0xff]
    %v957 = vld [vmem:[#allocation4 + $0xa0] sm:$0xff]
    %v958 = vld [vmem:[#allocation4 + $0xa8] sm:$0xff]
    %v959 = vld [vmem:[#allocation4 + $0xb0] sm:$0xff]
    %v960 = vld [vmem:[#allocation4 + $0xb8] sm:$0xff]
    %v961 = vld [vmem:[#allocation4 + $0xc0] sm:$0xff]
    %v962 = vld [vmem:[#allocation4 + $0xc8] sm:$0xff]
    %v963 = vld [vmem:[#allocation4 + $0xd0] sm:$0xff]
    %v964 = vld [vmem:[#allocation4 + $0xd8] sm:$0xff]
    %v965 = vld [vmem:[#allocation4 + $0xe0] sm:$0xff]
    %v966 = vld [vmem:[#allocation4 + $0xe8] sm:$0xff]
    %v967 = vld [vmem:[#allocation4 + $0xf0] sm:$0xff]
    %v968 = vld [vmem:[#allocation4 + $0xf8] sm:$0xff]
    %v969 = vld [vmem:[#allocation4 + $0x100] sm:$0xff]
    %v970 = vld [vmem:[#allocation4 + $0x108] sm:$0xff]
    %v971 = vld [vmem:[#allocation4 + $0x110] sm:$0xff]
    %v972 = vld [vmem:[#allocation4 + $0x118] sm:$0xff]
    %v973 = vld [vmem:[#allocation4 + $0x120] sm:$0xff]
    %v974 = vld [vmem:[#allocation4 + $0x128] sm:$0xff]
    %v975 = vld [vmem:[#allocation4 + $0x130] sm:$0xff]
    %v976 = vld [vmem:[#allocation4 + $0x138] sm:$0xff]
    %v977 = vld [vmem:[#allocation4 + $0x140] sm:$0xff]
    %v978 = vld [vmem:[#allocation4 + $0x148] sm:$0xff]
    %v979 = vld [vmem:[#allocation4 + $0x150] sm:$0xff]
    %v980 = vld [vmem:[#allocation4 + $0x158] sm:$0xff]
    %v981 = vld [vmem:[#allocation4 + $0x160] sm:$0xff]
    %v982 = vld [vmem:[#allocation4 + $0x168] sm:$0xff]
    %v983 = vld [vmem:[#allocation4 + $0x170] sm:$0xff]
    %v984 = vld [vmem:[#allocation4 + $0x178] sm:$0xff]
    %v985 = vld [vmem:[#allocation4 + $0x180] sm:$0xff]
    %v986 = vld [vmem:[#allocation4 + $0x188] sm:$0xff]
    %v987 = vld [vmem:[#allocation4 + $0x190] sm:$0xff]
    %v988 = vld [vmem:[#allocation4 + $0x198] sm:$0xff]
    %v989 = vld [vmem:[#allocation4 + $0x1a0] sm:$0xff]
    %v990 = vld [vmem:[#allocation4 + $0x1a8] sm:$0xff]
    %v991 = vld [vmem:[#allocation4 + $0x1b0] sm:$0xff]
    %v992 = vld [vmem:[#allocation4 + $0x1b8] sm:$0xff]
    %v993 = vld [vmem:[#allocation4 + $0x1c0] sm:$0xff]
    %v994 = vld [vmem:[#allocation4 + $0x1c8] sm:$0xff]
    %v995 = vld [vmem:[#allocation4 + $0x1d0] sm:$0xff]
    %v996 = vld [vmem:[#allocation4 + $0x1d8] sm:$0xff]
    %v997 = vld [vmem:[#allocation4 + $0x1e0] sm:$0xff]
    %v998 = vld [vmem:[#allocation4 + $0x1e8] sm:$0xff]
    %v999 = vld [vmem:[#allocation4 + $0x1f0] sm:$0xff]
    %v1000 = vld [vmem:[#allocation4 + $0x1f8] sm:$0xff]
    %1001 = vmatprep.subr.mxu0 %v998
    %1002 = vmatpush1.msra.mxu0 %v997
    %1003 = vmatprep.subr.mxu0 %v994
    %1004 = vmatpush1.msra.mxu0 %v993
    %1005 = vmatprep.subr.mxu0 %v990
    %1006 = vmatpush1.msra.mxu0 %v989
    %1007 = vmatprep.subr.mxu0 %v986
    %1008 = vmatpush1.msra.mxu0 %v985
    %1009 = vmatprep.subr.mxu0 %v982
    %1010 = vmatpush1.msra.mxu0 %v981
    %1011 = vmatprep.subr.mxu0 %v978
    %1012 = vmatpush1.msra.mxu0 %v977
    %1013 = vmatprep.subr.mxu0 %v974
    %1014 = vmatpush1.msra.mxu0 %v973
    %1015 = vmatprep.subr.mxu0 %v970
    %1016 = vmatpush1.msra.mxu0 %v969
    %1017 = vmatprep.subr.mxu0 %v966
    %1018 = vmatpush1.msra.mxu0 %v965
    %1019 = vmatprep.subr.mxu0 %v962
    %1020 = vmatpush1.msra.mxu0 %v961
    %1021 = vmatprep.subr.mxu0 %v958
    %1022 = vmatpush1.msra.mxu0 %v957
    %1023 = vmatprep.subr.mxu0 %v954
    %1024 = vmatpush1.msra.mxu0 %v953
    %1025 = vmatprep.subr.mxu0 %v950
    %1026 = vmatpush1.msra.mxu0 %v949
    %1027 = vmatprep.subr.mxu0 %v946
    %1028 = vmatpush1.msra.mxu0 %v945
    %1029 = vmatprep.subr.mxu0 %v942
    %1030 = vmatpush1.msra.mxu0 %v941
    %1031 = vmatprep.subr.mxu0 %v938
    %1032 = vmatpush1.msra.mxu0 %v937
    %1033 = vmatprep.subr.mxu0 0.0
    %1034 = vmatpush2.msra.mxu0 0.0
    %1035 = vmatprep.subr.mxu0 0.0
    %1036 = vmatpush2.msra.mxu0 0.0
    %1037 = vmatprep.subr.mxu0 0.0
    %1038 = vmatpush2.msra.mxu0 0.0
    %1039 = vmatprep.subr.mxu0 0.0
    %1040 = vmatpush2.msra.mxu0 0.0
    %1041 = vmatprep.subr.mxu0 0.0
    %1042 = vmatpush2.msra.mxu0 0.0
    %1043 = vmatprep.subr.mxu0 0.0
    %1044 = vmatpush2.msra.mxu0 0.0
    %1045 = vmatprep.subr.mxu0 0.0
    %1046 = vmatpush2.msra.mxu0 0.0
    %1047 = vmatprep.subr.mxu0 0.0
    %1048 = vmatpush2.msra.mxu0 0.0
    %1049 = vmatprep.subr.mxu0 0.0
    %1050 = vmatpush2.msra.mxu0 0.0
    %1051 = vmatprep.subr.mxu0 0.0
    %1052 = vmatpush2.msra.mxu0 0.0
    %1053 = vmatprep.subr.mxu0 0.0
    %1054 = vmatpush2.msra.mxu0 0.0
    %1055 = vmatprep.subr.mxu0 0.0
    %1056 = vmatpush2.msra.mxu0 0.0
    %1057 = vmatprep.subr.mxu0 0.0
    %1058 = vmatpush2.msra.mxu0 0.0
    %1059 = vmatprep.subr.mxu0 0.0
    %1060 = vmatpush2.msra.mxu0 0.0
    %1061 = vmatprep.subr.mxu0 0.0
    %1062 = vmatpush2.msra.mxu0 0.0
    %1063 = vmatprep.subr.mxu0 0.0
    %1064 = vmatpush2.msra.mxu0 0.0
    %1065 = vmatprep.mubr.f32.mxu0 0.0
    %1066 = vmatmul.mubr.f32.gmra.mxu0 %v615
    %v1067 = vpop.f32.mrf.mxu0
    %v1068 = vadd.f32 0.0, %v1067
    %v1069 = vpop.f32.mrf.mxu0
    %v1070 = vadd.f32 0.0, %v1069
    %1071 = vdwg.mxu0
    %1072 = vmatprep.subr.mxu0 %v1000
    %1073 = vmatpush1.msra.mxu0 %v999
    %1074 = vmatprep.subr.mxu0 %v996
    %1075 = vmatpush1.msra.mxu0 %v995
    %1076 = vmatprep.subr.mxu0 %v992
    %1077 = vmatpush1.msra.mxu0 %v991
    %1078 = vmatprep.subr.mxu0 %v988
    %1079 = vmatpush1.msra.mxu0 %v987
    %1080 = vmatprep.subr.mxu0 %v984
    %1081 = vmatpush1.msra.mxu0 %v983
    %1082 = vmatprep.subr.mxu0 %v980
    %1083 = vmatpush1.msra.mxu0 %v979
    %1084 = vmatprep.subr.mxu0 %v976
    %1085 = vmatpush1.msra.mxu0 %v975
    %1086 = vmatprep.subr.mxu0 %v972
    %1087 = vmatpush1.msra.mxu0 %v971
    %1088 = vmatprep.subr.mxu0 %v968
    %1089 = vmatpush1.msra.mxu0 %v967
    %1090 = vmatprep.subr.mxu0 %v964
    %1091 = vmatpush1.msra.mxu0 %v963
    %1092 = vmatprep.subr.mxu0 %v960
    %1093 = vmatpush1.msra.mxu0 %v959
    %1094 = vmatprep.subr.mxu0 %v956
    %1095 = vmatpush1.msra.mxu0 %v955
    %1096 = vmatprep.subr.mxu0 %v952
    %1097 = vmatpush1.msra.mxu0 %v951
    %1098 = vmatprep.subr.mxu0 %v948
    %1099 = vmatpush1.msra.mxu0 %v947
    %1100 = vmatprep.subr.mxu0 %v944
    %1101 = vmatpush1.msra.mxu0 %v943
    %1102 = vmatprep.subr.mxu0 %v940
    %1103 = vmatpush1.msra.mxu0 %v939
    %1104 = vmatprep.subr.mxu0 0.0
    %1105 = vmatpush2.msra.mxu0 0.0
    %1106 = vmatprep.subr.mxu0 0.0
    %1107 = vmatpush2.msra.mxu0 0.0
    %1108 = vmatprep.subr.mxu0 0.0
    %1109 = vmatpush2.msra.mxu0 0.0
    %1110 = vmatprep.subr.mxu0 0.0
    %1111 = vmatpush2.msra.mxu0 0.0
    %1112 = vmatprep.subr.mxu0 0.0
    %1113 = vmatpush2.msra.mxu0 0.0
    %1114 = vmatprep.subr.mxu0 0.0
    %1115 = vmatpush2.msra.mxu0 0.0
    %1116 = vmatprep.subr.mxu0 0.0
    %1117 = vmatpush2.msra.mxu0 0.0
    %1118 = vmatprep.subr.mxu0 0.0
    %1119 = vmatpush2.msra.mxu0 0.0
    %1120 = vmatprep.subr.mxu0 0.0
    %1121 = vmatpush2.msra.mxu0 0.0
    %1122 = vmatprep.subr.mxu0 0.0
    %1123 = vmatpush2.msra.mxu0 0.0
    %1124 = vmatprep.subr.mxu0 0.0
    %1125 = vmatpush2.msra.mxu0 0.0
    %1126 = vmatprep.subr.mxu0 0.0
    %1127 = vmatpush2.msra.mxu0 0.0
    %1128 = vmatprep.subr.mxu0 0.0
    %1129 = vmatpush2.msra.mxu0 0.0
    %1130 = vmatprep.subr.mxu0 0.0
    %1131 = vmatpush2.msra.mxu0 0.0
    %1132 = vmatprep.subr.mxu0 0.0
    %1133 = vmatpush2.msra.mxu0 0.0
    %1134 = vmatprep.subr.mxu0 0.0
    %1135 = vmatpush2.msra.mxu0 0.0
    %1136 = vmatprep.mubr.f32.mxu0 0.0
    %1137 = vmatmul.mubr.f32.gmra.mxu0 %v615
    %v1138 = vpop.f32.mrf.mxu0
    %v1139 = vadd.f32 0.0, %v1138
    %v1140 = vpop.f32.mrf.mxu0
    %v1141 = vadd.f32 0.0, %v1140
    %1142 = vdwg.mxu0
    %v1143 = vadd.f32 %v933, %v1068
    %v1144 = vadd.f32 %v934, %v1070
    %v1145 = vadd.f32 %v935, %v1139
    %v1146 = vadd.f32 %v936, %v1141
    %v1147 = vxor.u32 %v1143, 2147483648
    %v1148 = vxor.u32 %v1144, 2147483648
    %v1149 = vxor.u32 %v1145, 2147483648
    %v1150 = vmul.f32 %v1147, 1.442695
    %v1151 = vpow.pop %v1150
    %v1152 = vmul.f32 %v1148, 1.442695
    %v1153 = vpow.pop %v1152
    %v1154 = vmul.f32 %v1149, 1.442695
    %v1155 = vpow.pop %v1154
    %v1156 = vadd.f32 %v1151, 1.0
    %v1157 = vadd.f32 %v1153, 1.0
    %v1158 = vadd.f32 %v1155, 1.0
    %v1159 = vrcp.pop %v1156
    %v1160 = vmul.f32 1.0, %v1159
    %v1161 = vrcp.pop %v1157
    %v1162 = vmul.f32 1.0, %v1161
    %v1163 = vrcp.pop %v1158
    %v1164 = vmul.f32 1.0, %v1163
    %v1165 = vtanh.pop %v1146
    %v1166 = vmul.f32 %v1162, %v613
    %v1167 = vmul.f32 %v1160, %v1165
    %v1168 = vadd.f32 %v1166, %v1167
    %v1169 = vtanh.pop %v1168
    %v1170 = vmul.f32 %v1164, %v1169
    %v1171 = vld [vmem:[#allocation7] sm:$0xff]
    %v1172 = vld [vmem:[#allocation7 + $0x8] sm:$0xff]
    %v1173 = vld [vmem:[#allocation7 + $0x10] sm:$0xff]
    %v1174 = vld [vmem:[#allocation7 + $0x18] sm:$0xff]
    %v1175 = vld [vmem:[#allocation7 + $0x20] sm:$0xff]
    %v1176 = vld [vmem:[#allocation7 + $0x28] sm:$0xff]
    %v1177 = vld [vmem:[#allocation7 + $0x30] sm:$0xff]
    %v1178 = vld [vmem:[#allocation7 + $0x38] sm:$0xff]
    %v1179 = vld [vmem:[#allocation7 + $0x40] sm:$0xff]
    %v1180 = vld [vmem:[#allocation7 + $0x48] sm:$0xff]
    %v1181 = vld [vmem:[#allocation7 + $0x50] sm:$0xff]
    %v1182 = vld [vmem:[#allocation7 + $0x58] sm:$0xff]
    %v1183 = vld [vmem:[#allocation7 + $0x60] sm:$0xff]
    %v1184 = vld [vmem:[#allocation7 + $0x68] sm:$0xff]
    %v1185 = vld [vmem:[#allocation7 + $0x70] sm:$0xff]
    %v1186 = vld [vmem:[#allocation7 + $0x78] sm:$0xff]
    %v1187 = vld [vmem:[#allocation7 + $0x80] sm:$0xff]
    %v1188 = vld [vmem:[#allocation7 + $0x88] sm:$0xff]
    %v1189 = vld [vmem:[#allocation7 + $0x90] sm:$0xff]
    %v1190 = vld [vmem:[#allocation7 + $0x98] sm:$0xff]
    %v1191 = vld [vmem:[#allocation7 + $0xa0] sm:$0xff]
    %v1192 = vld [vmem:[#allocation7 + $0xa8] sm:$0xff]
    %v1193 = vld [vmem:[#allocation7 + $0xb0] sm:$0xff]
    %v1194 = vld [vmem:[#allocation7 + $0xb8] sm:$0xff]
    %v1195 = vld [vmem:[#allocation7 + $0xc0] sm:$0xff]
    %v1196 = vld [vmem:[#allocation7 + $0xc8] sm:$0xff]
    %v1197 = vld [vmem:[#allocation7 + $0xd0] sm:$0xff]
    %v1198 = vld [vmem:[#allocation7 + $0xd8] sm:$0xff]
    %v1199 = vld [vmem:[#allocation7 + $0xe0] sm:$0xff]
    %v1200 = vld [vmem:[#allocation7 + $0xe8] sm:$0xff]
    %v1201 = vld [vmem:[#allocation7 + $0xf0] sm:$0xff]
    %v1202 = vld [vmem:[#allocation7 + $0xf8] sm:$0xff]
    %v1203 = vld [vmem:[#allocation7 + $0x100] sm:$0xff]
    %v1204 = vld [vmem:[#allocation7 + $0x108] sm:$0xff]
    %v1205 = vld [vmem:[#allocation7 + $0x110] sm:$0xff]
    %v1206 = vld [vmem:[#allocation7 + $0x118] sm:$0xff]
    %v1207 = vld [vmem:[#allocation7 + $0x120] sm:$0xff]
    %v1208 = vld [vmem:[#allocation7 + $0x128] sm:$0xff]
    %v1209 = vld [vmem:[#allocation7 + $0x130] sm:$0xff]
    %v1210 = vld [vmem:[#allocation7 + $0x138] sm:$0xff]
    %v1211 = vld [vmem:[#allocation7 + $0x140] sm:$0xff]
    %v1212 = vld [vmem:[#allocation7 + $0x148] sm:$0xff]
    %v1213 = vld [vmem:[#allocation7 + $0x150] sm:$0xff]
    %v1214 = vld [vmem:[#allocation7 + $0x158] sm:$0xff]
    %v1215 = vld [vmem:[#allocation7 + $0x160] sm:$0xff]
    %v1216 = vld [vmem:[#allocation7 + $0x168] sm:$0xff]
    %v1217 = vld [vmem:[#allocation7 + $0x170] sm:$0xff]
    %v1218 = vld [vmem:[#allocation7 + $0x178] sm:$0xff]
    %v1219 = vld [vmem:[#allocation7 + $0x180] sm:$0xff]
    %v1220 = vld [vmem:[#allocation7 + $0x188] sm:$0xff]
    %v1221 = vld [vmem:[#allocation7 + $0x190] sm:$0xff]
    %v1222 = vld [vmem:[#allocation7 + $0x198] sm:$0xff]
    %v1223 = vld [vmem:[#allocation7 + $0x1a0] sm:$0xff]
    %v1224 = vld [vmem:[#allocation7 + $0x1a8] sm:$0xff]
    %v1225 = vld [vmem:[#allocation7 + $0x1b0] sm:$0xff]
    %v1226 = vld [vmem:[#allocation7 + $0x1b8] sm:$0xff]
    %v1227 = vld [vmem:[#allocation7 + $0x1c0] sm:$0xff]
    %v1228 = vld [vmem:[#allocation7 + $0x1c8] sm:$0xff]
    %v1229 = vld [vmem:[#allocation7 + $0x1d0] sm:$0xff]
    %v1230 = vld [vmem:[#allocation7 + $0x1d8] sm:$0xff]
    %v1231 = vld [vmem:[#allocation7 + $0x1e0] sm:$0xff]
    %v1232 = vld [vmem:[#allocation7 + $0x1e8] sm:$0xff]
    %v1233 = vld [vmem:[#allocation7 + $0x1f0] sm:$0xff]
    %v1234 = vld [vmem:[#allocation7 + $0x1f8] sm:$0xff]
    %v1235 = vld [vmem:[#allocation7 + $0x200] sm:$0xff]
    %v1236 = vld [vmem:[#allocation7 + $0x208] sm:$0xff]
    %v1237 = vld [vmem:[#allocation7 + $0x210] sm:$0xff]
    %v1238 = vld [vmem:[#allocation7 + $0x218] sm:$0xff]
    %v1239 = vld [vmem:[#allocation7 + $0x220] sm:$0xff]
    %v1240 = vld [vmem:[#allocation7 + $0x228] sm:$0xff]
    %v1241 = vld [vmem:[#allocation7 + $0x230] sm:$0xff]
    %v1242 = vld [vmem:[#allocation7 + $0x238] sm:$0xff]
    %v1243 = vld [vmem:[#allocation7 + $0x240] sm:$0xff]
    %v1244 = vld [vmem:[#allocation7 + $0x248] sm:$0xff]
    %v1245 = vld [vmem:[#allocation7 + $0x250] sm:$0xff]
    %v1246 = vld [vmem:[#allocation7 + $0x258] sm:$0xff]
    %v1247 = vld [vmem:[#allocation7 + $0x260] sm:$0xff]
    %v1248 = vld [vmem:[#allocation7 + $0x268] sm:$0xff]
    %v1249 = vld [vmem:[#allocation7 + $0x270] sm:$0xff]
    %v1250 = vld [vmem:[#allocation7 + $0x278] sm:$0xff]
    %v1251 = vld [vmem:[#allocation7 + $0x280] sm:$0xff]
    %v1252 = vld [vmem:[#allocation7 + $0x288] sm:$0xff]
    %v1253 = vld [vmem:[#allocation7 + $0x290] sm:$0xff]
    %v1254 = vld [vmem:[#allocation7 + $0x298] sm:$0xff]
    %v1255 = vld [vmem:[#allocation7 + $0x2a0] sm:$0xff]
    %v1256 = vld [vmem:[#allocation7 + $0x2a8] sm:$0xff]
    %v1257 = vld [vmem:[#allocation7 + $0x2b0] sm:$0xff]
    %v1258 = vld [vmem:[#allocation7 + $0x2b8] sm:$0xff]
    %v1259 = vld [vmem:[#allocation7 + $0x2c0] sm:$0xff]
    %v1260 = vld [vmem:[#allocation7 + $0x2c8] sm:$0xff]
    %v1261 = vld [vmem:[#allocation7 + $0x2d0] sm:$0xff]
    %v1262 = vld [vmem:[#allocation7 + $0x2d8] sm:$0xff]
    %v1263 = vld [vmem:[#allocation7 + $0x2e0] sm:$0xff]
    %v1264 = vld [vmem:[#allocation7 + $0x2e8] sm:$0xff]
    %v1265 = vld [vmem:[#allocation7 + $0x2f0] sm:$0xff]
    %v1266 = vld [vmem:[#allocation7 + $0x2f8] sm:$0xff]
    %v1267 = vld [vmem:[#allocation7 + $0x300] sm:$0xff]
    %v1268 = vld [vmem:[#allocation7 + $0x308] sm:$0xff]
    %v1269 = vld [vmem:[#allocation7 + $0x310] sm:$0xff]
    %v1270 = vld [vmem:[#allocation7 + $0x318] sm:$0xff]
    %v1271 = vld [vmem:[#allocation7 + $0x320] sm:$0xff]
    %v1272 = vld [vmem:[#allocation7 + $0x328] sm:$0xff]
    %v1273 = vld [vmem:[#allocation7 + $0x330] sm:$0xff]
    %v1274 = vld [vmem:[#allocation7 + $0x338] sm:$0xff]
    %v1275 = vld [vmem:[#allocation7 + $0x340] sm:$0xff]
    %v1276 = vld [vmem:[#allocation7 + $0x348] sm:$0xff]
    %v1277 = vld [vmem:[#allocation7 + $0x350] sm:$0xff]
    %v1278 = vld [vmem:[#allocation7 + $0x358] sm:$0xff]
    %v1279 = vld [vmem:[#allocation7 + $0x360] sm:$0xff]
    %v1280 = vld [vmem:[#allocation7 + $0x368] sm:$0xff]
    %v1281 = vld [vmem:[#allocation7 + $0x370] sm:$0xff]
    %v1282 = vld [vmem:[#allocation7 + $0x378] sm:$0xff]
    %v1283 = vld [vmem:[#allocation7 + $0x380] sm:$0xff]
    %v1284 = vld [vmem:[#allocation7 + $0x388] sm:$0xff]
    %v1285 = vld [vmem:[#allocation7 + $0x390] sm:$0xff]
    %v1286 = vld [vmem:[#allocation7 + $0x398] sm:$0xff]
    %v1287 = vld [vmem:[#allocation7 + $0x3a0] sm:$0xff]
    %v1288 = vld [vmem:[#allocation7 + $0x3a8] sm:$0xff]
    %v1289 = vld [vmem:[#allocation7 + $0x3b0] sm:$0xff]
    %v1290 = vld [vmem:[#allocation7 + $0x3b8] sm:$0xff]
    %v1291 = vld [vmem:[#allocation7 + $0x3c0] sm:$0xff]
    %v1292 = vld [vmem:[#allocation7 + $0x3c8] sm:$0xff]
    %v1293 = vld [vmem:[#allocation7 + $0x3d0] sm:$0xff]
    %v1294 = vld [vmem:[#allocation7 + $0x3d8] sm:$0xff]
    %v1295 = vld [vmem:[#allocation7 + $0x3e0] sm:$0xff]
    %v1296 = vld [vmem:[#allocation7 + $0x3e8] sm:$0xff]
    %v1297 = vld [vmem:[#allocation7 + $0x3f0] sm:$0xff]
    %v1298 = vld [vmem:[#allocation7 + $0x3f8] sm:$0xff]
    %v1299 = vld [vmem:[%s5] sm:$0xf]
    %v1301 = vlaneseq
    %v1302 = vshrl.u32 %v1301, 7
    %v1303 = vsub.s32 0, %v1302
    %v1304 = vrot.slane %v1299, %v1303
    %v1305 = vlaneseq
    %v1306 = vshrl.u32 %v1305, 7
    %v1307 = vsub.s32 1, %v1306
    %v1308 = vrot.slane %v1299, %v1307
    %v1309 = vlaneseq
    %v1310 = vshrl.u32 %v1309, 7
    %v1311 = vsub.s32 2, %v1310
    %v1312 = vrot.slane %v1299, %v1311
    %v1313 = vlaneseq
    %v1314 = vshrl.u32 %v1313, 7
    %v1315 = vsub.s32 3, %v1314
    %v1316 = vrot.slane %v1299, %v1315
    %1321 = vmatprep.subr.mxu0 %v1232
    %1322 = vmatpush1.msra.mxu0 %v1231
    %1323 = vmatprep.subr.mxu0 %v1228
    %1324 = vmatpush1.msra.mxu0 %v1227
    %1325 = vmatprep.subr.mxu0 %v1224
    %1326 = vmatpush1.msra.mxu0 %v1223
    %1327 = vmatprep.subr.mxu0 %v1220
    %1328 = vmatpush1.msra.mxu0 %v1219
    %1329 = vmatprep.subr.mxu0 %v1216
    %1330 = vmatpush1.msra.mxu0 %v1215
    %1331 = vmatprep.subr.mxu0 %v1212
    %1332 = vmatpush1.msra.mxu0 %v1211
    %1333 = vmatprep.subr.mxu0 %v1208
    %1334 = vmatpush1.msra.mxu0 %v1207
    %1335 = vmatprep.subr.mxu0 %v1204
    %1336 = vmatpush1.msra.mxu0 %v1203
    %1337 = vmatprep.subr.mxu0 %v1200
    %1338 = vmatpush1.msra.mxu0 %v1199
    %1339 = vmatprep.subr.mxu0 %v1196
    %1340 = vmatpush1.msra.mxu0 %v1195
    %1341 = vmatprep.subr.mxu0 %v1192
    %1342 = vmatpush1.msra.mxu0 %v1191
    %1343 = vmatprep.subr.mxu0 %v1188
    %1344 = vmatpush1.msra.mxu0 %v1187
    %1345 = vmatprep.subr.mxu0 %v1184
    %1346 = vmatpush1.msra.mxu0 %v1183
    %1347 = vmatprep.subr.mxu0 %v1180
    %1348 = vmatpush1.msra.mxu0 %v1179
    %1349 = vmatprep.subr.mxu0 %v1176
    %1350 = vmatpush1.msra.mxu0 %v1175
    %1351 = vmatprep.subr.mxu0 %v1172
    %1352 = vmatpush1.msra.mxu0 %v1171
    %1353 = vmatprep.subr.mxu0 %v1296
    %1354 = vmatpush2.msra.mxu0 %v1295
    %1355 = vmatprep.subr.mxu0 %v1292
    %1356 = vmatpush2.msra.mxu0 %v1291
    %1357 = vmatprep.subr.mxu0 %v1288
    %1358 = vmatpush2.msra.mxu0 %v1287
    %1359 = vmatprep.subr.mxu0 %v1284
    %1360 = vmatpush2.msra.mxu0 %v1283
    %1361 = vmatprep.subr.mxu0 %v1280
    %1362 = vmatpush2.msra.mxu0 %v1279
    %1363 = vmatprep.subr.mxu0 %v1276
    %1364 = vmatpush2.msra.mxu0 %v1275
    %1365 = vmatprep.subr.mxu0 %v1272
    %1366 = vmatpush2.msra.mxu0 %v1271
    %1367 = vmatprep.subr.mxu0 %v1268
    %1368 = vmatpush2.msra.mxu0 %v1267
    %1369 = vmatprep.subr.mxu0 %v1264
    %1370 = vmatpush2.msra.mxu0 %v1263
    %1371 = vmatprep.subr.mxu0 %v1260
    %1372 = vmatpush2.msra.mxu0 %v1259
    %1373 = vmatprep.subr.mxu0 %v1256
    %1374 = vmatpush2.msra.mxu0 %v1255
    %1375 = vmatprep.subr.mxu0 %v1252
    %1376 = vmatpush2.msra.mxu0 %v1251
    %1377 = vmatprep.subr.mxu0 %v1248
    %1378 = vmatpush2.msra.mxu0 %v1247
    %1379 = vmatprep.subr.mxu0 %v1244
    %1380 = vmatpush2.msra.mxu0 %v1243
    %1381 = vmatprep.subr.mxu0 %v1240
    %1382 = vmatpush2.msra.mxu0 %v1239
    %1383 = vmatprep.subr.mxu0 %v1236
    %1384 = vmatpush2.msra.mxu0 %v1235
    %1385 = vmatprep.mubr.f32.mxu0 %v931
    %1386 = vmatmul.mubr.f32.gmra.mxu0 %v1170
    %v1387 = vpop.f32.mrf.mxu0
    %v1388 = vadd.f32 %v1304, %v1387
    %v1389 = vpop.f32.mrf.mxu0
    %v1390 = vadd.f32 %v1308, %v1389
    %1391 = vdwg.mxu0
    %1392 = vmatprep.subr.mxu0 %v1234
    %1393 = vmatpush1.msra.mxu0 %v1233
    %1394 = vmatprep.subr.mxu0 %v1230
    %1395 = vmatpush1.msra.mxu0 %v1229
    %1396 = vmatprep.subr.mxu0 %v1226
    %1397 = vmatpush1.msra.mxu0 %v1225
    %1398 = vmatprep.subr.mxu0 %v1222
    %1399 = vmatpush1.msra.mxu0 %v1221
    %1400 = vmatprep.subr.mxu0 %v1218
    %1401 = vmatpush1.msra.mxu0 %v1217
    %1402 = vmatprep.subr.mxu0 %v1214
    %1403 = vmatpush1.msra.mxu0 %v1213
    %1404 = vmatprep.subr.mxu0 %v1210
    %1405 = vmatpush1.msra.mxu0 %v1209
    %1406 = vmatprep.subr.mxu0 %v1206
    %1407 = vmatpush1.msra.mxu0 %v1205
    %1408 = vmatprep.subr.mxu0 %v1202
    %1409 = vmatpush1.msra.mxu0 %v1201
    %1410 = vmatprep.subr.mxu0 %v1198
    %1411 = vmatpush1.msra.mxu0 %v1197
    %1412 = vmatprep.subr.mxu0 %v1194
    %1413 = vmatpush1.msra.mxu0 %v1193
    %1414 = vmatprep.subr.mxu0 %v1190
    %1415 = vmatpush1.msra.mxu0 %v1189
    %1416 = vmatprep.subr.mxu0 %v1186
    %1417 = vmatpush1.msra.mxu0 %v1185
    %1418 = vmatprep.subr.mxu0 %v1182
    %1419 = vmatpush1.msra.mxu0 %v1181
    %1420 = vmatprep.subr.mxu0 %v1178
    %1421 = vmatpush1.msra.mxu0 %v1177
    %1422 = vmatprep.subr.mxu0 %v1174
    %1423 = vmatpush1.msra.mxu0 %v1173
    %1424 = vmatprep.subr.mxu0 %v1298
    %1425 = vmatpush2.msra.mxu0 %v1297
    %1426 = vmatprep.subr.mxu0 %v1294
    %1427 = vmatpush2.msra.mxu0 %v1293
    %1428 = vmatprep.subr.mxu0 %v1290
    %1429 = vmatpush2.msra.mxu0 %v1289
    %1430 = vmatprep.subr.mxu0 %v1286
    %1431 = vmatpush2.msra.mxu0 %v1285
    %1432 = vmatprep.subr.mxu0 %v1282
    %1433 = vmatpush2.msra.mxu0 %v1281
    %1434 = vmatprep.subr.mxu0 %v1278
    %1435 = vmatpush2.msra.mxu0 %v1277
    %1436 = vmatprep.subr.mxu0 %v1274
    %1437 = vmatpush2.msra.mxu0 %v1273
    %1438 = vmatprep.subr.mxu0 %v1270
    %1439 = vmatpush2.msra.mxu0 %v1269
    %1440 = vmatprep.subr.mxu0 %v1266
    %1441 = vmatpush2.msra.mxu0 %v1265
    %1442 = vmatprep.subr.mxu0 %v1262
    %1443 = vmatpush2.msra.mxu0 %v1261
    %1444 = vmatprep.subr.mxu0 %v1258
    %1445 = vmatpush2.msra.mxu0 %v1257
    %1446 = vmatprep.subr.mxu0 %v1254
    %1447 = vmatpush2.msra.mxu0 %v1253
    %1448 = vmatprep.subr.mxu0 %v1250
    %1449 = vmatpush2.msra.mxu0 %v1249
    %1450 = vmatprep.subr.mxu0 %v1246
    %1451 = vmatpush2.msra.mxu0 %v1245
    %1452 = vmatprep.subr.mxu0 %v1242
    %1453 = vmatpush2.msra.mxu0 %v1241
    %1454 = vmatprep.subr.mxu0 %v1238
    %1455 = vmatpush2.msra.mxu0 %v1237
    %1456 = vmatprep.mubr.f32.mxu0 %v931
    %1457 = vmatmul.mubr.f32.gmra.mxu0 %v1170
    %v1458 = vpop.f32.mrf.mxu0
    %v1459 = vadd.f32 %v1312, %v1458
    %v1460 = vpop.f32.mrf.mxu0
    %v1461 = vadd.f32 %v1316, %v1460
    %1462 = vdwg.mxu0
    %v1463 = vxor.u32 %v1388, 2147483648
    %v1464 = vxor.u32 %v1390, 2147483648
    %v1465 = vxor.u32 %v1459, 2147483648
    %v1466 = vmul.f32 %v1463, 1.442695
    %v1467 = vpow.pop %v1466
    %v1468 = vmul.f32 %v1464, 1.442695
    %v1469 = vpow.pop %v1468
    %v1470 = vmul.f32 %v1465, 1.442695
    %v1471 = vpow.pop %v1470
    %v1472 = vadd.f32 %v1467, 1.0
    %v1473 = vadd.f32 %v1469, 1.0
    %v1474 = vadd.f32 %v1471, 1.0
    %v1475 = vrcp.pop %v1472
    %v1476 = vmul.f32 1.0, %v1475
    %v1477 = vrcp.pop %v1473
    %v1478 = vmul.f32 1.0, %v1477
    %v1479 = vrcp.pop %v1474
    %v1480 = vmul.f32 1.0, %v1479
    %v1481 = vtanh.pop %v1461
    %v1482 = vmul.f32 %v1478, %v929
    %v1483 = vmul.f32 %v1476, %v1481
    %v1484 = vadd.f32 %v1482, %v1483
    %v1485 = vtanh.pop %v1484
    %v1486 = vmul.f32 %v1480, %v1485
    %1487 = vst [vmem:[#allocation3 + $0x8] sm:$0xff] %v1486
    %v1488 = vld [vmem:[#allocation2 + $0x40] sm:$0xff]
    %v1489 = vld [vmem:[#allocation2 + $0x48] sm:$0xff]
    %v1490 = vld [vmem:[#allocation2 + $0x50] sm:$0xff]
    %v1491 = vld [vmem:[#allocation2 + $0x58] sm:$0xff]
    %v1492 = vld [vmem:[#allocation4] sm:$0xff]
    %v1493 = vld [vmem:[#allocation4 + $0x8] sm:$0xff]
    %v1494 = vld [vmem:[#allocation4 + $0x10] sm:$0xff]
    %v1495 = vld [vmem:[#allocation4 + $0x18] sm:$0xff]
    %v1496 = vld [vmem:[#allocation4 + $0x20] sm:$0xff]
    %v1497 = vld [vmem:[#allocation4 + $0x28] sm:$0xff]
    %v1498 = vld [vmem:[#allocation4 + $0x30] sm:$0xff]
    %v1499 = vld [vmem:[#allocation4 + $0x38] sm:$0xff]
    %v1500 = vld [vmem:[#allocation4 + $0x40] sm:$0xff]
    %v1501 = vld [vmem:[#allocation4 + $0x48] sm:$0xff]
    %v1502 = vld [vmem:[#allocation4 + $0x50] sm:$0xff]
    %v1503 = vld [vmem:[#allocation4 + $0x58] sm:$0xff]
    %v1504 = vld [vmem:[#allocation4 + $0x60] sm:$0xff]
    %v1505 = vld [vmem:[#allocation4 + $0x68] sm:$0xff]
    %v1506 = vld [vmem:[#allocation4 + $0x70] sm:$0xff]
    %v1507 = vld [vmem:[#allocation4 + $0x78] sm:$0xff]
    %v1508 = vld [vmem:[#allocation4 + $0x80] sm:$0xff]
    %v1509 = vld [vmem:[#allocation4 + $0x88] sm:$0xff]
    %v1510 = vld [vmem:[#allocation4 + $0x90] sm:$0xff]
    %v1511 = vld [vmem:[#allocation4 + $0x98] sm:$0xff]
    %v1512 = vld [vmem:[#allocation4 + $0xa0] sm:$0xff]
    %v1513 = vld [vmem:[#allocation4 + $0xa8] sm:$0xff]
    %v1514 = vld [vmem:[#allocation4 + $0xb0] sm:$0xff]
    %v1515 = vld [vmem:[#allocation4 + $0xb8] sm:$0xff]
    %v1516 = vld [vmem:[#allocation4 + $0xc0] sm:$0xff]
    %v1517 = vld [vmem:[#allocation4 + $0xc8] sm:$0xff]
    %v1518 = vld [vmem:[#allocation4 + $0xd0] sm:$0xff]
    %v1519 = vld [vmem:[#allocation4 + $0xd8] sm:$0xff]
    %v1520 = vld [vmem:[#allocation4 + $0xe0] sm:$0xff]
    %v1521 = vld [vmem:[#allocation4 + $0xe8] sm:$0xff]
    %v1522 = vld [vmem:[#allocation4 + $0xf0] sm:$0xff]
    %v1523 = vld [vmem:[#allocation4 + $0xf8] sm:$0xff]
    %v1524 = vld [vmem:[#allocation4 + $0x100] sm:$0xff]
    %v1525 = vld [vmem:[#allocation4 + $0x108] sm:$0xff]
    %v1526 = vld [vmem:[#allocation4 + $0x110] sm:$0xff]
    %v1527 = vld [vmem:[#allocation4 + $0x118] sm:$0xff]
    %v1528 = vld [vmem:[#allocation4 + $0x120] sm:$0xff]
    %v1529 = vld [vmem:[#allocation4 + $0x128] sm:$0xff]
    %v1530 = vld [vmem:[#allocation4 + $0x130] sm:$0xff]
    %v1531 = vld [vmem:[#allocation4 + $0x138] sm:$0xff]
    %v1532 = vld [vmem:[#allocation4 + $0x140] sm:$0xff]
    %v1533 = vld [vmem:[#allocation4 + $0x148] sm:$0xff]
    %v1534 = vld [vmem:[#allocation4 + $0x150] sm:$0xff]
    %v1535 = vld [vmem:[#allocation4 + $0x158] sm:$0xff]
    %v1536 = vld [vmem:[#allocation4 + $0x160] sm:$0xff]
    %v1537 = vld [vmem:[#allocation4 + $0x168] sm:$0xff]
    %v1538 = vld [vmem:[#allocation4 + $0x170] sm:$0xff]
    %v1539 = vld [vmem:[#allocation4 + $0x178] sm:$0xff]
    %v1540 = vld [vmem:[#allocation4 + $0x180] sm:$0xff]
    %v1541 = vld [vmem:[#allocation4 + $0x188] sm:$0xff]
    %v1542 = vld [vmem:[#allocation4 + $0x190] sm:$0xff]
    %v1543 = vld [vmem:[#allocation4 + $0x198] sm:$0xff]
    %v1544 = vld [vmem:[#allocation4 + $0x1a0] sm:$0xff]
    %v1545 = vld [vmem:[#allocation4 + $0x1a8] sm:$0xff]
    %v1546 = vld [vmem:[#allocation4 + $0x1b0] sm:$0xff]
    %v1547 = vld [vmem:[#allocation4 + $0x1b8] sm:$0xff]
    %v1548 = vld [vmem:[#allocation4 + $0x1c0] sm:$0xff]
    %v1549 = vld [vmem:[#allocation4 + $0x1c8] sm:$0xff]
    %v1550 = vld [vmem:[#allocation4 + $0x1d0] sm:$0xff]
    %v1551 = vld [vmem:[#allocation4 + $0x1d8] sm:$0xff]
    %v1552 = vld [vmem:[#allocation4 + $0x1e0] sm:$0xff]
    %v1553 = vld [vmem:[#allocation4 + $0x1e8] sm:$0xff]
    %v1554 = vld [vmem:[#allocation4 + $0x1f0] sm:$0xff]
    %v1555 = vld [vmem:[#allocation4 + $0x1f8] sm:$0xff]
    %1556 = vmatprep.subr.mxu0 %v1553
    %1557 = vmatpush1.msra.mxu0 %v1552
    %1558 = vmatprep.subr.mxu0 %v1549
    %1559 = vmatpush1.msra.mxu0 %v1548
    %1560 = vmatprep.subr.mxu0 %v1545
    %1561 = vmatpush1.msra.mxu0 %v1544
    %1562 = vmatprep.subr.mxu0 %v1541
    %1563 = vmatpush1.msra.mxu0 %v1540
    %1564 = vmatprep.subr.mxu0 %v1537
    %1565 = vmatpush1.msra.mxu0 %v1536
    %1566 = vmatprep.subr.mxu0 %v1533
    %1567 = vmatpush1.msra.mxu0 %v1532
    %1568 = vmatprep.subr.mxu0 %v1529
    %1569 = vmatpush1.msra.mxu0 %v1528
    %1570 = vmatprep.subr.mxu0 %v1525
    %1571 = vmatpush1.msra.mxu0 %v1524
    %1572 = vmatprep.subr.mxu0 %v1521
    %1573 = vmatpush1.msra.mxu0 %v1520
    %1574 = vmatprep.subr.mxu0 %v1517
    %1575 = vmatpush1.msra.mxu0 %v1516
    %1576 = vmatprep.subr.mxu0 %v1513
    %1577 = vmatpush1.msra.mxu0 %v1512
    %1578 = vmatprep.subr.mxu0 %v1509
    %1579 = vmatpush1.msra.mxu0 %v1508
    %1580 = vmatprep.subr.mxu0 %v1505
    %1581 = vmatpush1.msra.mxu0 %v1504
    %1582 = vmatprep.subr.mxu0 %v1501
    %1583 = vmatpush1.msra.mxu0 %v1500
    %1584 = vmatprep.subr.mxu0 %v1497
    %1585 = vmatpush1.msra.mxu0 %v1496
    %1586 = vmatprep.subr.mxu0 %v1493
    %1587 = vmatpush1.msra.mxu0 %v1492
    %1588 = vmatprep.subr.mxu0 0.0
    %1589 = vmatpush2.msra.mxu0 0.0
    %1590 = vmatprep.subr.mxu0 0.0
    %1591 = vmatpush2.msra.mxu0 0.0
    %1592 = vmatprep.subr.mxu0 0.0
    %1593 = vmatpush2.msra.mxu0 0.0
    %1594 = vmatprep.subr.mxu0 0.0
    %1595 = vmatpush2.msra.mxu0 0.0
    %1596 = vmatprep.subr.mxu0 0.0
    %1597 = vmatpush2.msra.mxu0 0.0
    %1598 = vmatprep.subr.mxu0 0.0
    %1599 = vmatpush2.msra.mxu0 0.0
    %1600 = vmatprep.subr.mxu0 0.0
    %1601 = vmatpush2.msra.mxu0 0.0
    %1602 = vmatprep.subr.mxu0 0.0
    %1603 = vmatpush2.msra.mxu0 0.0
    %1604 = vmatprep.subr.mxu0 0.0
    %1605 = vmatpush2.msra.mxu0 0.0
    %1606 = vmatprep.subr.mxu0 0.0
    %1607 = vmatpush2.msra.mxu0 0.0
    %1608 = vmatprep.subr.mxu0 0.0
    %1609 = vmatpush2.msra.mxu0 0.0
    %1610 = vmatprep.subr.mxu0 0.0
    %1611 = vmatpush2.msra.mxu0 0.0
    %1612 = vmatprep.subr.mxu0 0.0
    %1613 = vmatpush2.msra.mxu0 0.0
    %1614 = vmatprep.subr.mxu0 0.0
    %1615 = vmatpush2.msra.mxu0 0.0
    %1616 = vmatprep.subr.mxu0 0.0
    %1617 = vmatpush2.msra.mxu0 0.0
    %1618 = vmatprep.subr.mxu0 0.0
    %1619 = vmatpush2.msra.mxu0 0.0
    %1620 = vmatprep.mubr.f32.mxu0 0.0
    %1621 = vmatmul.mubr.f32.gmra.mxu0 %v1170
    %v1622 = vpop.f32.mrf.mxu0
    %v1623 = vadd.f32 0.0, %v1622
    %v1624 = vpop.f32.mrf.mxu0
    %v1625 = vadd.f32 0.0, %v1624
    %1626 = vdwg.mxu0
    %1627 = vmatprep.subr.mxu0 %v1555
    %1628 = vmatpush1.msra.mxu0 %v1554
    %1629 = vmatprep.subr.mxu0 %v1551
    %1630 = vmatpush1.msra.mxu0 %v1550
    %1631 = vmatprep.subr.mxu0 %v1547
    %1632 = vmatpush1.msra.mxu0 %v1546
    %1633 = vmatprep.subr.mxu0 %v1543
    %1634 = vmatpush1.msra.mxu0 %v1542
    %1635 = vmatprep.subr.mxu0 %v1539
    %1636 = vmatpush1.msra.mxu0 %v1538
    %1637 = vmatprep.subr.mxu0 %v1535
    %1638 = vmatpush1.msra.mxu0 %v1534
    %1639 = vmatprep.subr.mxu0 %v1531
    %1640 = vmatpush1.msra.mxu0 %v1530
    %1641 = vmatprep.subr.mxu0 %v1527
    %1642 = vmatpush1.msra.mxu0 %v1526
    %1643 = vmatprep.subr.mxu0 %v1523
    %1644 = vmatpush1.msra.mxu0 %v1522
    %1645 = vmatprep.subr.mxu0 %v1519
    %1646 = vmatpush1.msra.mxu0 %v1518
    %1647 = vmatprep.subr.mxu0 %v1515
    %1648 = vmatpush1.msra.mxu0 %v1514
    %1649 = vmatprep.subr.mxu0 %v1511
    %1650 = vmatpush1.msra.mxu0 %v1510
    %1651 = vmatprep.subr.mxu0 %v1507
    %1652 = vmatpush1.msra.mxu0 %v1506
    %1653 = vmatprep.subr.mxu0 %v1503
    %1654 = vmatpush1.msra.mxu0 %v1502
    %1655 = vmatprep.subr.mxu0 %v1499
    %1656 = vmatpush1.msra.mxu0 %v1498
    %1657 = vmatprep.subr.mxu0 %v1495
    %1658 = vmatpush1.msra.mxu0 %v1494
    %1659 = vmatprep.subr.mxu0 0.0
    %1660 = vmatpush2.msra.mxu0 0.0
    %1661 = vmatprep.subr.mxu0 0.0
    %1662 = vmatpush2.msra.mxu0 0.0
    %1663 = vmatprep.subr.mxu0 0.0
    %1664 = vmatpush2.msra.mxu0 0.0
    %1665 = vmatprep.subr.mxu0 0.0
    %1666 = vmatpush2.msra.mxu0 0.0
    %1667 = vmatprep.subr.mxu0 0.0
    %1668 = vmatpush2.msra.mxu0 0.0
    %1669 = vmatprep.subr.mxu0 0.0
    %1670 = vmatpush2.msra.mxu0 0.0
    %1671 = vmatprep.subr.mxu0 0.0
    %1672 = vmatpush2.msra.mxu0 0.0
    %1673 = vmatprep.subr.mxu0 0.0
    %1674 = vmatpush2.msra.mxu0 0.0
    %1675 = vmatprep.subr.mxu0 0.0
    %1676 = vmatpush2.msra.mxu0 0.0
    %1677 = vmatprep.subr.mxu0 0.0
    %1678 = vmatpush2.msra.mxu0 0.0
    %1679 = vmatprep.subr.mxu0 0.0
    %1680 = vmatpush2.msra.mxu0 0.0
    %1681 = vmatprep.subr.mxu0 0.0
    %1682 = vmatpush2.msra.mxu0 0.0
    %1683 = vmatprep.subr.mxu0 0.0
    %1684 = vmatpush2.msra.mxu0 0.0
    %1685 = vmatprep.subr.mxu0 0.0
    %1686 = vmatpush2.msra.mxu0 0.0
    %1687 = vmatprep.subr.mxu0 0.0
    %1688 = vmatpush2.msra.mxu0 0.0
    %1689 = vmatprep.subr.mxu0 0.0
    %1690 = vmatpush2.msra.mxu0 0.0
    %1691 = vmatprep.mubr.f32.mxu0 0.0
    %1692 = vmatmul.mubr.f32.gmra.mxu0 %v1170
    %v1693 = vpop.f32.mrf.mxu0
    %v1694 = vadd.f32 0.0, %v1693
    %v1695 = vpop.f32.mrf.mxu0
    %v1696 = vadd.f32 0.0, %v1695
    %1697 = vdwg.mxu0
    %v1698 = vadd.f32 %v1488, %v1623
    %v1699 = vadd.f32 %v1489, %v1625
    %v1700 = vadd.f32 %v1490, %v1694
    %v1701 = vadd.f32 %v1491, %v1696
    %v1702 = vxor.u32 %v1698, 2147483648
    %v1703 = vxor.u32 %v1699, 2147483648
    %v1704 = vxor.u32 %v1700, 2147483648
    %v1705 = vmul.f32 %v1702, 1.442695
    %v1706 = vpow.pop %v1705
    %v1707 = vmul.f32 %v1703, 1.442695
    %v1708 = vpow.pop %v1707
    %v1709 = vmul.f32 %v1704, 1.442695
    %v1710 = vpow.pop %v1709
    %v1711 = vadd.f32 %v1706, 1.0
    %v1712 = vadd.f32 %v1708, 1.0
    %v1713 = vadd.f32 %v1710, 1.0
    %v1714 = vrcp.pop %v1711
    %v1715 = vmul.f32 1.0, %v1714
    %v1716 = vrcp.pop %v1712
    %v1717 = vmul.f32 1.0, %v1716
    %v1718 = vrcp.pop %v1713
    %v1719 = vmul.f32 1.0, %v1718
    %v1720 = vtanh.pop %v1701
    %v1721 = vmul.f32 %v1717, %v1168
    %v1722 = vmul.f32 %v1715, %v1720
    %v1723 = vadd.f32 %v1721, %v1722
    %v1724 = vtanh.pop %v1723
    %v1725 = vmul.f32 %v1719, %v1724
    %v1726 = vld [vmem:[#allocation7] sm:$0xff]
    %v1727 = vld [vmem:[#allocation7 + $0x8] sm:$0xff]
    %v1728 = vld [vmem:[#allocation7 + $0x10] sm:$0xff]
    %v1729 = vld [vmem:[#allocation7 + $0x18] sm:$0xff]
    %v1730 = vld [vmem:[#allocation7 + $0x20] sm:$0xff]
    %v1731 = vld [vmem:[#allocation7 + $0x28] sm:$0xff]
    %v1732 = vld [vmem:[#allocation7 + $0x30] sm:$0xff]
    %v1733 = vld [vmem:[#allocation7 + $0x38] sm:$0xff]
    %v1734 = vld [vmem:[#allocation7 + $0x40] sm:$0xff]
    %v1735 = vld [vmem:[#allocation7 + $0x48] sm:$0xff]
    %v1736 = vld [vmem:[#allocation7 + $0x50] sm:$0xff]
    %v1737 = vld [vmem:[#allocation7 + $0x58] sm:$0xff]
    %v1738 = vld [vmem:[#allocation7 + $0x60] sm:$0xff]
    %v1739 = vld [vmem:[#allocation7 + $0x68] sm:$0xff]
    %v1740 = vld [vmem:[#allocation7 + $0x70] sm:$0xff]
    %v1741 = vld [vmem:[#allocation7 + $0x78] sm:$0xff]
    %v1742 = vld [vmem:[#allocation7 + $0x80] sm:$0xff]
    %v1743 = vld [vmem:[#allocation7 + $0x88] sm:$0xff]
    %v1744 = vld [vmem:[#allocation7 + $0x90] sm:$0xff]
    %v1745 = vld [vmem:[#allocation7 + $0x98] sm:$0xff]
    %v1746 = vld [vmem:[#allocation7 + $0xa0] sm:$0xff]
    %v1747 = vld [vmem:[#allocation7 + $0xa8] sm:$0xff]
    %v1748 = vld [vmem:[#allocation7 + $0xb0] sm:$0xff]
    %v1749 = vld [vmem:[#allocation7 + $0xb8] sm:$0xff]
    %v1750 = vld [vmem:[#allocation7 + $0xc0] sm:$0xff]
    %v1751 = vld [vmem:[#allocation7 + $0xc8] sm:$0xff]
    %v1752 = vld [vmem:[#allocation7 + $0xd0] sm:$0xff]
    %v1753 = vld [vmem:[#allocation7 + $0xd8] sm:$0xff]
    %v1754 = vld [vmem:[#allocation7 + $0xe0] sm:$0xff]
    %v1755 = vld [vmem:[#allocation7 + $0xe8] sm:$0xff]
    %v1756 = vld [vmem:[#allocation7 + $0xf0] sm:$0xff]
    %v1757 = vld [vmem:[#allocation7 + $0xf8] sm:$0xff]
    %v1758 = vld [vmem:[#allocation7 + $0x100] sm:$0xff]
    %v1759 = vld [vmem:[#allocation7 + $0x108] sm:$0xff]
    %v1760 = vld [vmem:[#allocation7 + $0x110] sm:$0xff]
    %v1761 = vld [vmem:[#allocation7 + $0x118] sm:$0xff]
    %v1762 = vld [vmem:[#allocation7 + $0x120] sm:$0xff]
    %v1763 = vld [vmem:[#allocation7 + $0x128] sm:$0xff]
    %v1764 = vld [vmem:[#allocation7 + $0x130] sm:$0xff]
    %v1765 = vld [vmem:[#allocation7 + $0x138] sm:$0xff]
    %v1766 = vld [vmem:[#allocation7 + $0x140] sm:$0xff]
    %v1767 = vld [vmem:[#allocation7 + $0x148] sm:$0xff]
    %v1768 = vld [vmem:[#allocation7 + $0x150] sm:$0xff]
    %v1769 = vld [vmem:[#allocation7 + $0x158] sm:$0xff]
    %v1770 = vld [vmem:[#allocation7 + $0x160] sm:$0xff]
    %v1771 = vld [vmem:[#allocation7 + $0x168] sm:$0xff]
    %v1772 = vld [vmem:[#allocation7 + $0x170] sm:$0xff]
    %v1773 = vld [vmem:[#allocation7 + $0x178] sm:$0xff]
    %v1774 = vld [vmem:[#allocation7 + $0x180] sm:$0xff]
    %v1775 = vld [vmem:[#allocation7 + $0x188] sm:$0xff]
    %v1776 = vld [vmem:[#allocation7 + $0x190] sm:$0xff]
    %v1777 = vld [vmem:[#allocation7 + $0x198] sm:$0xff]
    %v1778 = vld [vmem:[#allocation7 + $0x1a0] sm:$0xff]
    %v1779 = vld [vmem:[#allocation7 + $0x1a8] sm:$0xff]
    %v1780 = vld [vmem:[#allocation7 + $0x1b0] sm:$0xff]
    %v1781 = vld [vmem:[#allocation7 + $0x1b8] sm:$0xff]
    %v1782 = vld [vmem:[#allocation7 + $0x1c0] sm:$0xff]
    %v1783 = vld [vmem:[#allocation7 + $0x1c8] sm:$0xff]
    %v1784 = vld [vmem:[#allocation7 + $0x1d0] sm:$0xff]
    %v1785 = vld [vmem:[#allocation7 + $0x1d8] sm:$0xff]
    %v1786 = vld [vmem:[#allocation7 + $0x1e0] sm:$0xff]
    %v1787 = vld [vmem:[#allocation7 + $0x1e8] sm:$0xff]
    %v1788 = vld [vmem:[#allocation7 + $0x1f0] sm:$0xff]
    %v1789 = vld [vmem:[#allocation7 + $0x1f8] sm:$0xff]
    %v1790 = vld [vmem:[#allocation7 + $0x200] sm:$0xff]
    %v1791 = vld [vmem:[#allocation7 + $0x208] sm:$0xff]
    %v1792 = vld [vmem:[#allocation7 + $0x210] sm:$0xff]
    %v1793 = vld [vmem:[#allocation7 + $0x218] sm:$0xff]
    %v1794 = vld [vmem:[#allocation7 + $0x220] sm:$0xff]
    %v1795 = vld [vmem:[#allocation7 + $0x228] sm:$0xff]
    %v1796 = vld [vmem:[#allocation7 + $0x230] sm:$0xff]
    %v1797 = vld [vmem:[#allocation7 + $0x238] sm:$0xff]
    %v1798 = vld [vmem:[#allocation7 + $0x240] sm:$0xff]
    %v1799 = vld [vmem:[#allocation7 + $0x248] sm:$0xff]
    %v1800 = vld [vmem:[#allocation7 + $0x250] sm:$0xff]
    %v1801 = vld [vmem:[#allocation7 + $0x258] sm:$0xff]
    %v1802 = vld [vmem:[#allocation7 + $0x260] sm:$0xff]
    %v1803 = vld [vmem:[#allocation7 + $0x268] sm:$0xff]
    %v1804 = vld [vmem:[#allocation7 + $0x270] sm:$0xff]
    %v1805 = vld [vmem:[#allocation7 + $0x278] sm:$0xff]
    %v1806 = vld [vmem:[#allocation7 + $0x280] sm:$0xff]
    %v1807 = vld [vmem:[#allocation7 + $0x288] sm:$0xff]
    %v1808 = vld [vmem:[#allocation7 + $0x290] sm:$0xff]
    %v1809 = vld [vmem:[#allocation7 + $0x298] sm:$0xff]
    %v1810 = vld [vmem:[#allocation7 + $0x2a0] sm:$0xff]
    %v1811 = vld [vmem:[#allocation7 + $0x2a8] sm:$0xff]
    %v1812 = vld [vmem:[#allocation7 + $0x2b0] sm:$0xff]
    %v1813 = vld [vmem:[#allocation7 + $0x2b8] sm:$0xff]
    %v1814 = vld [vmem:[#allocation7 + $0x2c0] sm:$0xff]
    %v1815 = vld [vmem:[#allocation7 + $0x2c8] sm:$0xff]
    %v1816 = vld [vmem:[#allocation7 + $0x2d0] sm:$0xff]
    %v1817 = vld [vmem:[#allocation7 + $0x2d8] sm:$0xff]
    %v1818 = vld [vmem:[#allocation7 + $0x2e0] sm:$0xff]
    %v1819 = vld [vmem:[#allocation7 + $0x2e8] sm:$0xff]
    %v1820 = vld [vmem:[#allocation7 + $0x2f0] sm:$0xff]
    %v1821 = vld [vmem:[#allocation7 + $0x2f8] sm:$0xff]
    %v1822 = vld [vmem:[#allocation7 + $0x300] sm:$0xff]
    %v1823 = vld [vmem:[#allocation7 + $0x308] sm:$0xff]
    %v1824 = vld [vmem:[#allocation7 + $0x310] sm:$0xff]
    %v1825 = vld [vmem:[#allocation7 + $0x318] sm:$0xff]
    %v1826 = vld [vmem:[#allocation7 + $0x320] sm:$0xff]
    %v1827 = vld [vmem:[#allocation7 + $0x328] sm:$0xff]
    %v1828 = vld [vmem:[#allocation7 + $0x330] sm:$0xff]
    %v1829 = vld [vmem:[#allocation7 + $0x338] sm:$0xff]
    %v1830 = vld [vmem:[#allocation7 + $0x340] sm:$0xff]
    %v1831 = vld [vmem:[#allocation7 + $0x348] sm:$0xff]
    %v1832 = vld [vmem:[#allocation7 + $0x350] sm:$0xff]
    %v1833 = vld [vmem:[#allocation7 + $0x358] sm:$0xff]
    %v1834 = vld [vmem:[#allocation7 + $0x360] sm:$0xff]
    %v1835 = vld [vmem:[#allocation7 + $0x368] sm:$0xff]
    %v1836 = vld [vmem:[#allocation7 + $0x370] sm:$0xff]
    %v1837 = vld [vmem:[#allocation7 + $0x378] sm:$0xff]
    %v1838 = vld [vmem:[#allocation7 + $0x380] sm:$0xff]
    %v1839 = vld [vmem:[#allocation7 + $0x388] sm:$0xff]
    %v1840 = vld [vmem:[#allocation7 + $0x390] sm:$0xff]
    %v1841 = vld [vmem:[#allocation7 + $0x398] sm:$0xff]
    %v1842 = vld [vmem:[#allocation7 + $0x3a0] sm:$0xff]
    %v1843 = vld [vmem:[#allocation7 + $0x3a8] sm:$0xff]
    %v1844 = vld [vmem:[#allocation7 + $0x3b0] sm:$0xff]
    %v1845 = vld [vmem:[#allocation7 + $0x3b8] sm:$0xff]
    %v1846 = vld [vmem:[#allocation7 + $0x3c0] sm:$0xff]
    %v1847 = vld [vmem:[#allocation7 + $0x3c8] sm:$0xff]
    %v1848 = vld [vmem:[#allocation7 + $0x3d0] sm:$0xff]
    %v1849 = vld [vmem:[#allocation7 + $0x3d8] sm:$0xff]
    %v1850 = vld [vmem:[#allocation7 + $0x3e0] sm:$0xff]
    %v1851 = vld [vmem:[#allocation7 + $0x3e8] sm:$0xff]
    %v1852 = vld [vmem:[#allocation7 + $0x3f0] sm:$0xff]
    %v1853 = vld [vmem:[#allocation7 + $0x3f8] sm:$0xff]
    %v1854 = vld [vmem:[%s5] sm:$0xf]
    %v1856 = vlaneseq
    %v1857 = vshrl.u32 %v1856, 7
    %v1858 = vsub.s32 0, %v1857
    %v1859 = vrot.slane %v1854, %v1858
    %v1860 = vlaneseq
    %v1861 = vshrl.u32 %v1860, 7
    %v1862 = vsub.s32 1, %v1861
    %v1863 = vrot.slane %v1854, %v1862
    %v1864 = vlaneseq
    %v1865 = vshrl.u32 %v1864, 7
    %v1866 = vsub.s32 2, %v1865
    %v1867 = vrot.slane %v1854, %v1866
    %v1868 = vlaneseq
    %v1869 = vshrl.u32 %v1868, 7
    %v1870 = vsub.s32 3, %v1869
    %v1871 = vrot.slane %v1854, %v1870
    %1876 = vmatprep.subr.mxu0 %v1787
    %1877 = vmatpush1.msra.mxu0 %v1786
    %1878 = vmatprep.subr.mxu0 %v1783
    %1879 = vmatpush1.msra.mxu0 %v1782
    %1880 = vmatprep.subr.mxu0 %v1779
    %1881 = vmatpush1.msra.mxu0 %v1778
    %1882 = vmatprep.subr.mxu0 %v1775
    %1883 = vmatpush1.msra.mxu0 %v1774
    %1884 = vmatprep.subr.mxu0 %v1771
    %1885 = vmatpush1.msra.mxu0 %v1770
    %1886 = vmatprep.subr.mxu0 %v1767
    %1887 = vmatpush1.msra.mxu0 %v1766
    %1888 = vmatprep.subr.mxu0 %v1763
    %1889 = vmatpush1.msra.mxu0 %v1762
    %1890 = vmatprep.subr.mxu0 %v1759
    %1891 = vmatpush1.msra.mxu0 %v1758
    %1892 = vmatprep.subr.mxu0 %v1755
    %1893 = vmatpush1.msra.mxu0 %v1754
    %1894 = vmatprep.subr.mxu0 %v1751
    %1895 = vmatpush1.msra.mxu0 %v1750
    %1896 = vmatprep.subr.mxu0 %v1747
    %1897 = vmatpush1.msra.mxu0 %v1746
    %1898 = vmatprep.subr.mxu0 %v1743
    %1899 = vmatpush1.msra.mxu0 %v1742
    %1900 = vmatprep.subr.mxu0 %v1739
    %1901 = vmatpush1.msra.mxu0 %v1738
    %1902 = vmatprep.subr.mxu0 %v1735
    %1903 = vmatpush1.msra.mxu0 %v1734
    %1904 = vmatprep.subr.mxu0 %v1731
    %1905 = vmatpush1.msra.mxu0 %v1730
    %1906 = vmatprep.subr.mxu0 %v1727
    %1907 = vmatpush1.msra.mxu0 %v1726
    %1908 = vmatprep.subr.mxu0 %v1851
    %1909 = vmatpush2.msra.mxu0 %v1850
    %1910 = vmatprep.subr.mxu0 %v1847
    %1911 = vmatpush2.msra.mxu0 %v1846
    %1912 = vmatprep.subr.mxu0 %v1843
    %1913 = vmatpush2.msra.mxu0 %v1842
    %1914 = vmatprep.subr.mxu0 %v1839
    %1915 = vmatpush2.msra.mxu0 %v1838
    %1916 = vmatprep.subr.mxu0 %v1835
    %1917 = vmatpush2.msra.mxu0 %v1834
    %1918 = vmatprep.subr.mxu0 %v1831
    %1919 = vmatpush2.msra.mxu0 %v1830
    %1920 = vmatprep.subr.mxu0 %v1827
    %1921 = vmatpush2.msra.mxu0 %v1826
    %1922 = vmatprep.subr.mxu0 %v1823
    %1923 = vmatpush2.msra.mxu0 %v1822
    %1924 = vmatprep.subr.mxu0 %v1819
    %1925 = vmatpush2.msra.mxu0 %v1818
    %1926 = vmatprep.subr.mxu0 %v1815
    %1927 = vmatpush2.msra.mxu0 %v1814
    %1928 = vmatprep.subr.mxu0 %v1811
    %1929 = vmatpush2.msra.mxu0 %v1810
    %1930 = vmatprep.subr.mxu0 %v1807
    %1931 = vmatpush2.msra.mxu0 %v1806
    %1932 = vmatprep.subr.mxu0 %v1803
    %1933 = vmatpush2.msra.mxu0 %v1802
    %1934 = vmatprep.subr.mxu0 %v1799
    %1935 = vmatpush2.msra.mxu0 %v1798
    %1936 = vmatprep.subr.mxu0 %v1795
    %1937 = vmatpush2.msra.mxu0 %v1794
    %1938 = vmatprep.subr.mxu0 %v1791
    %1939 = vmatpush2.msra.mxu0 %v1790
    %1940 = vmatprep.mubr.f32.mxu0 %v1486
    %1941 = vmatmul.mubr.f32.gmra.mxu0 %v1725
    %v1942 = vpop.f32.mrf.mxu0
    %v1943 = vadd.f32 %v1859, %v1942
    %v1944 = vpop.f32.mrf.mxu0
    %v1945 = vadd.f32 %v1863, %v1944
    %1946 = vdwg.mxu0
    %1947 = vmatprep.subr.mxu0 %v1789
    %1948 = vmatpush1.msra.mxu0 %v1788
    %1949 = vmatprep.subr.mxu0 %v1785
    %1950 = vmatpush1.msra.mxu0 %v1784
    %1951 = vmatprep.subr.mxu0 %v1781
    %1952 = vmatpush1.msra.mxu0 %v1780
    %1953 = vmatprep.subr.mxu0 %v1777
    %1954 = vmatpush1.msra.mxu0 %v1776
    %1955 = vmatprep.subr.mxu0 %v1773
    %1956 = vmatpush1.msra.mxu0 %v1772
    %1957 = vmatprep.subr.mxu0 %v1769
    %1958 = vmatpush1.msra.mxu0 %v1768
    %1959 = vmatprep.subr.mxu0 %v1765
    %1960 = vmatpush1.msra.mxu0 %v1764
    %1961 = vmatprep.subr.mxu0 %v1761
    %1962 = vmatpush1.msra.mxu0 %v1760
    %1963 = vmatprep.subr.mxu0 %v1757
    %1964 = vmatpush1.msra.mxu0 %v1756
    %1965 = vmatprep.subr.mxu0 %v1753
    %1966 = vmatpush1.msra.mxu0 %v1752
    %1967 = vmatprep.subr.mxu0 %v1749
    %1968 = vmatpush1.msra.mxu0 %v1748
    %1969 = vmatprep.subr.mxu0 %v1745
    %1970 = vmatpush1.msra.mxu0 %v1744
    %1971 = vmatprep.subr.mxu0 %v1741
    %1972 = vmatpush1.msra.mxu0 %v1740
    %1973 = vmatprep.subr.mxu0 %v1737
    %1974 = vmatpush1.msra.mxu0 %v1736
    %1975 = vmatprep.subr.mxu0 %v1733
    %1976 = vmatpush1.msra.mxu0 %v1732
    %1977 = vmatprep.subr.mxu0 %v1729
    %1978 = vmatpush1.msra.mxu0 %v1728
    %1979 = vmatprep.subr.mxu0 %v1853
    %1980 = vmatpush2.msra.mxu0 %v1852
    %1981 = vmatprep.subr.mxu0 %v1849
    %1982 = vmatpush2.msra.mxu0 %v1848
    %1983 = vmatprep.subr.mxu0 %v1845
    %1984 = vmatpush2.msra.mxu0 %v1844
    %1985 = vmatprep.subr.mxu0 %v1841
    %1986 = vmatpush2.msra.mxu0 %v1840
    %1987 = vmatprep.subr.mxu0 %v1837
    %1988 = vmatpush2.msra.mxu0 %v1836
    %1989 = vmatprep.subr.mxu0 %v1833
    %1990 = vmatpush2.msra.mxu0 %v1832
    %1991 = vmatprep.subr.mxu0 %v1829
    %1992 = vmatpush2.msra.mxu0 %v1828
    %1993 = vmatprep.subr.mxu0 %v1825
    %1994 = vmatpush2.msra.mxu0 %v1824
    %1995 = vmatprep.subr.mxu0 %v1821
    %1996 = vmatpush2.msra.mxu0 %v1820
    %1997 = vmatprep.subr.mxu0 %v1817
    %1998 = vmatpush2.msra.mxu0 %v1816
    %1999 = vmatprep.subr.mxu0 %v1813
    %2000 = vmatpush2.msra.mxu0 %v1812
    %2001 = vmatprep.subr.mxu0 %v1809
    %2002 = vmatpush2.msra.mxu0 %v1808
    %2003 = vmatprep.subr.mxu0 %v1805
    %2004 = vmatpush2.msra.mxu0 %v1804
    %2005 = vmatprep.subr.mxu0 %v1801
    %2006 = vmatpush2.msra.mxu0 %v1800
    %2007 = vmatprep.subr.mxu0 %v1797
    %2008 = vmatpush2.msra.mxu0 %v1796
    %2009 = vmatprep.subr.mxu0 %v1793
    %2010 = vmatpush2.msra.mxu0 %v1792
    %2011 = vmatprep.mubr.f32.mxu0 %v1486
    %2012 = vmatmul.mubr.f32.gmra.mxu0 %v1725
    %v2013 = vpop.f32.mrf.mxu0
    %v2014 = vadd.f32 %v1867, %v2013
    %v2015 = vpop.f32.mrf.mxu0
    %v2016 = vadd.f32 %v1871, %v2015
    %2017 = vdwg.mxu0
    %v2018 = vxor.u32 %v1943, 2147483648
    %v2019 = vxor.u32 %v1945, 2147483648
    %v2020 = vxor.u32 %v2014, 2147483648
    %v2021 = vmul.f32 %v2018, 1.442695
    %v2022 = vpow.pop %v2021
    %v2023 = vmul.f32 %v2019, 1.442695
    %v2024 = vpow.pop %v2023
    %v2025 = vmul.f32 %v2020, 1.442695
    %v2026 = vpow.pop %v2025
    %v2027 = vadd.f32 %v2022, 1.0
    %v2028 = vadd.f32 %v2024, 1.0
    %v2029 = vadd.f32 %v2026, 1.0
    %v2030 = vrcp.pop %v2027
    %v2031 = vmul.f32 1.0, %v2030
    %v2032 = vrcp.pop %v2028
    %v2033 = vmul.f32 1.0, %v2032
    %v2034 = vrcp.pop %v2029
    %v2035 = vmul.f32 1.0, %v2034
    %v2036 = vtanh.pop %v2016
    %v2037 = vmul.f32 %v2033, %v1484
    %v2038 = vmul.f32 %v2031, %v2036
    %v2039 = vadd.f32 %v2037, %v2038
    %v2040 = vtanh.pop %v2039
    %v2041 = vmul.f32 %v2035, %v2040
    %2042 = vst [vmem:[#allocation3 + $0x10] sm:$0xff] %v2041
    %v2043 = vld [vmem:[#allocation2 + $0x60] sm:$0xff]
    %v2044 = vld [vmem:[#allocation2 + $0x68] sm:$0xff]
    %v2045 = vld [vmem:[#allocation2 + $0x70] sm:$0xff]
    %v2046 = vld [vmem:[#allocation2 + $0x78] sm:$0xff]
    %v2047 = vld [vmem:[#allocation4] sm:$0xff]
    %v2048 = vld [vmem:[#allocation4 + $0x8] sm:$0xff]
    %v2049 = vld [vmem:[#allocation4 + $0x10] sm:$0xff]
    %v2050 = vld [vmem:[#allocation4 + $0x18] sm:$0xff]
    %v2051 = vld [vmem:[#allocation4 + $0x20] sm:$0xff]
    %v2052 = vld [vmem:[#allocation4 + $0x28] sm:$0xff]
    %v2053 = vld [vmem:[#allocation4 + $0x30] sm:$0xff]
    %v2054 = vld [vmem:[#allocation4 + $0x38] sm:$0xff]
    %v2055 = vld [vmem:[#allocation4 + $0x40] sm:$0xff]
    %v2056 = vld [vmem:[#allocation4 + $0x48] sm:$0xff]
    %v2057 = vld [vmem:[#allocation4 + $0x50] sm:$0xff]
    %v2058 = vld [vmem:[#allocation4 + $0x58] sm:$0xff]
    %v2059 = vld [vmem:[#allocation4 + $0x60] sm:$0xff]
    %v2060 = vld [vmem:[#allocation4 + $0x68] sm:$0xff]
    %v2061 = vld [vmem:[#allocation4 + $0x70] sm:$0xff]
    %v2062 = vld [vmem:[#allocation4 + $0x78] sm:$0xff]
    %v2063 = vld [vmem:[#allocation4 + $0x80] sm:$0xff]
    %v2064 = vld [vmem:[#allocation4 + $0x88] sm:$0xff]
    %v2065 = vld [vmem:[#allocation4 + $0x90] sm:$0xff]
    %v2066 = vld [vmem:[#allocation4 + $0x98] sm:$0xff]
    %v2067 = vld [vmem:[#allocation4 + $0xa0] sm:$0xff]
    %v2068 = vld [vmem:[#allocation4 + $0xa8] sm:$0xff]
    %v2069 = vld [vmem:[#allocation4 + $0xb0] sm:$0xff]
    %v2070 = vld [vmem:[#allocation4 + $0xb8] sm:$0xff]
    %v2071 = vld [vmem:[#allocation4 + $0xc0] sm:$0xff]
    %v2072 = vld [vmem:[#allocation4 + $0xc8] sm:$0xff]
    %v2073 = vld [vmem:[#allocation4 + $0xd0] sm:$0xff]
    %v2074 = vld [vmem:[#allocation4 + $0xd8] sm:$0xff]
    %v2075 = vld [vmem:[#allocation4 + $0xe0] sm:$0xff]
    %v2076 = vld [vmem:[#allocation4 + $0xe8] sm:$0xff]
    %v2077 = vld [vmem:[#allocation4 + $0xf0] sm:$0xff]
    %v2078 = vld [vmem:[#allocation4 + $0xf8] sm:$0xff]
    %v2079 = vld [vmem:[#allocation4 + $0x100] sm:$0xff]
    %v2080 = vld [vmem:[#allocation4 + $0x108] sm:$0xff]
    %v2081 = vld [vmem:[#allocation4 + $0x110] sm:$0xff]
    %v2082 = vld [vmem:[#allocation4 + $0x118] sm:$0xff]
    %v2083 = vld [vmem:[#allocation4 + $0x120] sm:$0xff]
    %v2084 = vld [vmem:[#allocation4 + $0x128] sm:$0xff]
    %v2085 = vld [vmem:[#allocation4 + $0x130] sm:$0xff]
    %v2086 = vld [vmem:[#allocation4 + $0x138] sm:$0xff]
    %v2087 = vld [vmem:[#allocation4 + $0x140] sm:$0xff]
    %v2088 = vld [vmem:[#allocation4 + $0x148] sm:$0xff]
    %v2089 = vld [vmem:[#allocation4 + $0x150] sm:$0xff]
    %v2090 = vld [vmem:[#allocation4 + $0x158] sm:$0xff]
    %v2091 = vld [vmem:[#allocation4 + $0x160] sm:$0xff]
    %v2092 = vld [vmem:[#allocation4 + $0x168] sm:$0xff]
    %v2093 = vld [vmem:[#allocation4 + $0x170] sm:$0xff]
    %v2094 = vld [vmem:[#allocation4 + $0x178] sm:$0xff]
    %v2095 = vld [vmem:[#allocation4 + $0x180] sm:$0xff]
    %v2096 = vld [vmem:[#allocation4 + $0x188] sm:$0xff]
    %v2097 = vld [vmem:[#allocation4 + $0x190] sm:$0xff]
    %v2098 = vld [vmem:[#allocation4 + $0x198] sm:$0xff]
    %v2099 = vld [vmem:[#allocation4 + $0x1a0] sm:$0xff]
    %v2100 = vld [vmem:[#allocation4 + $0x1a8] sm:$0xff]
    %v2101 = vld [vmem:[#allocation4 + $0x1b0] sm:$0xff]
    %v2102 = vld [vmem:[#allocation4 + $0x1b8] sm:$0xff]
    %v2103 = vld [vmem:[#allocation4 + $0x1c0] sm:$0xff]
    %v2104 = vld [vmem:[#allocation4 + $0x1c8] sm:$0xff]
    %v2105 = vld [vmem:[#allocation4 + $0x1d0] sm:$0xff]
    %v2106 = vld [vmem:[#allocation4 + $0x1d8] sm:$0xff]
    %v2107 = vld [vmem:[#allocation4 + $0x1e0] sm:$0xff]
    %v2108 = vld [vmem:[#allocation4 + $0x1e8] sm:$0xff]
    %v2109 = vld [vmem:[#allocation4 + $0x1f0] sm:$0xff]
    %v2110 = vld [vmem:[#allocation4 + $0x1f8] sm:$0xff]
    %2111 = vmatprep.subr.mxu0 %v2108
    %2112 = vmatpush1.msra.mxu0 %v2107
    %2113 = vmatprep.subr.mxu0 %v2104
    %2114 = vmatpush1.msra.mxu0 %v2103
    %2115 = vmatprep.subr.mxu0 %v2100
    %2116 = vmatpush1.msra.mxu0 %v2099
    %2117 = vmatprep.subr.mxu0 %v2096
    %2118 = vmatpush1.msra.mxu0 %v2095
    %2119 = vmatprep.subr.mxu0 %v2092
    %2120 = vmatpush1.msra.mxu0 %v2091
    %2121 = vmatprep.subr.mxu0 %v2088
    %2122 = vmatpush1.msra.mxu0 %v2087
    %2123 = vmatprep.subr.mxu0 %v2084
    %2124 = vmatpush1.msra.mxu0 %v2083
    %2125 = vmatprep.subr.mxu0 %v2080
    %2126 = vmatpush1.msra.mxu0 %v2079
    %2127 = vmatprep.subr.mxu0 %v2076
    %2128 = vmatpush1.msra.mxu0 %v2075
    %2129 = vmatprep.subr.mxu0 %v2072
    %2130 = vmatpush1.msra.mxu0 %v2071
    %2131 = vmatprep.subr.mxu0 %v2068
    %2132 = vmatpush1.msra.mxu0 %v2067
    %2133 = vmatprep.subr.mxu0 %v2064
    %2134 = vmatpush1.msra.mxu0 %v2063
    %2135 = vmatprep.subr.mxu0 %v2060
    %2136 = vmatpush1.msra.mxu0 %v2059
    %2137 = vmatprep.subr.mxu0 %v2056
    %2138 = vmatpush1.msra.mxu0 %v2055
    %2139 = vmatprep.subr.mxu0 %v2052
    %2140 = vmatpush1.msra.mxu0 %v2051
    %2141 = vmatprep.subr.mxu0 %v2048
    %2142 = vmatpush1.msra.mxu0 %v2047
    %2143 = vmatprep.subr.mxu0 0.0
    %2144 = vmatpush2.msra.mxu0 0.0
    %2145 = vmatprep.subr.mxu0 0.0
    %2146 = vmatpush2.msra.mxu0 0.0
    %2147 = vmatprep.subr.mxu0 0.0
    %2148 = vmatpush2.msra.mxu0 0.0
    %2149 = vmatprep.subr.mxu0 0.0
    %2150 = vmatpush2.msra.mxu0 0.0
    %2151 = vmatprep.subr.mxu0 0.0
    %2152 = vmatpush2.msra.mxu0 0.0
    %2153 = vmatprep.subr.mxu0 0.0
    %2154 = vmatpush2.msra.mxu0 0.0
    %2155 = vmatprep.subr.mxu0 0.0
    %2156 = vmatpush2.msra.mxu0 0.0
    %2157 = vmatprep.subr.mxu0 0.0
    %2158 = vmatpush2.msra.mxu0 0.0
    %2159 = vmatprep.subr.mxu0 0.0
    %2160 = vmatpush2.msra.mxu0 0.0
    %2161 = vmatprep.subr.mxu0 0.0
    %2162 = vmatpush2.msra.mxu0 0.0
    %2163 = vmatprep.subr.mxu0 0.0
    %2164 = vmatpush2.msra.mxu0 0.0
    %2165 = vmatprep.subr.mxu0 0.0
    %2166 = vmatpush2.msra.mxu0 0.0
    %2167 = vmatprep.subr.mxu0 0.0
    %2168 = vmatpush2.msra.mxu0 0.0
    %2169 = vmatprep.subr.mxu0 0.0
    %2170 = vmatpush2.msra.mxu0 0.0
    %2171 = vmatprep.subr.mxu0 0.0
    %2172 = vmatpush2.msra.mxu0 0.0
    %2173 = vmatprep.subr.mxu0 0.0
    %2174 = vmatpush2.msra.mxu0 0.0
    %2175 = vmatprep.mubr.f32.mxu0 0.0
    %2176 = vmatmul.mubr.f32.gmra.mxu0 %v1725
    %v2177 = vpop.f32.mrf.mxu0
    %v2178 = vadd.f32 0.0, %v2177
    %v2179 = vpop.f32.mrf.mxu0
    %v2180 = vadd.f32 0.0, %v2179
    %2181 = vdwg.mxu0
    %2182 = vmatprep.subr.mxu0 %v2110
    %2183 = vmatpush1.msra.mxu0 %v2109
    %2184 = vmatprep.subr.mxu0 %v2106
    %2185 = vmatpush1.msra.mxu0 %v2105
    %2186 = vmatprep.subr.mxu0 %v2102
    %2187 = vmatpush1.msra.mxu0 %v2101
    %2188 = vmatprep.subr.mxu0 %v2098
    %2189 = vmatpush1.msra.mxu0 %v2097
    %2190 = vmatprep.subr.mxu0 %v2094
    %2191 = vmatpush1.msra.mxu0 %v2093
    %2192 = vmatprep.subr.mxu0 %v2090
    %2193 = vmatpush1.msra.mxu0 %v2089
    %2194 = vmatprep.subr.mxu0 %v2086
    %2195 = vmatpush1.msra.mxu0 %v2085
    %2196 = vmatprep.subr.mxu0 %v2082
    %2197 = vmatpush1.msra.mxu0 %v2081
    %2198 = vmatprep.subr.mxu0 %v2078
    %2199 = vmatpush1.msra.mxu0 %v2077
    %2200 = vmatprep.subr.mxu0 %v2074
    %2201 = vmatpush1.msra.mxu0 %v2073
    %2202 = vmatprep.subr.mxu0 %v2070
    %2203 = vmatpush1.msra.mxu0 %v2069
    %2204 = vmatprep.subr.mxu0 %v2066
    %2205 = vmatpush1.msra.mxu0 %v2065
    %2206 = vmatprep.subr.mxu0 %v2062
    %2207 = vmatpush1.msra.mxu0 %v2061
    %2208 = vmatprep.subr.mxu0 %v2058
    %2209 = vmatpush1.msra.mxu0 %v2057
    %2210 = vmatprep.subr.mxu0 %v2054
    %2211 = vmatpush1.msra.mxu0 %v2053
    %2212 = vmatprep.subr.mxu0 %v2050
    %2213 = vmatpush1.msra.mxu0 %v2049
    %2214 = vmatprep.subr.mxu0 0.0
    %2215 = vmatpush2.msra.mxu0 0.0
    %2216 = vmatprep.subr.mxu0 0.0
    %2217 = vmatpush2.msra.mxu0 0.0
    %2218 = vmatprep.subr.mxu0 0.0
    %2219 = vmatpush2.msra.mxu0 0.0
    %2220 = vmatprep.subr.mxu0 0.0
    %2221 = vmatpush2.msra.mxu0 0.0
    %2222 = vmatprep.subr.mxu0 0.0
    %2223 = vmatpush2.msra.mxu0 0.0
    %2224 = vmatprep.subr.mxu0 0.0
    %2225 = vmatpush2.msra.mxu0 0.0
    %2226 = vmatprep.subr.mxu0 0.0
    %2227 = vmatpush2.msra.mxu0 0.0
    %2228 = vmatprep.subr.mxu0 0.0
    %2229 = vmatpush2.msra.mxu0 0.0
    %2230 = vmatprep.subr.mxu0 0.0
    %2231 = vmatpush2.msra.mxu0 0.0
    %2232 = vmatprep.subr.mxu0 0.0
    %2233 = vmatpush2.msra.mxu0 0.0
    %2234 = vmatprep.subr.mxu0 0.0
    %2235 = vmatpush2.msra.mxu0 0.0
    %2236 = vmatprep.subr.mxu0 0.0
    %2237 = vmatpush2.msra.mxu0 0.0
    %2238 = vmatprep.subr.mxu0 0.0
    %2239 = vmatpush2.msra.mxu0 0.0
    %2240 = vmatprep.subr.mxu0 0.0
    %2241 = vmatpush2.msra.mxu0 0.0
    %2242 = vmatprep.subr.mxu0 0.0
    %2243 = vmatpush2.msra.mxu0 0.0
    %2244 = vmatprep.subr.mxu0 0.0
    %2245 = vmatpush2.msra.mxu0 0.0
    %2246 = vmatprep.mubr.f32.mxu0 0.0
    %2247 = vmatmul.mubr.f32.gmra.mxu0 %v1725
    %v2248 = vpop.f32.mrf.mxu0
    %v2249 = vadd.f32 0.0, %v2248
    %v2250 = vpop.f32.mrf.mxu0
    %v2251 = vadd.f32 0.0, %v2250
    %2252 = vdwg.mxu0
    %v2253 = vadd.f32 %v2043, %v2178
    %v2254 = vadd.f32 %v2044, %v2180
    %v2255 = vadd.f32 %v2045, %v2249
    %v2256 = vadd.f32 %v2046, %v2251
    %v2257 = vxor.u32 %v2253, 2147483648
    %v2258 = vxor.u32 %v2254, 2147483648
    %v2259 = vxor.u32 %v2255, 2147483648
    %v2260 = vmul.f32 %v2257, 1.442695
    %v2261 = vpow.pop %v2260
    %v2262 = vmul.f32 %v2258, 1.442695
    %v2263 = vpow.pop %v2262
    %v2264 = vmul.f32 %v2259, 1.442695
    %v2265 = vpow.pop %v2264
    %v2266 = vadd.f32 %v2261, 1.0
    %v2267 = vadd.f32 %v2263, 1.0
    %v2268 = vadd.f32 %v2265, 1.0
    %v2269 = vrcp.pop %v2266
    %v2270 = vmul.f32 1.0, %v2269
    %v2271 = vrcp.pop %v2267
    %v2272 = vmul.f32 1.0, %v2271
    %v2273 = vrcp.pop %v2268
    %v2274 = vmul.f32 1.0, %v2273
    %v2275 = vtanh.pop %v2256
    %v2276 = vmul.f32 %v2272, %v1723
    %v2277 = vmul.f32 %v2270, %v2275
    %v2278 = vadd.f32 %v2276, %v2277
    %v2279 = vtanh.pop %v2278
    %v2280 = vmul.f32 %v2274, %v2279
    %v2281 = vld [vmem:[#allocation7] sm:$0xff]
    %v2282 = vld [vmem:[#allocation7 + $0x8] sm:$0xff]
    %v2283 = vld [vmem:[#allocation7 + $0x10] sm:$0xff]
    %v2284 = vld [vmem:[#allocation7 + $0x18] sm:$0xff]
    %v2285 = vld [vmem:[#allocation7 + $0x20] sm:$0xff]
    %v2286 = vld [vmem:[#allocation7 + $0x28] sm:$0xff]
    %v2287 = vld [vmem:[#allocation7 + $0x30] sm:$0xff]
    %v2288 = vld [vmem:[#allocation7 + $0x38] sm:$0xff]
    %v2289 = vld [vmem:[#allocation7 + $0x40] sm:$0xff]
    %v2290 = vld [vmem:[#allocation7 + $0x48] sm:$0xff]
    %v2291 = vld [vmem:[#allocation7 + $0x50] sm:$0xff]
    %v2292 = vld [vmem:[#allocation7 + $0x58] sm:$0xff]
    %v2293 = vld [vmem:[#allocation7 + $0x60] sm:$0xff]
    %v2294 = vld [vmem:[#allocation7 + $0x68] sm:$0xff]
    %v2295 = vld [vmem:[#allocation7 + $0x70] sm:$0xff]
    %v2296 = vld [vmem:[#allocation7 + $0x78] sm:$0xff]
    %v2297 = vld [vmem:[#allocation7 + $0x80] sm:$0xff]
    %v2298 = vld [vmem:[#allocation7 + $0x88] sm:$0xff]
    %v2299 = vld [vmem:[#allocation7 + $0x90] sm:$0xff]
    %v2300 = vld [vmem:[#allocation7 + $0x98] sm:$0xff]
    %v2301 = vld [vmem:[#allocation7 + $0xa0] sm:$0xff]
    %v2302 = vld [vmem:[#allocation7 + $0xa8] sm:$0xff]
    %v2303 = vld [vmem:[#allocation7 + $0xb0] sm:$0xff]
    %v2304 = vld [vmem:[#allocation7 + $0xb8] sm:$0xff]
    %v2305 = vld [vmem:[#allocation7 + $0xc0] sm:$0xff]
    %v2306 = vld [vmem:[#allocation7 + $0xc8] sm:$0xff]
    %v2307 = vld [vmem:[#allocation7 + $0xd0] sm:$0xff]
    %v2308 = vld [vmem:[#allocation7 + $0xd8] sm:$0xff]
    %v2309 = vld [vmem:[#allocation7 + $0xe0] sm:$0xff]
    %v2310 = vld [vmem:[#allocation7 + $0xe8] sm:$0xff]
    %v2311 = vld [vmem:[#allocation7 + $0xf0] sm:$0xff]
    %v2312 = vld [vmem:[#allocation7 + $0xf8] sm:$0xff]
    %v2313 = vld [vmem:[#allocation7 + $0x100] sm:$0xff]
    %v2314 = vld [vmem:[#allocation7 + $0x108] sm:$0xff]
    %v2315 = vld [vmem:[#allocation7 + $0x110] sm:$0xff]
    %v2316 = vld [vmem:[#allocation7 + $0x118] sm:$0xff]
    %v2317 = vld [vmem:[#allocation7 + $0x120] sm:$0xff]
    %v2318 = vld [vmem:[#allocation7 + $0x128] sm:$0xff]
    %v2319 = vld [vmem:[#allocation7 + $0x130] sm:$0xff]
    %v2320 = vld [vmem:[#allocation7 + $0x138] sm:$0xff]
    %v2321 = vld [vmem:[#allocation7 + $0x140] sm:$0xff]
    %v2322 = vld [vmem:[#allocation7 + $0x148] sm:$0xff]
    %v2323 = vld [vmem:[#allocation7 + $0x150] sm:$0xff]
    %v2324 = vld [vmem:[#allocation7 + $0x158] sm:$0xff]
    %v2325 = vld [vmem:[#allocation7 + $0x160] sm:$0xff]
    %v2326 = vld [vmem:[#allocation7 + $0x168] sm:$0xff]
    %v2327 = vld [vmem:[#allocation7 + $0x170] sm:$0xff]
    %v2328 = vld [vmem:[#allocation7 + $0x178] sm:$0xff]
    %v2329 = vld [vmem:[#allocation7 + $0x180] sm:$0xff]
    %v2330 = vld [vmem:[#allocation7 + $0x188] sm:$0xff]
    %v2331 = vld [vmem:[#allocation7 + $0x190] sm:$0xff]
    %v2332 = vld [vmem:[#allocation7 + $0x198] sm:$0xff]
    %v2333 = vld [vmem:[#allocation7 + $0x1a0] sm:$0xff]
    %v2334 = vld [vmem:[#allocation7 + $0x1a8] sm:$0xff]
    %v2335 = vld [vmem:[#allocation7 + $0x1b0] sm:$0xff]
    %v2336 = vld [vmem:[#allocation7 + $0x1b8] sm:$0xff]
    %v2337 = vld [vmem:[#allocation7 + $0x1c0] sm:$0xff]
    %v2338 = vld [vmem:[#allocation7 + $0x1c8] sm:$0xff]
    %v2339 = vld [vmem:[#allocation7 + $0x1d0] sm:$0xff]
    %v2340 = vld [vmem:[#allocation7 + $0x1d8] sm:$0xff]
    %v2341 = vld [vmem:[#allocation7 + $0x1e0] sm:$0xff]
    %v2342 = vld [vmem:[#allocation7 + $0x1e8] sm:$0xff]
    %v2343 = vld [vmem:[#allocation7 + $0x1f0] sm:$0xff]
    %v2344 = vld [vmem:[#allocation7 + $0x1f8] sm:$0xff]
    %v2345 = vld [vmem:[#allocation7 + $0x200] sm:$0xff]
    %v2346 = vld [vmem:[#allocation7 + $0x208] sm:$0xff]
    %v2347 = vld [vmem:[#allocation7 + $0x210] sm:$0xff]
    %v2348 = vld [vmem:[#allocation7 + $0x218] sm:$0xff]
    %v2349 = vld [vmem:[#allocation7 + $0x220] sm:$0xff]
    %v2350 = vld [vmem:[#allocation7 + $0x228] sm:$0xff]
    %v2351 = vld [vmem:[#allocation7 + $0x230] sm:$0xff]
    %v2352 = vld [vmem:[#allocation7 + $0x238] sm:$0xff]
    %v2353 = vld [vmem:[#allocation7 + $0x240] sm:$0xff]
    %v2354 = vld [vmem:[#allocation7 + $0x248] sm:$0xff]
    %v2355 = vld [vmem:[#allocation7 + $0x250] sm:$0xff]
    %v2356 = vld [vmem:[#allocation7 + $0x258] sm:$0xff]
    %v2357 = vld [vmem:[#allocation7 + $0x260] sm:$0xff]
    %v2358 = vld [vmem:[#allocation7 + $0x268] sm:$0xff]
    %v2359 = vld [vmem:[#allocation7 + $0x270] sm:$0xff]
    %v2360 = vld [vmem:[#allocation7 + $0x278] sm:$0xff]
    %v2361 = vld [vmem:[#allocation7 + $0x280] sm:$0xff]
    %v2362 = vld [vmem:[#allocation7 + $0x288] sm:$0xff]
    %v2363 = vld [vmem:[#allocation7 + $0x290] sm:$0xff]
    %v2364 = vld [vmem:[#allocation7 + $0x298] sm:$0xff]
    %v2365 = vld [vmem:[#allocation7 + $0x2a0] sm:$0xff]
    %v2366 = vld [vmem:[#allocation7 + $0x2a8] sm:$0xff]
    %v2367 = vld [vmem:[#allocation7 + $0x2b0] sm:$0xff]
    %v2368 = vld [vmem:[#allocation7 + $0x2b8] sm:$0xff]
    %v2369 = vld [vmem:[#allocation7 + $0x2c0] sm:$0xff]
    %v2370 = vld [vmem:[#allocation7 + $0x2c8] sm:$0xff]
    %v2371 = vld [vmem:[#allocation7 + $0x2d0] sm:$0xff]
    %v2372 = vld [vmem:[#allocation7 + $0x2d8] sm:$0xff]
    %v2373 = vld [vmem:[#allocation7 + $0x2e0] sm:$0xff]
    %v2374 = vld [vmem:[#allocation7 + $0x2e8] sm:$0xff]
    %v2375 = vld [vmem:[#allocation7 + $0x2f0] sm:$0xff]
    %v2376 = vld [vmem:[#allocation7 + $0x2f8] sm:$0xff]
    %v2377 = vld [vmem:[#allocation7 + $0x300] sm:$0xff]
    %v2378 = vld [vmem:[#allocation7 + $0x308] sm:$0xff]
    %v2379 = vld [vmem:[#allocation7 + $0x310] sm:$0xff]
    %v2380 = vld [vmem:[#allocation7 + $0x318] sm:$0xff]
    %v2381 = vld [vmem:[#allocation7 + $0x320] sm:$0xff]
    %v2382 = vld [vmem:[#allocation7 + $0x328] sm:$0xff]
    %v2383 = vld [vmem:[#allocation7 + $0x330] sm:$0xff]
    %v2384 = vld [vmem:[#allocation7 + $0x338] sm:$0xff]
    %v2385 = vld [vmem:[#allocation7 + $0x340] sm:$0xff]
    %v2386 = vld [vmem:[#allocation7 + $0x348] sm:$0xff]
    %v2387 = vld [vmem:[#allocation7 + $0x350] sm:$0xff]
    %v2388 = vld [vmem:[#allocation7 + $0x358] sm:$0xff]
    %v2389 = vld [vmem:[#allocation7 + $0x360] sm:$0xff]
    %v2390 = vld [vmem:[#allocation7 + $0x368] sm:$0xff]
    %v2391 = vld [vmem:[#allocation7 + $0x370] sm:$0xff]
    %v2392 = vld [vmem:[#allocation7 + $0x378] sm:$0xff]
    %v2393 = vld [vmem:[#allocation7 + $0x380] sm:$0xff]
    %v2394 = vld [vmem:[#allocation7 + $0x388] sm:$0xff]
    %v2395 = vld [vmem:[#allocation7 + $0x390] sm:$0xff]
    %v2396 = vld [vmem:[#allocation7 + $0x398] sm:$0xff]
    %v2397 = vld [vmem:[#allocation7 + $0x3a0] sm:$0xff]
    %v2398 = vld [vmem:[#allocation7 + $0x3a8] sm:$0xff]
    %v2399 = vld [vmem:[#allocation7 + $0x3b0] sm:$0xff]
    %v2400 = vld [vmem:[#allocation7 + $0x3b8] sm:$0xff]
    %v2401 = vld [vmem:[#allocation7 + $0x3c0] sm:$0xff]
    %v2402 = vld [vmem:[#allocation7 + $0x3c8] sm:$0xff]
    %v2403 = vld [vmem:[#allocation7 + $0x3d0] sm:$0xff]
    %v2404 = vld [vmem:[#allocation7 + $0x3d8] sm:$0xff]
    %v2405 = vld [vmem:[#allocation7 + $0x3e0] sm:$0xff]
    %v2406 = vld [vmem:[#allocation7 + $0x3e8] sm:$0xff]
    %v2407 = vld [vmem:[#allocation7 + $0x3f0] sm:$0xff]
    %v2408 = vld [vmem:[#allocation7 + $0x3f8] sm:$0xff]
    %v2409 = vld [vmem:[%s5] sm:$0xf]
    %v2411 = vlaneseq
    %v2412 = vshrl.u32 %v2411, 7
    %v2413 = vsub.s32 0, %v2412
    %v2414 = vrot.slane %v2409, %v2413
    %v2415 = vlaneseq
    %v2416 = vshrl.u32 %v2415, 7
    %v2417 = vsub.s32 1, %v2416
    %v2418 = vrot.slane %v2409, %v2417
    %v2419 = vlaneseq
    %v2420 = vshrl.u32 %v2419, 7
    %v2421 = vsub.s32 2, %v2420
    %v2422 = vrot.slane %v2409, %v2421
    %v2423 = vlaneseq
    %v2424 = vshrl.u32 %v2423, 7
    %v2425 = vsub.s32 3, %v2424
    %v2426 = vrot.slane %v2409, %v2425
    %2431 = vmatprep.subr.mxu0 %v2342
    %2432 = vmatpush1.msra.mxu0 %v2341
    %2433 = vmatprep.subr.mxu0 %v2338
    %2434 = vmatpush1.msra.mxu0 %v2337
    %2435 = vmatprep.subr.mxu0 %v2334
    %2436 = vmatpush1.msra.mxu0 %v2333
    %2437 = vmatprep.subr.mxu0 %v2330
    %2438 = vmatpush1.msra.mxu0 %v2329
    %2439 = vmatprep.subr.mxu0 %v2326
    %2440 = vmatpush1.msra.mxu0 %v2325
    %2441 = vmatprep.subr.mxu0 %v2322
    %2442 = vmatpush1.msra.mxu0 %v2321
    %2443 = vmatprep.subr.mxu0 %v2318
    %2444 = vmatpush1.msra.mxu0 %v2317
    %2445 = vmatprep.subr.mxu0 %v2314
    %2446 = vmatpush1.msra.mxu0 %v2313
    %2447 = vmatprep.subr.mxu0 %v2310
    %2448 = vmatpush1.msra.mxu0 %v2309
    %2449 = vmatprep.subr.mxu0 %v2306
    %2450 = vmatpush1.msra.mxu0 %v2305
    %2451 = vmatprep.subr.mxu0 %v2302
    %2452 = vmatpush1.msra.mxu0 %v2301
    %2453 = vmatprep.subr.mxu0 %v2298
    %2454 = vmatpush1.msra.mxu0 %v2297
    %2455 = vmatprep.subr.mxu0 %v2294
    %2456 = vmatpush1.msra.mxu0 %v2293
    %2457 = vmatprep.subr.mxu0 %v2290
    %2458 = vmatpush1.msra.mxu0 %v2289
    %2459 = vmatprep.subr.mxu0 %v2286
    %2460 = vmatpush1.msra.mxu0 %v2285
    %2461 = vmatprep.subr.mxu0 %v2282
    %2462 = vmatpush1.msra.mxu0 %v2281
    %2463 = vmatprep.subr.mxu0 %v2406
    %2464 = vmatpush2.msra.mxu0 %v2405
    %2465 = vmatprep.subr.mxu0 %v2402
    %2466 = vmatpush2.msra.mxu0 %v2401
    %2467 = vmatprep.subr.mxu0 %v2398
    %2468 = vmatpush2.msra.mxu0 %v2397
    %2469 = vmatprep.subr.mxu0 %v2394
    %2470 = vmatpush2.msra.mxu0 %v2393
    %2471 = vmatprep.subr.mxu0 %v2390
    %2472 = vmatpush2.msra.mxu0 %v2389
    %2473 = vmatprep.subr.mxu0 %v2386
    %2474 = vmatpush2.msra.mxu0 %v2385
    %2475 = vmatprep.subr.mxu0 %v2382
    %2476 = vmatpush2.msra.mxu0 %v2381
    %2477 = vmatprep.subr.mxu0 %v2378
    %2478 = vmatpush2.msra.mxu0 %v2377
    %2479 = vmatprep.subr.mxu0 %v2374
    %2480 = vmatpush2.msra.mxu0 %v2373
    %2481 = vmatprep.subr.mxu0 %v2370
    %2482 = vmatpush2.msra.mxu0 %v2369
    %2483 = vmatprep.subr.mxu0 %v2366
    %2484 = vmatpush2.msra.mxu0 %v2365
    %2485 = vmatprep.subr.mxu0 %v2362
    %2486 = vmatpush2.msra.mxu0 %v2361
    %2487 = vmatprep.subr.mxu0 %v2358
    %2488 = vmatpush2.msra.mxu0 %v2357
    %2489 = vmatprep.subr.mxu0 %v2354
    %2490 = vmatpush2.msra.mxu0 %v2353
    %2491 = vmatprep.subr.mxu0 %v2350
    %2492 = vmatpush2.msra.mxu0 %v2349
    %2493 = vmatprep.subr.mxu0 %v2346
    %2494 = vmatpush2.msra.mxu0 %v2345
    %2495 = vmatprep.mubr.f32.mxu0 %v2041
    %2496 = vmatmul.mubr.f32.gmra.mxu0 %v2280
    %v2497 = vpop.f32.mrf.mxu0
    %v2498 = vadd.f32 %v2414, %v2497
    %v2499 = vpop.f32.mrf.mxu0
    %v2500 = vadd.f32 %v2418, %v2499
    %2501 = vdwg.mxu0
    %2502 = vmatprep.subr.mxu0 %v2344
    %2503 = vmatpush1.msra.mxu0 %v2343
    %2504 = vmatprep.subr.mxu0 %v2340
    %2505 = vmatpush1.msra.mxu0 %v2339
    %2506 = vmatprep.subr.mxu0 %v2336
    %2507 = vmatpush1.msra.mxu0 %v2335
    %2508 = vmatprep.subr.mxu0 %v2332
    %2509 = vmatpush1.msra.mxu0 %v2331
    %2510 = vmatprep.subr.mxu0 %v2328
    %2511 = vmatpush1.msra.mxu0 %v2327
    %2512 = vmatprep.subr.mxu0 %v2324
    %2513 = vmatpush1.msra.mxu0 %v2323
    %2514 = vmatprep.subr.mxu0 %v2320
    %2515 = vmatpush1.msra.mxu0 %v2319
    %2516 = vmatprep.subr.mxu0 %v2316
    %2517 = vmatpush1.msra.mxu0 %v2315
    %2518 = vmatprep.subr.mxu0 %v2312
    %2519 = vmatpush1.msra.mxu0 %v2311
    %2520 = vmatprep.subr.mxu0 %v2308
    %2521 = vmatpush1.msra.mxu0 %v2307
    %2522 = vmatprep.subr.mxu0 %v2304
    %2523 = vmatpush1.msra.mxu0 %v2303
    %2524 = vmatprep.subr.mxu0 %v2300
    %2525 = vmatpush1.msra.mxu0 %v2299
    %2526 = vmatprep.subr.mxu0 %v2296
    %2527 = vmatpush1.msra.mxu0 %v2295
    %2528 = vmatprep.subr.mxu0 %v2292
    %2529 = vmatpush1.msra.mxu0 %v2291
    %2530 = vmatprep.subr.mxu0 %v2288
    %2531 = vmatpush1.msra.mxu0 %v2287
    %2532 = vmatprep.subr.mxu0 %v2284
    %2533 = vmatpush1.msra.mxu0 %v2283
    %2534 = vmatprep.subr.mxu0 %v2408
    %2535 = vmatpush2.msra.mxu0 %v2407
    %2536 = vmatprep.subr.mxu0 %v2404
    %2537 = vmatpush2.msra.mxu0 %v2403
    %2538 = vmatprep.subr.mxu0 %v2400
    %2539 = vmatpush2.msra.mxu0 %v2399
    %2540 = vmatprep.subr.mxu0 %v2396
    %2541 = vmatpush2.msra.mxu0 %v2395
    %2542 = vmatprep.subr.mxu0 %v2392
    %2543 = vmatpush2.msra.mxu0 %v2391
    %2544 = vmatprep.subr.mxu0 %v2388
    %2545 = vmatpush2.msra.mxu0 %v2387
    %2546 = vmatprep.subr.mxu0 %v2384
    %2547 = vmatpush2.msra.mxu0 %v2383
    %2548 = vmatprep.subr.mxu0 %v2380
    %2549 = vmatpush2.msra.mxu0 %v2379
    %2550 = vmatprep.subr.mxu0 %v2376
    %2551 = vmatpush2.msra.mxu0 %v2375
    %2552 = vmatprep.subr.mxu0 %v2372
    %2553 = vmatpush2.msra.mxu0 %v2371
    %2554 = vmatprep.subr.mxu0 %v2368
    %2555 = vmatpush2.msra.mxu0 %v2367
    %2556 = vmatprep.subr.mxu0 %v2364
    %2557 = vmatpush2.msra.mxu0 %v2363
    %2558 = vmatprep.subr.mxu0 %v2360
    %2559 = vmatpush2.msra.mxu0 %v2359
    %2560 = vmatprep.subr.mxu0 %v2356
    %2561 = vmatpush2.msra.mxu0 %v2355
    %2562 = vmatprep.subr.mxu0 %v2352
    %2563 = vmatpush2.msra.mxu0 %v2351
    %2564 = vmatprep.subr.mxu0 %v2348
    %2565 = vmatpush2.msra.mxu0 %v2347
    %2566 = vmatprep.mubr.f32.mxu0 %v2041
    %2567 = vmatmul.mubr.f32.gmra.mxu0 %v2280
    %v2568 = vpop.f32.mrf.mxu0
    %v2569 = vadd.f32 %v2422, %v2568
    %v2570 = vpop.f32.mrf.mxu0
    %v2571 = vadd.f32 %v2426, %v2570
    %2572 = vdwg.mxu0
    %v2573 = vxor.u32 %v2498, 2147483648
    %v2574 = vxor.u32 %v2500, 2147483648
    %v2575 = vxor.u32 %v2569, 2147483648
    %v2576 = vmul.f32 %v2573, 1.442695
    %v2577 = vpow.pop %v2576
    %v2578 = vmul.f32 %v2574, 1.442695
    %v2579 = vpow.pop %v2578
    %v2580 = vmul.f32 %v2575, 1.442695
    %v2581 = vpow.pop %v2580
    %v2582 = vadd.f32 %v2577, 1.0
    %v2583 = vadd.f32 %v2579, 1.0
    %v2584 = vadd.f32 %v2581, 1.0
    %v2585 = vrcp.pop %v2582
    %v2586 = vmul.f32 1.0, %v2585
    %v2587 = vrcp.pop %v2583
    %v2588 = vmul.f32 1.0, %v2587
    %v2589 = vrcp.pop %v2584
    %v2590 = vmul.f32 1.0, %v2589
    %v2591 = vtanh.pop %v2571
    %v2592 = vmul.f32 %v2588, %v2039
    %v2593 = vmul.f32 %v2586, %v2591
    %v2594 = vadd.f32 %v2592, %v2593
    %v2595 = vtanh.pop %v2594
    %v2596 = vmul.f32 %v2590, %v2595
    %2597 = vst [vmem:[#allocation3 + $0x18] sm:$0xff] %v2596
    %v2598 = vld [vmem:[#allocation2 + $0x80] sm:$0xff]
    %v2599 = vld [vmem:[#allocation2 + $0x88] sm:$0xff]
    %v2600 = vld [vmem:[#allocation2 + $0x90] sm:$0xff]
    %v2601 = vld [vmem:[#allocation2 + $0x98] sm:$0xff]
    %v2602 = vld [vmem:[#allocation4] sm:$0xff]
    %v2603 = vld [vmem:[#allocation4 + $0x8] sm:$0xff]
    %v2604 = vld [vmem:[#allocation4 + $0x10] sm:$0xff]
    %v2605 = vld [vmem:[#allocation4 + $0x18] sm:$0xff]
    %v2606 = vld [vmem:[#allocation4 + $0x20] sm:$0xff]
    %v2607 = vld [vmem:[#allocation4 + $0x28] sm:$0xff]
    %v2608 = vld [vmem:[#allocation4 + $0x30] sm:$0xff]
    %v2609 = vld [vmem:[#allocation4 + $0x38] sm:$0xff]
    %v2610 = vld [vmem:[#allocation4 + $0x40] sm:$0xff]
    %v2611 = vld [vmem:[#allocation4 + $0x48] sm:$0xff]
    %v2612 = vld [vmem:[#allocation4 + $0x50] sm:$0xff]
    %v2613 = vld [vmem:[#allocation4 + $0x58] sm:$0xff]
    %v2614 = vld [vmem:[#allocation4 + $0x60] sm:$0xff]
    %v2615 = vld [vmem:[#allocation4 + $0x68] sm:$0xff]
    %v2616 = vld [vmem:[#allocation4 + $0x70] sm:$0xff]
    %v2617 = vld [vmem:[#allocation4 + $0x78] sm:$0xff]
    %v2618 = vld [vmem:[#allocation4 + $0x80] sm:$0xff]
    %v2619 = vld [vmem:[#allocation4 + $0x88] sm:$0xff]
    %v2620 = vld [vmem:[#allocation4 + $0x90] sm:$0xff]
    %v2621 = vld [vmem:[#allocation4 + $0x98] sm:$0xff]
    %v2622 = vld [vmem:[#allocation4 + $0xa0] sm:$0xff]
    %v2623 = vld [vmem:[#allocation4 + $0xa8] sm:$0xff]
    %v2624 = vld [vmem:[#allocation4 + $0xb0] sm:$0xff]
    %v2625 = vld [vmem:[#allocation4 + $0xb8] sm:$0xff]
    %v2626 = vld [vmem:[#allocation4 + $0xc0] sm:$0xff]
    %v2627 = vld [vmem:[#allocation4 + $0xc8] sm:$0xff]
    %v2628 = vld [vmem:[#allocation4 + $0xd0] sm:$0xff]
    %v2629 = vld [vmem:[#allocation4 + $0xd8] sm:$0xff]
    %v2630 = vld [vmem:[#allocation4 + $0xe0] sm:$0xff]
    %v2631 = vld [vmem:[#allocation4 + $0xe8] sm:$0xff]
    %v2632 = vld [vmem:[#allocation4 + $0xf0] sm:$0xff]
    %v2633 = vld [vmem:[#allocation4 + $0xf8] sm:$0xff]
    %v2634 = vld [vmem:[#allocation4 + $0x100] sm:$0xff]
    %v2635 = vld [vmem:[#allocation4 + $0x108] sm:$0xff]
    %v2636 = vld [vmem:[#allocation4 + $0x110] sm:$0xff]
    %v2637 = vld [vmem:[#allocation4 + $0x118] sm:$0xff]
    %v2638 = vld [vmem:[#allocation4 + $0x120] sm:$0xff]
    %v2639 = vld [vmem:[#allocation4 + $0x128] sm:$0xff]
    %v2640 = vld [vmem:[#allocation4 + $0x130] sm:$0xff]
    %v2641 = vld [vmem:[#allocation4 + $0x138] sm:$0xff]
    %v2642 = vld [vmem:[#allocation4 + $0x140] sm:$0xff]
    %v2643 = vld [vmem:[#allocation4 + $0x148] sm:$0xff]
    %v2644 = vld [vmem:[#allocation4 + $0x150] sm:$0xff]
    %v2645 = vld [vmem:[#allocation4 + $0x158] sm:$0xff]
    %v2646 = vld [vmem:[#allocation4 + $0x160] sm:$0xff]
    %v2647 = vld [vmem:[#allocation4 + $0x168] sm:$0xff]
    %v2648 = vld [vmem:[#allocation4 + $0x170] sm:$0xff]
    %v2649 = vld [vmem:[#allocation4 + $0x178] sm:$0xff]
    %v2650 = vld [vmem:[#allocation4 + $0x180] sm:$0xff]
    %v2651 = vld [vmem:[#allocation4 + $0x188] sm:$0xff]
    %v2652 = vld [vmem:[#allocation4 + $0x190] sm:$0xff]
    %v2653 = vld [vmem:[#allocation4 + $0x198] sm:$0xff]
    %v2654 = vld [vmem:[#allocation4 + $0x1a0] sm:$0xff]
    %v2655 = vld [vmem:[#allocation4 + $0x1a8] sm:$0xff]
    %v2656 = vld [vmem:[#allocation4 + $0x1b0] sm:$0xff]
    %v2657 = vld [vmem:[#allocation4 + $0x1b8] sm:$0xff]
    %v2658 = vld [vmem:[#allocation4 + $0x1c0] sm:$0xff]
    %v2659 = vld [vmem:[#allocation4 + $0x1c8] sm:$0xff]
    %v2660 = vld [vmem:[#allocation4 + $0x1d0] sm:$0xff]
    %v2661 = vld [vmem:[#allocation4 + $0x1d8] sm:$0xff]
    %v2662 = vld [vmem:[#allocation4 + $0x1e0] sm:$0xff]
    %v2663 = vld [vmem:[#allocation4 + $0x1e8] sm:$0xff]
    %v2664 = vld [vmem:[#allocation4 + $0x1f0] sm:$0xff]
    %v2665 = vld [vmem:[#allocation4 + $0x1f8] sm:$0xff]
    %2666 = vmatprep.subr.mxu0 %v2663
    %2667 = vmatpush1.msra.mxu0 %v2662
    %2668 = vmatprep.subr.mxu0 %v2659
    %2669 = vmatpush1.msra.mxu0 %v2658
    %2670 = vmatprep.subr.mxu0 %v2655
    %2671 = vmatpush1.msra.mxu0 %v2654
    %2672 = vmatprep.subr.mxu0 %v2651
    %2673 = vmatpush1.msra.mxu0 %v2650
    %2674 = vmatprep.subr.mxu0 %v2647
    %2675 = vmatpush1.msra.mxu0 %v2646
    %2676 = vmatprep.subr.mxu0 %v2643
    %2677 = vmatpush1.msra.mxu0 %v2642
    %2678 = vmatprep.subr.mxu0 %v2639
    %2679 = vmatpush1.msra.mxu0 %v2638
    %2680 = vmatprep.subr.mxu0 %v2635
    %2681 = vmatpush1.msra.mxu0 %v2634
    %2682 = vmatprep.subr.mxu0 %v2631
    %2683 = vmatpush1.msra.mxu0 %v2630
    %2684 = vmatprep.subr.mxu0 %v2627
    %2685 = vmatpush1.msra.mxu0 %v2626
    %2686 = vmatprep.subr.mxu0 %v2623
    %2687 = vmatpush1.msra.mxu0 %v2622
    %2688 = vmatprep.subr.mxu0 %v2619
    %2689 = vmatpush1.msra.mxu0 %v2618
    %2690 = vmatprep.subr.mxu0 %v2615
    %2691 = vmatpush1.msra.mxu0 %v2614
    %2692 = vmatprep.subr.mxu0 %v2611
    %2693 = vmatpush1.msra.mxu0 %v2610
    %2694 = vmatprep.subr.mxu0 %v2607
    %2695 = vmatpush1.msra.mxu0 %v2606
    %2696 = vmatprep.subr.mxu0 %v2603
    %2697 = vmatpush1.msra.mxu0 %v2602
    %2698 = vmatprep.subr.mxu0 0.0
    %2699 = vmatpush2.msra.mxu0 0.0
    %2700 = vmatprep.subr.mxu0 0.0
    %2701 = vmatpush2.msra.mxu0 0.0
    %2702 = vmatprep.subr.mxu0 0.0
    %2703 = vmatpush2.msra.mxu0 0.0
    %2704 = vmatprep.subr.mxu0 0.0
    %2705 = vmatpush2.msra.mxu0 0.0
    %2706 = vmatprep.subr.mxu0 0.0
    %2707 = vmatpush2.msra.mxu0 0.0
    %2708 = vmatprep.subr.mxu0 0.0
    %2709 = vmatpush2.msra.mxu0 0.0
    %2710 = vmatprep.subr.mxu0 0.0
    %2711 = vmatpush2.msra.mxu0 0.0
    %2712 = vmatprep.subr.mxu0 0.0
    %2713 = vmatpush2.msra.mxu0 0.0
    %2714 = vmatprep.subr.mxu0 0.0
    %2715 = vmatpush2.msra.mxu0 0.0
    %2716 = vmatprep.subr.mxu0 0.0
    %2717 = vmatpush2.msra.mxu0 0.0
    %2718 = vmatprep.subr.mxu0 0.0
    %2719 = vmatpush2.msra.mxu0 0.0
    %2720 = vmatprep.subr.mxu0 0.0
    %2721 = vmatpush2.msra.mxu0 0.0
    %2722 = vmatprep.subr.mxu0 0.0
    %2723 = vmatpush2.msra.mxu0 0.0
    %2724 = vmatprep.subr.mxu0 0.0
    %2725 = vmatpush2.msra.mxu0 0.0
    %2726 = vmatprep.subr.mxu0 0.0
    %2727 = vmatpush2.msra.mxu0 0.0
    %2728 = vmatprep.subr.mxu0 0.0
    %2729 = vmatpush2.msra.mxu0 0.0
    %2730 = vmatprep.mubr.f32.mxu0 0.0
    %2731 = vmatmul.mubr.f32.gmra.mxu0 %v2280
    %v2732 = vpop.f32.mrf.mxu0
    %v2733 = vadd.f32 0.0, %v2732
    %v2734 = vpop.f32.mrf.mxu0
    %v2735 = vadd.f32 0.0, %v2734
    %2736 = vdwg.mxu0
    %2737 = vmatprep.subr.mxu0 %v2665
    %2738 = vmatpush1.msra.mxu0 %v2664
    %2739 = vmatprep.subr.mxu0 %v2661
    %2740 = vmatpush1.msra.mxu0 %v2660
    %2741 = vmatprep.subr.mxu0 %v2657
    %2742 = vmatpush1.msra.mxu0 %v2656
    %2743 = vmatprep.subr.mxu0 %v2653
    %2744 = vmatpush1.msra.mxu0 %v2652
    %2745 = vmatprep.subr.mxu0 %v2649
    %2746 = vmatpush1.msra.mxu0 %v2648
    %2747 = vmatprep.subr.mxu0 %v2645
    %2748 = vmatpush1.msra.mxu0 %v2644
    %2749 = vmatprep.subr.mxu0 %v2641
    %2750 = vmatpush1.msra.mxu0 %v2640
    %2751 = vmatprep.subr.mxu0 %v2637
    %2752 = vmatpush1.msra.mxu0 %v2636
    %2753 = vmatprep.subr.mxu0 %v2633
    %2754 = vmatpush1.msra.mxu0 %v2632
    %2755 = vmatprep.subr.mxu0 %v2629
    %2756 = vmatpush1.msra.mxu0 %v2628
    %2757 = vmatprep.subr.mxu0 %v2625
    %2758 = vmatpush1.msra.mxu0 %v2624
    %2759 = vmatprep.subr.mxu0 %v2621
    %2760 = vmatpush1.msra.mxu0 %v2620
    %2761 = vmatprep.subr.mxu0 %v2617
    %2762 = vmatpush1.msra.mxu0 %v2616
    %2763 = vmatprep.subr.mxu0 %v2613
    %2764 = vmatpush1.msra.mxu0 %v2612
    %2765 = vmatprep.subr.mxu0 %v2609
    %2766 = vmatpush1.msra.mxu0 %v2608
    %2767 = vmatprep.subr.mxu0 %v2605
    %2768 = vmatpush1.msra.mxu0 %v2604
    %2769 = vmatprep.subr.mxu0 0.0
    %2770 = vmatpush2.msra.mxu0 0.0
    %2771 = vmatprep.subr.mxu0 0.0
    %2772 = vmatpush2.msra.mxu0 0.0
    %2773 = vmatprep.subr.mxu0 0.0
    %2774 = vmatpush2.msra.mxu0 0.0
    %2775 = vmatprep.subr.mxu0 0.0
    %2776 = vmatpush2.msra.mxu0 0.0
    %2777 = vmatprep.subr.mxu0 0.0
    %2778 = vmatpush2.msra.mxu0 0.0
    %2779 = vmatprep.subr.mxu0 0.0
    %2780 = vmatpush2.msra.mxu0 0.0
    %2781 = vmatprep.subr.mxu0 0.0
    %2782 = vmatpush2.msra.mxu0 0.0
    %2783 = vmatprep.subr.mxu0 0.0
    %2784 = vmatpush2.msra.mxu0 0.0
    %2785 = vmatprep.subr.mxu0 0.0
    %2786 = vmatpush2.msra.mxu0 0.0
    %2787 = vmatprep.subr.mxu0 0.0
    %2788 = vmatpush2.msra.mxu0 0.0
    %2789 = vmatprep.subr.mxu0 0.0
    %2790 = vmatpush2.msra.mxu0 0.0
    %2791 = vmatprep.subr.mxu0 0.0
    %2792 = vmatpush2.msra.mxu0 0.0
    %2793 = vmatprep.subr.mxu0 0.0
    %2794 = vmatpush2.msra.mxu0 0.0
    %2795 = vmatprep.subr.mxu0 0.0
    %2796 = vmatpush2.msra.mxu0 0.0
    %2797 = vmatprep.subr.mxu0 0.0
    %2798 = vmatpush2.msra.mxu0 0.0
    %2799 = vmatprep.subr.mxu0 0.0
    %2800 = vmatpush2.msra.mxu0 0.0
    %2801 = vmatprep.mubr.f32.mxu0 0.0
    %2802 = vmatmul.mubr.f32.gmra.mxu0 %v2280
    %v2803 = vpop.f32.mrf.mxu0
    %v2804 = vadd.f32 0.0, %v2803
    %v2805 = vpop.f32.mrf.mxu0
    %v2806 = vadd.f32 0.0, %v2805
    %2807 = vdwg.mxu0
    %v2808 = vadd.f32 %v2598, %v2733
    %v2809 = vadd.f32 %v2599, %v2735
    %v2810 = vadd.f32 %v2600, %v2804
    %v2811 = vadd.f32 %v2601, %v2806
    %v2812 = vxor.u32 %v2808, 2147483648
    %v2813 = vxor.u32 %v2809, 2147483648
    %v2814 = vxor.u32 %v2810, 2147483648
    %v2815 = vmul.f32 %v2812, 1.442695
    %v2816 = vpow.pop %v2815
    %v2817 = vmul.f32 %v2813, 1.442695
    %v2818 = vpow.pop %v2817
    %v2819 = vmul.f32 %v2814, 1.442695
    %v2820 = vpow.pop %v2819
    %v2821 = vadd.f32 %v2816, 1.0
    %v2822 = vadd.f32 %v2818, 1.0
    %v2823 = vadd.f32 %v2820, 1.0
    %v2824 = vrcp.pop %v2821
    %v2825 = vmul.f32 1.0, %v2824
    %v2826 = vrcp.pop %v2822
    %v2827 = vmul.f32 1.0, %v2826
    %v2828 = vrcp.pop %v2823
    %v2829 = vmul.f32 1.0, %v2828
    %v2830 = vtanh.pop %v2811
    %v2831 = vmul.f32 %v2827, %v2278
    %v2832 = vmul.f32 %v2825, %v2830
    %v2833 = vadd.f32 %v2831, %v2832
    %v2834 = vtanh.pop %v2833
    %v2835 = vmul.f32 %v2829, %v2834
    %v2836 = vld [vmem:[#allocation7] sm:$0xff]
    %v2837 = vld [vmem:[#allocation7 + $0x8] sm:$0xff]
    %v2838 = vld [vmem:[#allocation7 + $0x10] sm:$0xff]
    %v2839 = vld [vmem:[#allocation7 + $0x18] sm:$0xff]
    %v2840 = vld [vmem:[#allocation7 + $0x20] sm:$0xff]
    %v2841 = vld [vmem:[#allocation7 + $0x28] sm:$0xff]
    %v2842 = vld [vmem:[#allocation7 + $0x30] sm:$0xff]
    %v2843 = vld [vmem:[#allocation7 + $0x38] sm:$0xff]
    %v2844 = vld [vmem:[#allocation7 + $0x40] sm:$0xff]
    %v2845 = vld [vmem:[#allocation7 + $0x48] sm:$0xff]
    %v2846 = vld [vmem:[#allocation7 + $0x50] sm:$0xff]
    %v2847 = vld [vmem:[#allocation7 + $0x58] sm:$0xff]
    %v2848 = vld [vmem:[#allocation7 + $0x60] sm:$0xff]
    %v2849 = vld [vmem:[#allocation7 + $0x68] sm:$0xff]
    %v2850 = vld [vmem:[#allocation7 + $0x70] sm:$0xff]
    %v2851 = vld [vmem:[#allocation7 + $0x78] sm:$0xff]
    %v2852 = vld [vmem:[#allocation7 + $0x80] sm:$0xff]
    %v2853 = vld [vmem:[#allocation7 + $0x88] sm:$0xff]
    %v2854 = vld [vmem:[#allocation7 + $0x90] sm:$0xff]
    %v2855 = vld [vmem:[#allocation7 + $0x98] sm:$0xff]
    %v2856 = vld [vmem:[#allocation7 + $0xa0] sm:$0xff]
    %v2857 = vld [vmem:[#allocation7 + $0xa8] sm:$0xff]
    %v2858 = vld [vmem:[#allocation7 + $0xb0] sm:$0xff]
    %v2859 = vld [vmem:[#allocation7 + $0xb8] sm:$0xff]
    %v2860 = vld [vmem:[#allocation7 + $0xc0] sm:$0xff]
    %v2861 = vld [vmem:[#allocation7 + $0xc8] sm:$0xff]
    %v2862 = vld [vmem:[#allocation7 + $0xd0] sm:$0xff]
    %v2863 = vld [vmem:[#allocation7 + $0xd8] sm:$0xff]
    %v2864 = vld [vmem:[#allocation7 + $0xe0] sm:$0xff]
    %v2865 = vld [vmem:[#allocation7 + $0xe8] sm:$0xff]
    %v2866 = vld [vmem:[#allocation7 + $0xf0] sm:$0xff]
    %v2867 = vld [vmem:[#allocation7 + $0xf8] sm:$0xff]
    %v2868 = vld [vmem:[#allocation7 + $0x100] sm:$0xff]
    %v2869 = vld [vmem:[#allocation7 + $0x108] sm:$0xff]
    %v2870 = vld [vmem:[#allocation7 + $0x110] sm:$0xff]
    %v2871 = vld [vmem:[#allocation7 + $0x118] sm:$0xff]
    %v2872 = vld [vmem:[#allocation7 + $0x120] sm:$0xff]
    %v2873 = vld [vmem:[#allocation7 + $0x128] sm:$0xff]
    %v2874 = vld [vmem:[#allocation7 + $0x130] sm:$0xff]
    %v2875 = vld [vmem:[#allocation7 + $0x138] sm:$0xff]
    %v2876 = vld [vmem:[#allocation7 + $0x140] sm:$0xff]
    %v2877 = vld [vmem:[#allocation7 + $0x148] sm:$0xff]
    %v2878 = vld [vmem:[#allocation7 + $0x150] sm:$0xff]
    %v2879 = vld [vmem:[#allocation7 + $0x158] sm:$0xff]
    %v2880 = vld [vmem:[#allocation7 + $0x160] sm:$0xff]
    %v2881 = vld [vmem:[#allocation7 + $0x168] sm:$0xff]
    %v2882 = vld [vmem:[#allocation7 + $0x170] sm:$0xff]
    %v2883 = vld [vmem:[#allocation7 + $0x178] sm:$0xff]
    %v2884 = vld [vmem:[#allocation7 + $0x180] sm:$0xff]
    %v2885 = vld [vmem:[#allocation7 + $0x188] sm:$0xff]
    %v2886 = vld [vmem:[#allocation7 + $0x190] sm:$0xff]
    %v2887 = vld [vmem:[#allocation7 + $0x198] sm:$0xff]
    %v2888 = vld [vmem:[#allocation7 + $0x1a0] sm:$0xff]
    %v2889 = vld [vmem:[#allocation7 + $0x1a8] sm:$0xff]
    %v2890 = vld [vmem:[#allocation7 + $0x1b0] sm:$0xff]
    %v2891 = vld [vmem:[#allocation7 + $0x1b8] sm:$0xff]
    %v2892 = vld [vmem:[#allocation7 + $0x1c0] sm:$0xff]
    %v2893 = vld [vmem:[#allocation7 + $0x1c8] sm:$0xff]
    %v2894 = vld [vmem:[#allocation7 + $0x1d0] sm:$0xff]
    %v2895 = vld [vmem:[#allocation7 + $0x1d8] sm:$0xff]
    %v2896 = vld [vmem:[#allocation7 + $0x1e0] sm:$0xff]
    %v2897 = vld [vmem:[#allocation7 + $0x1e8] sm:$0xff]
    %v2898 = vld [vmem:[#allocation7 + $0x1f0] sm:$0xff]
    %v2899 = vld [vmem:[#allocation7 + $0x1f8] sm:$0xff]
    %v2900 = vld [vmem:[#allocation7 + $0x200] sm:$0xff]
    %v2901 = vld [vmem:[#allocation7 + $0x208] sm:$0xff]
    %v2902 = vld [vmem:[#allocation7 + $0x210] sm:$0xff]
    %v2903 = vld [vmem:[#allocation7 + $0x218] sm:$0xff]
    %v2904 = vld [vmem:[#allocation7 + $0x220] sm:$0xff]
    %v2905 = vld [vmem:[#allocation7 + $0x228] sm:$0xff]
    %v2906 = vld [vmem:[#allocation7 + $0x230] sm:$0xff]
    %v2907 = vld [vmem:[#allocation7 + $0x238] sm:$0xff]
    %v2908 = vld [vmem:[#allocation7 + $0x240] sm:$0xff]
    %v2909 = vld [vmem:[#allocation7 + $0x248] sm:$0xff]
    %v2910 = vld [vmem:[#allocation7 + $0x250] sm:$0xff]
    %v2911 = vld [vmem:[#allocation7 + $0x258] sm:$0xff]
    %v2912 = vld [vmem:[#allocation7 + $0x260] sm:$0xff]
    %v2913 = vld [vmem:[#allocation7 + $0x268] sm:$0xff]
    %v2914 = vld [vmem:[#allocation7 + $0x270] sm:$0xff]
    %v2915 = vld [vmem:[#allocation7 + $0x278] sm:$0xff]
    %v2916 = vld [vmem:[#allocation7 + $0x280] sm:$0xff]
    %v2917 = vld [vmem:[#allocation7 + $0x288] sm:$0xff]
    %v2918 = vld [vmem:[#allocation7 + $0x290] sm:$0xff]
    %v2919 = vld [vmem:[#allocation7 + $0x298] sm:$0xff]
    %v2920 = vld [vmem:[#allocation7 + $0x2a0] sm:$0xff]
    %v2921 = vld [vmem:[#allocation7 + $0x2a8] sm:$0xff]
    %v2922 = vld [vmem:[#allocation7 + $0x2b0] sm:$0xff]
    %v2923 = vld [vmem:[#allocation7 + $0x2b8] sm:$0xff]
    %v2924 = vld [vmem:[#allocation7 + $0x2c0] sm:$0xff]
    %v2925 = vld [vmem:[#allocation7 + $0x2c8] sm:$0xff]
    %v2926 = vld [vmem:[#allocation7 + $0x2d0] sm:$0xff]
    %v2927 = vld [vmem:[#allocation7 + $0x2d8] sm:$0xff]
    %v2928 = vld [vmem:[#allocation7 + $0x2e0] sm:$0xff]
    %v2929 = vld [vmem:[#allocation7 + $0x2e8] sm:$0xff]
    %v2930 = vld [vmem:[#allocation7 + $0x2f0] sm:$0xff]
    %v2931 = vld [vmem:[#allocation7 + $0x2f8] sm:$0xff]
    %v2932 = vld [vmem:[#allocation7 + $0x300] sm:$0xff]
    %v2933 = vld [vmem:[#allocation7 + $0x308] sm:$0xff]
    %v2934 = vld [vmem:[#allocation7 + $0x310] sm:$0xff]
    %v2935 = vld [vmem:[#allocation7 + $0x318] sm:$0xff]
    %v2936 = vld [vmem:[#allocation7 + $0x320] sm:$0xff]
    %v2937 = vld [vmem:[#allocation7 + $0x328] sm:$0xff]
    %v2938 = vld [vmem:[#allocation7 + $0x330] sm:$0xff]
    %v2939 = vld [vmem:[#allocation7 + $0x338] sm:$0xff]
    %v2940 = vld [vmem:[#allocation7 + $0x340] sm:$0xff]
    %v2941 = vld [vmem:[#allocation7 + $0x348] sm:$0xff]
    %v2942 = vld [vmem:[#allocation7 + $0x350] sm:$0xff]
    %v2943 = vld [vmem:[#allocation7 + $0x358] sm:$0xff]
    %v2944 = vld [vmem:[#allocation7 + $0x360] sm:$0xff]
    %v2945 = vld [vmem:[#allocation7 + $0x368] sm:$0xff]
    %v2946 = vld [vmem:[#allocation7 + $0x370] sm:$0xff]
    %v2947 = vld [vmem:[#allocation7 + $0x378] sm:$0xff]
    %v2948 = vld [vmem:[#allocation7 + $0x380] sm:$0xff]
    %v2949 = vld [vmem:[#allocation7 + $0x388] sm:$0xff]
    %v2950 = vld [vmem:[#allocation7 + $0x390] sm:$0xff]
    %v2951 = vld [vmem:[#allocation7 + $0x398] sm:$0xff]
    %v2952 = vld [vmem:[#allocation7 + $0x3a0] sm:$0xff]
    %v2953 = vld [vmem:[#allocation7 + $0x3a8] sm:$0xff]
    %v2954 = vld [vmem:[#allocation7 + $0x3b0] sm:$0xff]
    %v2955 = vld [vmem:[#allocation7 + $0x3b8] sm:$0xff]
    %v2956 = vld [vmem:[#allocation7 + $0x3c0] sm:$0xff]
    %v2957 = vld [vmem:[#allocation7 + $0x3c8] sm:$0xff]
    %v2958 = vld [vmem:[#allocation7 + $0x3d0] sm:$0xff]
    %v2959 = vld [vmem:[#allocation7 + $0x3d8] sm:$0xff]
    %v2960 = vld [vmem:[#allocation7 + $0x3e0] sm:$0xff]
    %v2961 = vld [vmem:[#allocation7 + $0x3e8] sm:$0xff]
    %v2962 = vld [vmem:[#allocation7 + $0x3f0] sm:$0xff]
    %v2963 = vld [vmem:[#allocation7 + $0x3f8] sm:$0xff]
    %v2964 = vld [vmem:[%s5] sm:$0xf]
    %v2966 = vlaneseq
    %v2967 = vshrl.u32 %v2966, 7
    %v2968 = vsub.s32 0, %v2967
    %v2969 = vrot.slane %v2964, %v2968
    %v2970 = vlaneseq
    %v2971 = vshrl.u32 %v2970, 7
    %v2972 = vsub.s32 1, %v2971
    %v2973 = vrot.slane %v2964, %v2972
    %v2974 = vlaneseq
    %v2975 = vshrl.u32 %v2974, 7
    %v2976 = vsub.s32 2, %v2975
    %v2977 = vrot.slane %v2964, %v2976
    %v2978 = vlaneseq
    %v2979 = vshrl.u32 %v2978, 7
    %v2980 = vsub.s32 3, %v2979
    %v2981 = vrot.slane %v2964, %v2980
    %2986 = vmatprep.subr.mxu0 %v2897
    %2987 = vmatpush1.msra.mxu0 %v2896
    %2988 = vmatprep.subr.mxu0 %v2893
    %2989 = vmatpush1.msra.mxu0 %v2892
    %2990 = vmatprep.subr.mxu0 %v2889
    %2991 = vmatpush1.msra.mxu0 %v2888
    %2992 = vmatprep.subr.mxu0 %v2885
    %2993 = vmatpush1.msra.mxu0 %v2884
    %2994 = vmatprep.subr.mxu0 %v2881
    %2995 = vmatpush1.msra.mxu0 %v2880
    %2996 = vmatprep.subr.mxu0 %v2877
    %2997 = vmatpush1.msra.mxu0 %v2876
    %2998 = vmatprep.subr.mxu0 %v2873
    %2999 = vmatpush1.msra.mxu0 %v2872
    %3000 = vmatprep.subr.mxu0 %v2869
    %3001 = vmatpush1.msra.mxu0 %v2868
    %3002 = vmatprep.subr.mxu0 %v2865
    %3003 = vmatpush1.msra.mxu0 %v2864
    %3004 = vmatprep.subr.mxu0 %v2861
    %3005 = vmatpush1.msra.mxu0 %v2860
    %3006 = vmatprep.subr.mxu0 %v2857
    %3007 = vmatpush1.msra.mxu0 %v2856
    %3008 = vmatprep.subr.mxu0 %v2853
    %3009 = vmatpush1.msra.mxu0 %v2852
    %3010 = vmatprep.subr.mxu0 %v2849
    %3011 = vmatpush1.msra.mxu0 %v2848
    %3012 = vmatprep.subr.mxu0 %v2845
    %3013 = vmatpush1.msra.mxu0 %v2844
    %3014 = vmatprep.subr.mxu0 %v2841
    %3015 = vmatpush1.msra.mxu0 %v2840
    %3016 = vmatprep.subr.mxu0 %v2837
    %3017 = vmatpush1.msra.mxu0 %v2836
    %3018 = vmatprep.subr.mxu0 %v2961
    %3019 = vmatpush2.msra.mxu0 %v2960
    %3020 = vmatprep.subr.mxu0 %v2957
    %3021 = vmatpush2.msra.mxu0 %v2956
    %3022 = vmatprep.subr.mxu0 %v2953
    %3023 = vmatpush2.msra.mxu0 %v2952
    %3024 = vmatprep.subr.mxu0 %v2949
    %3025 = vmatpush2.msra.mxu0 %v2948
    %3026 = vmatprep.subr.mxu0 %v2945
    %3027 = vmatpush2.msra.mxu0 %v2944
    %3028 = vmatprep.subr.mxu0 %v2941
    %3029 = vmatpush2.msra.mxu0 %v2940
    %3030 = vmatprep.subr.mxu0 %v2937
    %3031 = vmatpush2.msra.mxu0 %v2936
    %3032 = vmatprep.subr.mxu0 %v2933
    %3033 = vmatpush2.msra.mxu0 %v2932
    %3034 = vmatprep.subr.mxu0 %v2929
    %3035 = vmatpush2.msra.mxu0 %v2928
    %3036 = vmatprep.subr.mxu0 %v2925
    %3037 = vmatpush2.msra.mxu0 %v2924
    %3038 = vmatprep.subr.mxu0 %v2921
    %3039 = vmatpush2.msra.mxu0 %v2920
    %3040 = vmatprep.subr.mxu0 %v2917
    %3041 = vmatpush2.msra.mxu0 %v2916
    %3042 = vmatprep.subr.mxu0 %v2913
    %3043 = vmatpush2.msra.mxu0 %v2912
    %3044 = vmatprep.subr.mxu0 %v2909
    %3045 = vmatpush2.msra.mxu0 %v2908
    %3046 = vmatprep.subr.mxu0 %v2905
    %3047 = vmatpush2.msra.mxu0 %v2904
    %3048 = vmatprep.subr.mxu0 %v2901
    %3049 = vmatpush2.msra.mxu0 %v2900
    %3050 = vmatprep.mubr.f32.mxu0 %v2596
    %3051 = vmatmul.mubr.f32.gmra.mxu0 %v2835
    %v3052 = vpop.f32.mrf.mxu0
    %v3053 = vadd.f32 %v2969, %v3052
    %v3054 = vpop.f32.mrf.mxu0
    %v3055 = vadd.f32 %v2973, %v3054
    %3056 = vdwg.mxu0
    %3057 = vmatprep.subr.mxu0 %v2899
    %3058 = vmatpush1.msra.mxu0 %v2898
    %3059 = vmatprep.subr.mxu0 %v2895
    %3060 = vmatpush1.msra.mxu0 %v2894
    %3061 = vmatprep.subr.mxu0 %v2891
    %3062 = vmatpush1.msra.mxu0 %v2890
    %3063 = vmatprep.subr.mxu0 %v2887
    %3064 = vmatpush1.msra.mxu0 %v2886
    %3065 = vmatprep.subr.mxu0 %v2883
    %3066 = vmatpush1.msra.mxu0 %v2882
    %3067 = vmatprep.subr.mxu0 %v2879
    %3068 = vmatpush1.msra.mxu0 %v2878
    %3069 = vmatprep.subr.mxu0 %v2875
    %3070 = vmatpush1.msra.mxu0 %v2874
    %3071 = vmatprep.subr.mxu0 %v2871
    %3072 = vmatpush1.msra.mxu0 %v2870
    %3073 = vmatprep.subr.mxu0 %v2867
    %3074 = vmatpush1.msra.mxu0 %v2866
    %3075 = vmatprep.subr.mxu0 %v2863
    %3076 = vmatpush1.msra.mxu0 %v2862
    %3077 = vmatprep.subr.mxu0 %v2859
    %3078 = vmatpush1.msra.mxu0 %v2858
    %3079 = vmatprep.subr.mxu0 %v2855
    %3080 = vmatpush1.msra.mxu0 %v2854
    %3081 = vmatprep.subr.mxu0 %v2851
    %3082 = vmatpush1.msra.mxu0 %v2850
    %3083 = vmatprep.subr.mxu0 %v2847
    %3084 = vmatpush1.msra.mxu0 %v2846
    %3085 = vmatprep.subr.mxu0 %v2843
    %3086 = vmatpush1.msra.mxu0 %v2842
    %3087 = vmatprep.subr.mxu0 %v2839
    %3088 = vmatpush1.msra.mxu0 %v2838
    %3089 = vmatprep.subr.mxu0 %v2963
    %3090 = vmatpush2.msra.mxu0 %v2962
    %3091 = vmatprep.subr.mxu0 %v2959
    %3092 = vmatpush2.msra.mxu0 %v2958
    %3093 = vmatprep.subr.mxu0 %v2955
    %3094 = vmatpush2.msra.mxu0 %v2954
    %3095 = vmatprep.subr.mxu0 %v2951
    %3096 = vmatpush2.msra.mxu0 %v2950
    %3097 = vmatprep.subr.mxu0 %v2947
    %3098 = vmatpush2.msra.mxu0 %v2946
    %3099 = vmatprep.subr.mxu0 %v2943
    %3100 = vmatpush2.msra.mxu0 %v2942
    %3101 = vmatprep.subr.mxu0 %v2939
    %3102 = vmatpush2.msra.mxu0 %v2938
    %3103 = vmatprep.subr.mxu0 %v2935
    %3104 = vmatpush2.msra.mxu0 %v2934
    %3105 = vmatprep.subr.mxu0 %v2931
    %3106 = vmatpush2.msra.mxu0 %v2930
    %3107 = vmatprep.subr.mxu0 %v2927
    %3108 = vmatpush2.msra.mxu0 %v2926
    %3109 = vmatprep.subr.mxu0 %v2923
    %3110 = vmatpush2.msra.mxu0 %v2922
    %3111 = vmatprep.subr.mxu0 %v2919
    %3112 = vmatpush2.msra.mxu0 %v2918
    %3113 = vmatprep.subr.mxu0 %v2915
    %3114 = vmatpush2.msra.mxu0 %v2914
    %3115 = vmatprep.subr.mxu0 %v2911
    %3116 = vmatpush2.msra.mxu0 %v2910
    %3117 = vmatprep.subr.mxu0 %v2907
    %3118 = vmatpush2.msra.mxu0 %v2906
    %3119 = vmatprep.subr.mxu0 %v2903
    %3120 = vmatpush2.msra.mxu0 %v2902
    %3121 = vmatprep.mubr.f32.mxu0 %v2596
    %3122 = vmatmul.mubr.f32.gmra.mxu0 %v2835
    %v3123 = vpop.f32.mrf.mxu0
    %v3124 = vadd.f32 %v2977, %v3123
    %v3125 = vpop.f32.mrf.mxu0
    %v3126 = vadd.f32 %v2981, %v3125
    %3127 = vdwg.mxu0
    %v3128 = vxor.u32 %v3053, 2147483648
    %v3129 = vxor.u32 %v3055, 2147483648
    %v3130 = vxor.u32 %v3124, 2147483648
    %v3131 = vmul.f32 %v3128, 1.442695
    %v3132 = vpow.pop %v3131
    %v3133 = vmul.f32 %v3129, 1.442695
    %v3134 = vpow.pop %v3133
    %v3135 = vmul.f32 %v3130, 1.442695
    %v3136 = vpow.pop %v3135
    %v3137 = vadd.f32 %v3132, 1.0
    %v3138 = vadd.f32 %v3134, 1.0
    %v3139 = vadd.f32 %v3136, 1.0
    %v3140 = vrcp.pop %v3137
    %v3141 = vmul.f32 1.0, %v3140
    %v3142 = vrcp.pop %v3138
    %v3143 = vmul.f32 1.0, %v3142
    %v3144 = vrcp.pop %v3139
    %v3145 = vmul.f32 1.0, %v3144
    %v3146 = vtanh.pop %v3126
    %v3147 = vmul.f32 %v3143, %v2594
    %v3148 = vmul.f32 %v3141, %v3146
    %v3149 = vadd.f32 %v3147, %v3148
    %v3150 = vtanh.pop %v3149
    %v3151 = vmul.f32 %v3145, %v3150
    %3152 = vst [vmem:[#allocation3 + $0x20] sm:$0xff] %v3151
    %v3153 = vld [vmem:[#allocation2 + $0xa0] sm:$0xff]
    %v3154 = vld [vmem:[#allocation2 + $0xa8] sm:$0xff]
    %v3155 = vld [vmem:[#allocation2 + $0xb0] sm:$0xff]
    %v3156 = vld [vmem:[#allocation2 + $0xb8] sm:$0xff]
    %v3157 = vld [vmem:[#allocation4] sm:$0xff]
    %v3158 = vld [vmem:[#allocation4 + $0x8] sm:$0xff]
    %v3159 = vld [vmem:[#allocation4 + $0x10] sm:$0xff]
    %v3160 = vld [vmem:[#allocation4 + $0x18] sm:$0xff]
    %v3161 = vld [vmem:[#allocation4 + $0x20] sm:$0xff]
    %v3162 = vld [vmem:[#allocation4 + $0x28] sm:$0xff]
    %v3163 = vld [vmem:[#allocation4 + $0x30] sm:$0xff]
    %v3164 = vld [vmem:[#allocation4 + $0x38] sm:$0xff]
    %v3165 = vld [vmem:[#allocation4 + $0x40] sm:$0xff]
    %v3166 = vld [vmem:[#allocation4 + $0x48] sm:$0xff]
    %v3167 = vld [vmem:[#allocation4 + $0x50] sm:$0xff]
    %v3168 = vld [vmem:[#allocation4 + $0x58] sm:$0xff]
    %v3169 = vld [vmem:[#allocation4 + $0x60] sm:$0xff]
    %v3170 = vld [vmem:[#allocation4 + $0x68] sm:$0xff]
    %v3171 = vld [vmem:[#allocation4 + $0x70] sm:$0xff]
    %v3172 = vld [vmem:[#allocation4 + $0x78] sm:$0xff]
    %v3173 = vld [vmem:[#allocation4 + $0x80] sm:$0xff]
    %v3174 = vld [vmem:[#allocation4 + $0x88] sm:$0xff]
    %v3175 = vld [vmem:[#allocation4 + $0x90] sm:$0xff]
    %v3176 = vld [vmem:[#allocation4 + $0x98] sm:$0xff]
    %v3177 = vld [vmem:[#allocation4 + $0xa0] sm:$0xff]
    %v3178 = vld [vmem:[#allocation4 + $0xa8] sm:$0xff]
    %v3179 = vld [vmem:[#allocation4 + $0xb0] sm:$0xff]
    %v3180 = vld [vmem:[#allocation4 + $0xb8] sm:$0xff]
    %v3181 = vld [vmem:[#allocation4 + $0xc0] sm:$0xff]
    %v3182 = vld [vmem:[#allocation4 + $0xc8] sm:$0xff]
    %v3183 = vld [vmem:[#allocation4 + $0xd0] sm:$0xff]
    %v3184 = vld [vmem:[#allocation4 + $0xd8] sm:$0xff]
    %v3185 = vld [vmem:[#allocation4 + $0xe0] sm:$0xff]
    %v3186 = vld [vmem:[#allocation4 + $0xe8] sm:$0xff]
    %v3187 = vld [vmem:[#allocation4 + $0xf0] sm:$0xff]
    %v3188 = vld [vmem:[#allocation4 + $0xf8] sm:$0xff]
    %v3189 = vld [vmem:[#allocation4 + $0x100] sm:$0xff]
    %v3190 = vld [vmem:[#allocation4 + $0x108] sm:$0xff]
    %v3191 = vld [vmem:[#allocation4 + $0x110] sm:$0xff]
    %v3192 = vld [vmem:[#allocation4 + $0x118] sm:$0xff]
    %v3193 = vld [vmem:[#allocation4 + $0x120] sm:$0xff]
    %v3194 = vld [vmem:[#allocation4 + $0x128] sm:$0xff]
    %v3195 = vld [vmem:[#allocation4 + $0x130] sm:$0xff]
    %v3196 = vld [vmem:[#allocation4 + $0x138] sm:$0xff]
    %v3197 = vld [vmem:[#allocation4 + $0x140] sm:$0xff]
    %v3198 = vld [vmem:[#allocation4 + $0x148] sm:$0xff]
    %v3199 = vld [vmem:[#allocation4 + $0x150] sm:$0xff]
    %v3200 = vld [vmem:[#allocation4 + $0x158] sm:$0xff]
    %v3201 = vld [vmem:[#allocation4 + $0x160] sm:$0xff]
    %v3202 = vld [vmem:[#allocation4 + $0x168] sm:$0xff]
    %v3203 = vld [vmem:[#allocation4 + $0x170] sm:$0xff]
    %v3204 = vld [vmem:[#allocation4 + $0x178] sm:$0xff]
    %v3205 = vld [vmem:[#allocation4 + $0x180] sm:$0xff]
    %v3206 = vld [vmem:[#allocation4 + $0x188] sm:$0xff]
    %v3207 = vld [vmem:[#allocation4 + $0x190] sm:$0xff]
    %v3208 = vld [vmem:[#allocation4 + $0x198] sm:$0xff]
    %v3209 = vld [vmem:[#allocation4 + $0x1a0] sm:$0xff]
    %v3210 = vld [vmem:[#allocation4 + $0x1a8] sm:$0xff]
    %v3211 = vld [vmem:[#allocation4 + $0x1b0] sm:$0xff]
    %v3212 = vld [vmem:[#allocation4 + $0x1b8] sm:$0xff]
    %v3213 = vld [vmem:[#allocation4 + $0x1c0] sm:$0xff]
    %v3214 = vld [vmem:[#allocation4 + $0x1c8] sm:$0xff]
    %v3215 = vld [vmem:[#allocation4 + $0x1d0] sm:$0xff]
    %v3216 = vld [vmem:[#allocation4 + $0x1d8] sm:$0xff]
    %v3217 = vld [vmem:[#allocation4 + $0x1e0] sm:$0xff]
    %v3218 = vld [vmem:[#allocation4 + $0x1e8] sm:$0xff]
    %v3219 = vld [vmem:[#allocation4 + $0x1f0] sm:$0xff]
    %v3220 = vld [vmem:[#allocation4 + $0x1f8] sm:$0xff]
    %3221 = vmatprep.subr.mxu0 %v3218
    %3222 = vmatpush1.msra.mxu0 %v3217
    %3223 = vmatprep.subr.mxu0 %v3214
    %3224 = vmatpush1.msra.mxu0 %v3213
    %3225 = vmatprep.subr.mxu0 %v3210
    %3226 = vmatpush1.msra.mxu0 %v3209
    %3227 = vmatprep.subr.mxu0 %v3206
    %3228 = vmatpush1.msra.mxu0 %v3205
    %3229 = vmatprep.subr.mxu0 %v3202
    %3230 = vmatpush1.msra.mxu0 %v3201
    %3231 = vmatprep.subr.mxu0 %v3198
    %3232 = vmatpush1.msra.mxu0 %v3197
    %3233 = vmatprep.subr.mxu0 %v3194
    %3234 = vmatpush1.msra.mxu0 %v3193
    %3235 = vmatprep.subr.mxu0 %v3190
    %3236 = vmatpush1.msra.mxu0 %v3189
    %3237 = vmatprep.subr.mxu0 %v3186
    %3238 = vmatpush1.msra.mxu0 %v3185
    %3239 = vmatprep.subr.mxu0 %v3182
    %3240 = vmatpush1.msra.mxu0 %v3181
    %3241 = vmatprep.subr.mxu0 %v3178
    %3242 = vmatpush1.msra.mxu0 %v3177
    %3243 = vmatprep.subr.mxu0 %v3174
    %3244 = vmatpush1.msra.mxu0 %v3173
    %3245 = vmatprep.subr.mxu0 %v3170
    %3246 = vmatpush1.msra.mxu0 %v3169
    %3247 = vmatprep.subr.mxu0 %v3166
    %3248 = vmatpush1.msra.mxu0 %v3165
    %3249 = vmatprep.subr.mxu0 %v3162
    %3250 = vmatpush1.msra.mxu0 %v3161
    %3251 = vmatprep.subr.mxu0 %v3158
    %3252 = vmatpush1.msra.mxu0 %v3157
    %3253 = vmatprep.subr.mxu0 0.0
    %3254 = vmatpush2.msra.mxu0 0.0
    %3255 = vmatprep.subr.mxu0 0.0
    %3256 = vmatpush2.msra.mxu0 0.0
    %3257 = vmatprep.subr.mxu0 0.0
    %3258 = vmatpush2.msra.mxu0 0.0
    %3259 = vmatprep.subr.mxu0 0.0
    %3260 = vmatpush2.msra.mxu0 0.0
    %3261 = vmatprep.subr.mxu0 0.0
    %3262 = vmatpush2.msra.mxu0 0.0
    %3263 = vmatprep.subr.mxu0 0.0
    %3264 = vmatpush2.msra.mxu0 0.0
    %3265 = vmatprep.subr.mxu0 0.0
    %3266 = vmatpush2.msra.mxu0 0.0
    %3267 = vmatprep.subr.mxu0 0.0
    %3268 = vmatpush2.msra.mxu0 0.0
    %3269 = vmatprep.subr.mxu0 0.0
    %3270 = vmatpush2.msra.mxu0 0.0
    %3271 = vmatprep.subr.mxu0 0.0
    %3272 = vmatpush2.msra.mxu0 0.0
    %3273 = vmatprep.subr.mxu0 0.0
    %3274 = vmatpush2.msra.mxu0 0.0
    %3275 = vmatprep.subr.mxu0 0.0
    %3276 = vmatpush2.msra.mxu0 0.0
    %3277 = vmatprep.subr.mxu0 0.0
    %3278 = vmatpush2.msra.mxu0 0.0
    %3279 = vmatprep.subr.mxu0 0.0
    %3280 = vmatpush2.msra.mxu0 0.0
    %3281 = vmatprep.subr.mxu0 0.0
    %3282 = vmatpush2.msra.mxu0 0.0
    %3283 = vmatprep.subr.mxu0 0.0
    %3284 = vmatpush2.msra.mxu0 0.0
    %3285 = vmatprep.mubr.f32.mxu0 0.0
    %3286 = vmatmul.mubr.f32.gmra.mxu0 %v2835
    %v3287 = vpop.f32.mrf.mxu0
    %v3288 = vadd.f32 0.0, %v3287
    %v3289 = vpop.f32.mrf.mxu0
    %v3290 = vadd.f32 0.0, %v3289
    %3291 = vdwg.mxu0
    %3292 = vmatprep.subr.mxu0 %v3220
    %3293 = vmatpush1.msra.mxu0 %v3219
    %3294 = vmatprep.subr.mxu0 %v3216
    %3295 = vmatpush1.msra.mxu0 %v3215
    %3296 = vmatprep.subr.mxu0 %v3212
    %3297 = vmatpush1.msra.mxu0 %v3211
    %3298 = vmatprep.subr.mxu0 %v3208
    %3299 = vmatpush1.msra.mxu0 %v3207
    %3300 = vmatprep.subr.mxu0 %v3204
    %3301 = vmatpush1.msra.mxu0 %v3203
    %3302 = vmatprep.subr.mxu0 %v3200
    %3303 = vmatpush1.msra.mxu0 %v3199
    %3304 = vmatprep.subr.mxu0 %v3196
    %3305 = vmatpush1.msra.mxu0 %v3195
    %3306 = vmatprep.subr.mxu0 %v3192
    %3307 = vmatpush1.msra.mxu0 %v3191
    %3308 = vmatprep.subr.mxu0 %v3188
    %3309 = vmatpush1.msra.mxu0 %v3187
    %3310 = vmatprep.subr.mxu0 %v3184
    %3311 = vmatpush1.msra.mxu0 %v3183
    %3312 = vmatprep.subr.mxu0 %v3180
    %3313 = vmatpush1.msra.mxu0 %v3179
    %3314 = vmatprep.subr.mxu0 %v3176
    %3315 = vmatpush1.msra.mxu0 %v3175
    %3316 = vmatprep.subr.mxu0 %v3172
    %3317 = vmatpush1.msra.mxu0 %v3171
    %3318 = vmatprep.subr.mxu0 %v3168
    %3319 = vmatpush1.msra.mxu0 %v3167
    %3320 = vmatprep.subr.mxu0 %v3164
    %3321 = vmatpush1.msra.mxu0 %v3163
    %3322 = vmatprep.subr.mxu0 %v3160
    %3323 = vmatpush1.msra.mxu0 %v3159
    %3324 = vmatprep.subr.mxu0 0.0
    %3325 = vmatpush2.msra.mxu0 0.0
    %3326 = vmatprep.subr.mxu0 0.0
    %3327 = vmatpush2.msra.mxu0 0.0
    %3328 = vmatprep.subr.mxu0 0.0
    %3329 = vmatpush2.msra.mxu0 0.0
    %3330 = vmatprep.subr.mxu0 0.0
    %3331 = vmatpush2.msra.mxu0 0.0
    %3332 = vmatprep.subr.mxu0 0.0
    %3333 = vmatpush2.msra.mxu0 0.0
    %3334 = vmatprep.subr.mxu0 0.0
    %3335 = vmatpush2.msra.mxu0 0.0
    %3336 = vmatprep.subr.mxu0 0.0
    %3337 = vmatpush2.msra.mxu0 0.0
    %3338 = vmatprep.subr.mxu0 0.0
    %3339 = vmatpush2.msra.mxu0 0.0
    %3340 = vmatprep.subr.mxu0 0.0
    %3341 = vmatpush2.msra.mxu0 0.0
    %3342 = vmatprep.subr.mxu0 0.0
    %3343 = vmatpush2.msra.mxu0 0.0
    %3344 = vmatprep.subr.mxu0 0.0
    %3345 = vmatpush2.msra.mxu0 0.0
    %3346 = vmatprep.subr.mxu0 0.0
    %3347 = vmatpush2.msra.mxu0 0.0
    %3348 = vmatprep.subr.mxu0 0.0
    %3349 = vmatpush2.msra.mxu0 0.0
    %3350 = vmatprep.subr.mxu0 0.0
    %3351 = vmatpush2.msra.mxu0 0.0
    %3352 = vmatprep.subr.mxu0 0.0
    %3353 = vmatpush2.msra.mxu0 0.0
    %3354 = vmatprep.subr.mxu0 0.0
    %3355 = vmatpush2.msra.mxu0 0.0
    %3356 = vmatprep.mubr.f32.mxu0 0.0
    %3357 = vmatmul.mubr.f32.gmra.mxu0 %v2835
    %v3358 = vpop.f32.mrf.mxu0
    %v3359 = vadd.f32 0.0, %v3358
    %v3360 = vpop.f32.mrf.mxu0
    %v3361 = vadd.f32 0.0, %v3360
    %3362 = vdwg.mxu0
    %v3363 = vadd.f32 %v3153, %v3288
    %v3364 = vadd.f32 %v3154, %v3290
    %v3365 = vadd.f32 %v3155, %v3359
    %v3366 = vadd.f32 %v3156, %v3361
    %v3367 = vxor.u32 %v3363, 2147483648
    %v3368 = vxor.u32 %v3364, 2147483648
    %v3369 = vxor.u32 %v3365, 2147483648
    %v3370 = vmul.f32 %v3367, 1.442695
    %v3371 = vpow.pop %v3370
    %v3372 = vmul.f32 %v3368, 1.442695
    %v3373 = vpow.pop %v3372
    %v3374 = vmul.f32 %v3369, 1.442695
    %v3375 = vpow.pop %v3374
    %v3376 = vadd.f32 %v3371, 1.0
    %v3377 = vadd.f32 %v3373, 1.0
    %v3378 = vadd.f32 %v3375, 1.0
    %v3379 = vrcp.pop %v3376
    %v3380 = vmul.f32 1.0, %v3379
    %v3381 = vrcp.pop %v3377
    %v3382 = vmul.f32 1.0, %v3381
    %v3383 = vrcp.pop %v3378
    %v3384 = vmul.f32 1.0, %v3383
    %v3385 = vtanh.pop %v3366
    %v3386 = vmul.f32 %v3382, %v2833
    %v3387 = vmul.f32 %v3380, %v3385
    %v3388 = vadd.f32 %v3386, %v3387
    %v3389 = vtanh.pop %v3388
    %v3390 = vmul.f32 %v3384, %v3389
    %v3391 = vld [vmem:[#allocation7] sm:$0xff]
    %v3392 = vld [vmem:[#allocation7 + $0x8] sm:$0xff]
    %v3393 = vld [vmem:[#allocation7 + $0x10] sm:$0xff]
    %v3394 = vld [vmem:[#allocation7 + $0x18] sm:$0xff]
    %v3395 = vld [vmem:[#allocation7 + $0x20] sm:$0xff]
    %v3396 = vld [vmem:[#allocation7 + $0x28] sm:$0xff]
    %v3397 = vld [vmem:[#allocation7 + $0x30] sm:$0xff]
    %v3398 = vld [vmem:[#allocation7 + $0x38] sm:$0xff]
    %v3399 = vld [vmem:[#allocation7 + $0x40] sm:$0xff]
    %v3400 = vld [vmem:[#allocation7 + $0x48] sm:$0xff]
    %v3401 = vld [vmem:[#allocation7 + $0x50] sm:$0xff]
    %v3402 = vld [vmem:[#allocation7 + $0x58] sm:$0xff]
    %v3403 = vld [vmem:[#allocation7 + $0x60] sm:$0xff]
    %v3404 = vld [vmem:[#allocation7 + $0x68] sm:$0xff]
    %v3405 = vld [vmem:[#allocation7 + $0x70] sm:$0xff]
    %v3406 = vld [vmem:[#allocation7 + $0x78] sm:$0xff]
    %v3407 = vld [vmem:[#allocation7 + $0x80] sm:$0xff]
    %v3408 = vld [vmem:[#allocation7 + $0x88] sm:$0xff]
    %v3409 = vld [vmem:[#allocation7 + $0x90] sm:$0xff]
    %v3410 = vld [vmem:[#allocation7 + $0x98] sm:$0xff]
    %v3411 = vld [vmem:[#allocation7 + $0xa0] sm:$0xff]
    %v3412 = vld [vmem:[#allocation7 + $0xa8] sm:$0xff]
    %v3413 = vld [vmem:[#allocation7 + $0xb0] sm:$0xff]
    %v3414 = vld [vmem:[#allocation7 + $0xb8] sm:$0xff]
    %v3415 = vld [vmem:[#allocation7 + $0xc0] sm:$0xff]
    %v3416 = vld [vmem:[#allocation7 + $0xc8] sm:$0xff]
    %v3417 = vld [vmem:[#allocation7 + $0xd0] sm:$0xff]
    %v3418 = vld [vmem:[#allocation7 + $0xd8] sm:$0xff]
    %v3419 = vld [vmem:[#allocation7 + $0xe0] sm:$0xff]
    %v3420 = vld [vmem:[#allocation7 + $0xe8] sm:$0xff]
    %v3421 = vld [vmem:[#allocation7 + $0xf0] sm:$0xff]
    %v3422 = vld [vmem:[#allocation7 + $0xf8] sm:$0xff]
    %v3423 = vld [vmem:[#allocation7 + $0x100] sm:$0xff]
    %v3424 = vld [vmem:[#allocation7 + $0x108] sm:$0xff]
    %v3425 = vld [vmem:[#allocation7 + $0x110] sm:$0xff]
    %v3426 = vld [vmem:[#allocation7 + $0x118] sm:$0xff]
    %v3427 = vld [vmem:[#allocation7 + $0x120] sm:$0xff]
    %v3428 = vld [vmem:[#allocation7 + $0x128] sm:$0xff]
    %v3429 = vld [vmem:[#allocation7 + $0x130] sm:$0xff]
    %v3430 = vld [vmem:[#allocation7 + $0x138] sm:$0xff]
    %v3431 = vld [vmem:[#allocation7 + $0x140] sm:$0xff]
    %v3432 = vld [vmem:[#allocation7 + $0x148] sm:$0xff]
    %v3433 = vld [vmem:[#allocation7 + $0x150] sm:$0xff]
    %v3434 = vld [vmem:[#allocation7 + $0x158] sm:$0xff]
    %v3435 = vld [vmem:[#allocation7 + $0x160] sm:$0xff]
    %v3436 = vld [vmem:[#allocation7 + $0x168] sm:$0xff]
    %v3437 = vld [vmem:[#allocation7 + $0x170] sm:$0xff]
    %v3438 = vld [vmem:[#allocation7 + $0x178] sm:$0xff]
    %v3439 = vld [vmem:[#allocation7 + $0x180] sm:$0xff]
    %v3440 = vld [vmem:[#allocation7 + $0x188] sm:$0xff]
    %v3441 = vld [vmem:[#allocation7 + $0x190] sm:$0xff]
    %v3442 = vld [vmem:[#allocation7 + $0x198] sm:$0xff]
    %v3443 = vld [vmem:[#allocation7 + $0x1a0] sm:$0xff]
    %v3444 = vld [vmem:[#allocation7 + $0x1a8] sm:$0xff]
    %v3445 = vld [vmem:[#allocation7 + $0x1b0] sm:$0xff]
    %v3446 = vld [vmem:[#allocation7 + $0x1b8] sm:$0xff]
    %v3447 = vld [vmem:[#allocation7 + $0x1c0] sm:$0xff]
    %v3448 = vld [vmem:[#allocation7 + $0x1c8] sm:$0xff]
    %v3449 = vld [vmem:[#allocation7 + $0x1d0] sm:$0xff]
    %v3450 = vld [vmem:[#allocation7 + $0x1d8] sm:$0xff]
    %v3451 = vld [vmem:[#allocation7 + $0x1e0] sm:$0xff]
    %v3452 = vld [vmem:[#allocation7 + $0x1e8] sm:$0xff]
    %v3453 = vld [vmem:[#allocation7 + $0x1f0] sm:$0xff]
    %v3454 = vld [vmem:[#allocation7 + $0x1f8] sm:$0xff]
    %v3455 = vld [vmem:[#allocation7 + $0x200] sm:$0xff]
    %v3456 = vld [vmem:[#allocation7 + $0x208] sm:$0xff]
    %v3457 = vld [vmem:[#allocation7 + $0x210] sm:$0xff]
    %v3458 = vld [vmem:[#allocation7 + $0x218] sm:$0xff]
    %v3459 = vld [vmem:[#allocation7 + $0x220] sm:$0xff]
    %v3460 = vld [vmem:[#allocation7 + $0x228] sm:$0xff]
    %v3461 = vld [vmem:[#allocation7 + $0x230] sm:$0xff]
    %v3462 = vld [vmem:[#allocation7 + $0x238] sm:$0xff]
    %v3463 = vld [vmem:[#allocation7 + $0x240] sm:$0xff]
    %v3464 = vld [vmem:[#allocation7 + $0x248] sm:$0xff]
    %v3465 = vld [vmem:[#allocation7 + $0x250] sm:$0xff]
    %v3466 = vld [vmem:[#allocation7 + $0x258] sm:$0xff]
    %v3467 = vld [vmem:[#allocation7 + $0x260] sm:$0xff]
    %v3468 = vld [vmem:[#allocation7 + $0x268] sm:$0xff]
    %v3469 = vld [vmem:[#allocation7 + $0x270] sm:$0xff]
    %v3470 = vld [vmem:[#allocation7 + $0x278] sm:$0xff]
    %v3471 = vld [vmem:[#allocation7 + $0x280] sm:$0xff]
    %v3472 = vld [vmem:[#allocation7 + $0x288] sm:$0xff]
    %v3473 = vld [vmem:[#allocation7 + $0x290] sm:$0xff]
    %v3474 = vld [vmem:[#allocation7 + $0x298] sm:$0xff]
    %v3475 = vld [vmem:[#allocation7 + $0x2a0] sm:$0xff]
    %v3476 = vld [vmem:[#allocation7 + $0x2a8] sm:$0xff]
    %v3477 = vld [vmem:[#allocation7 + $0x2b0] sm:$0xff]
    %v3478 = vld [vmem:[#allocation7 + $0x2b8] sm:$0xff]
    %v3479 = vld [vmem:[#allocation7 + $0x2c0] sm:$0xff]
    %v3480 = vld [vmem:[#allocation7 + $0x2c8] sm:$0xff]
    %v3481 = vld [vmem:[#allocation7 + $0x2d0] sm:$0xff]
    %v3482 = vld [vmem:[#allocation7 + $0x2d8] sm:$0xff]
    %v3483 = vld [vmem:[#allocation7 + $0x2e0] sm:$0xff]
    %v3484 = vld [vmem:[#allocation7 + $0x2e8] sm:$0xff]
    %v3485 = vld [vmem:[#allocation7 + $0x2f0] sm:$0xff]
    %v3486 = vld [vmem:[#allocation7 + $0x2f8] sm:$0xff]
    %v3487 = vld [vmem:[#allocation7 + $0x300] sm:$0xff]
    %v3488 = vld [vmem:[#allocation7 + $0x308] sm:$0xff]
    %v3489 = vld [vmem:[#allocation7 + $0x310] sm:$0xff]
    %v3490 = vld [vmem:[#allocation7 + $0x318] sm:$0xff]
    %v3491 = vld [vmem:[#allocation7 + $0x320] sm:$0xff]
    %v3492 = vld [vmem:[#allocation7 + $0x328] sm:$0xff]
    %v3493 = vld [vmem:[#allocation7 + $0x330] sm:$0xff]
    %v3494 = vld [vmem:[#allocation7 + $0x338] sm:$0xff]
    %v3495 = vld [vmem:[#allocation7 + $0x340] sm:$0xff]
    %v3496 = vld [vmem:[#allocation7 + $0x348] sm:$0xff]
    %v3497 = vld [vmem:[#allocation7 + $0x350] sm:$0xff]
    %v3498 = vld [vmem:[#allocation7 + $0x358] sm:$0xff]
    %v3499 = vld [vmem:[#allocation7 + $0x360] sm:$0xff]
    %v3500 = vld [vmem:[#allocation7 + $0x368] sm:$0xff]
    %v3501 = vld [vmem:[#allocation7 + $0x370] sm:$0xff]
    %v3502 = vld [vmem:[#allocation7 + $0x378] sm:$0xff]
    %v3503 = vld [vmem:[#allocation7 + $0x380] sm:$0xff]
    %v3504 = vld [vmem:[#allocation7 + $0x388] sm:$0xff]
    %v3505 = vld [vmem:[#allocation7 + $0x390] sm:$0xff]
    %v3506 = vld [vmem:[#allocation7 + $0x398] sm:$0xff]
    %v3507 = vld [vmem:[#allocation7 + $0x3a0] sm:$0xff]
    %v3508 = vld [vmem:[#allocation7 + $0x3a8] sm:$0xff]
    %v3509 = vld [vmem:[#allocation7 + $0x3b0] sm:$0xff]
    %v3510 = vld [vmem:[#allocation7 + $0x3b8] sm:$0xff]
    %v3511 = vld [vmem:[#allocation7 + $0x3c0] sm:$0xff]
    %v3512 = vld [vmem:[#allocation7 + $0x3c8] sm:$0xff]
    %v3513 = vld [vmem:[#allocation7 + $0x3d0] sm:$0xff]
    %v3514 = vld [vmem:[#allocation7 + $0x3d8] sm:$0xff]
    %v3515 = vld [vmem:[#allocation7 + $0x3e0] sm:$0xff]
    %v3516 = vld [vmem:[#allocation7 + $0x3e8] sm:$0xff]
    %v3517 = vld [vmem:[#allocation7 + $0x3f0] sm:$0xff]
    %v3518 = vld [vmem:[#allocation7 + $0x3f8] sm:$0xff]
    %v3519 = vld [vmem:[%s5] sm:$0xf]
    %v3521 = vlaneseq
    %v3522 = vshrl.u32 %v3521, 7
    %v3523 = vsub.s32 0, %v3522
    %v3524 = vrot.slane %v3519, %v3523
    %v3525 = vlaneseq
    %v3526 = vshrl.u32 %v3525, 7
    %v3527 = vsub.s32 1, %v3526
    %v3528 = vrot.slane %v3519, %v3527
    %v3529 = vlaneseq
    %v3530 = vshrl.u32 %v3529, 7
    %v3531 = vsub.s32 2, %v3530
    %v3532 = vrot.slane %v3519, %v3531
    %v3533 = vlaneseq
    %v3534 = vshrl.u32 %v3533, 7
    %v3535 = vsub.s32 3, %v3534
    %v3536 = vrot.slane %v3519, %v3535
    %3541 = vmatprep.subr.mxu0 %v3452
    %3542 = vmatpush1.msra.mxu0 %v3451
    %3543 = vmatprep.subr.mxu0 %v3448
    %3544 = vmatpush1.msra.mxu0 %v3447
    %3545 = vmatprep.subr.mxu0 %v3444
    %3546 = vmatpush1.msra.mxu0 %v3443
    %3547 = vmatprep.subr.mxu0 %v3440
    %3548 = vmatpush1.msra.mxu0 %v3439
    %3549 = vmatprep.subr.mxu0 %v3436
    %3550 = vmatpush1.msra.mxu0 %v3435
    %3551 = vmatprep.subr.mxu0 %v3432
    %3552 = vmatpush1.msra.mxu0 %v3431
    %3553 = vmatprep.subr.mxu0 %v3428
    %3554 = vmatpush1.msra.mxu0 %v3427
    %3555 = vmatprep.subr.mxu0 %v3424
    %3556 = vmatpush1.msra.mxu0 %v3423
    %3557 = vmatprep.subr.mxu0 %v3420
    %3558 = vmatpush1.msra.mxu0 %v3419
    %3559 = vmatprep.subr.mxu0 %v3416
    %3560 = vmatpush1.msra.mxu0 %v3415
    %3561 = vmatprep.subr.mxu0 %v3412
    %3562 = vmatpush1.msra.mxu0 %v3411
    %3563 = vmatprep.subr.mxu0 %v3408
    %3564 = vmatpush1.msra.mxu0 %v3407
    %3565 = vmatprep.subr.mxu0 %v3404
    %3566 = vmatpush1.msra.mxu0 %v3403
    %3567 = vmatprep.subr.mxu0 %v3400
    %3568 = vmatpush1.msra.mxu0 %v3399
    %3569 = vmatprep.subr.mxu0 %v3396
    %3570 = vmatpush1.msra.mxu0 %v3395
    %3571 = vmatprep.subr.mxu0 %v3392
    %3572 = vmatpush1.msra.mxu0 %v3391
    %3573 = vmatprep.subr.mxu0 %v3516
    %3574 = vmatpush2.msra.mxu0 %v3515
    %3575 = vmatprep.subr.mxu0 %v3512
    %3576 = vmatpush2.msra.mxu0 %v3511
    %3577 = vmatprep.subr.mxu0 %v3508
    %3578 = vmatpush2.msra.mxu0 %v3507
    %3579 = vmatprep.subr.mxu0 %v3504
    %3580 = vmatpush2.msra.mxu0 %v3503
    %3581 = vmatprep.subr.mxu0 %v3500
    %3582 = vmatpush2.msra.mxu0 %v3499
    %3583 = vmatprep.subr.mxu0 %v3496
    %3584 = vmatpush2.msra.mxu0 %v3495
    %3585 = vmatprep.subr.mxu0 %v3492
    %3586 = vmatpush2.msra.mxu0 %v3491
    %3587 = vmatprep.subr.mxu0 %v3488
    %3588 = vmatpush2.msra.mxu0 %v3487
    %3589 = vmatprep.subr.mxu0 %v3484
    %3590 = vmatpush2.msra.mxu0 %v3483
    %3591 = vmatprep.subr.mxu0 %v3480
    %3592 = vmatpush2.msra.mxu0 %v3479
    %3593 = vmatprep.subr.mxu0 %v3476
    %3594 = vmatpush2.msra.mxu0 %v3475
    %3595 = vmatprep.subr.mxu0 %v3472
    %3596 = vmatpush2.msra.mxu0 %v3471
    %3597 = vmatprep.subr.mxu0 %v3468
    %3598 = vmatpush2.msra.mxu0 %v3467
    %3599 = vmatprep.subr.mxu0 %v3464
    %3600 = vmatpush2.msra.mxu0 %v3463
    %3601 = vmatprep.subr.mxu0 %v3460
    %3602 = vmatpush2.msra.mxu0 %v3459
    %3603 = vmatprep.subr.mxu0 %v3456
    %3604 = vmatpush2.msra.mxu0 %v3455
    %3605 = vmatprep.mubr.f32.mxu0 %v3151
    %3606 = vmatmul.mubr.f32.gmra.mxu0 %v3390
    %v3607 = vpop.f32.mrf.mxu0
    %v3608 = vadd.f32 %v3524, %v3607
    %v3609 = vpop.f32.mrf.mxu0
    %v3610 = vadd.f32 %v3528, %v3609
    %3611 = vdwg.mxu0
    %3612 = vmatprep.subr.mxu0 %v3454
    %3613 = vmatpush1.msra.mxu0 %v3453
    %3614 = vmatprep.subr.mxu0 %v3450
    %3615 = vmatpush1.msra.mxu0 %v3449
    %3616 = vmatprep.subr.mxu0 %v3446
    %3617 = vmatpush1.msra.mxu0 %v3445
    %3618 = vmatprep.subr.mxu0 %v3442
    %3619 = vmatpush1.msra.mxu0 %v3441
    %3620 = vmatprep.subr.mxu0 %v3438
    %3621 = vmatpush1.msra.mxu0 %v3437
    %3622 = vmatprep.subr.mxu0 %v3434
    %3623 = vmatpush1.msra.mxu0 %v3433
    %3624 = vmatprep.subr.mxu0 %v3430
    %3625 = vmatpush1.msra.mxu0 %v3429
    %3626 = vmatprep.subr.mxu0 %v3426
    %3627 = vmatpush1.msra.mxu0 %v3425
    %3628 = vmatprep.subr.mxu0 %v3422
    %3629 = vmatpush1.msra.mxu0 %v3421
    %3630 = vmatprep.subr.mxu0 %v3418
    %3631 = vmatpush1.msra.mxu0 %v3417
    %3632 = vmatprep.subr.mxu0 %v3414
    %3633 = vmatpush1.msra.mxu0 %v3413
    %3634 = vmatprep.subr.mxu0 %v3410
    %3635 = vmatpush1.msra.mxu0 %v3409
    %3636 = vmatprep.subr.mxu0 %v3406
    %3637 = vmatpush1.msra.mxu0 %v3405
    %3638 = vmatprep.subr.mxu0 %v3402
    %3639 = vmatpush1.msra.mxu0 %v3401
    %3640 = vmatprep.subr.mxu0 %v3398
    %3641 = vmatpush1.msra.mxu0 %v3397
    %3642 = vmatprep.subr.mxu0 %v3394
    %3643 = vmatpush1.msra.mxu0 %v3393
    %3644 = vmatprep.subr.mxu0 %v3518
    %3645 = vmatpush2.msra.mxu0 %v3517
    %3646 = vmatprep.subr.mxu0 %v3514
    %3647 = vmatpush2.msra.mxu0 %v3513
    %3648 = vmatprep.subr.mxu0 %v3510
    %3649 = vmatpush2.msra.mxu0 %v3509
    %3650 = vmatprep.subr.mxu0 %v3506
    %3651 = vmatpush2.msra.mxu0 %v3505
    %3652 = vmatprep.subr.mxu0 %v3502
    %3653 = vmatpush2.msra.mxu0 %v3501
    %3654 = vmatprep.subr.mxu0 %v3498
    %3655 = vmatpush2.msra.mxu0 %v3497
    %3656 = vmatprep.subr.mxu0 %v3494
    %3657 = vmatpush2.msra.mxu0 %v3493
    %3658 = vmatprep.subr.mxu0 %v3490
    %3659 = vmatpush2.msra.mxu0 %v3489
    %3660 = vmatprep.subr.mxu0 %v3486
    %3661 = vmatpush2.msra.mxu0 %v3485
    %3662 = vmatprep.subr.mxu0 %v3482
    %3663 = vmatpush2.msra.mxu0 %v3481
    %3664 = vmatprep.subr.mxu0 %v3478
    %3665 = vmatpush2.msra.mxu0 %v3477
    %3666 = vmatprep.subr.mxu0 %v3474
    %3667 = vmatpush2.msra.mxu0 %v3473
    %3668 = vmatprep.subr.mxu0 %v3470
    %3669 = vmatpush2.msra.mxu0 %v3469
    %3670 = vmatprep.subr.mxu0 %v3466
    %3671 = vmatpush2.msra.mxu0 %v3465
    %3672 = vmatprep.subr.mxu0 %v3462
    %3673 = vmatpush2.msra.mxu0 %v3461
    %3674 = vmatprep.subr.mxu0 %v3458
    %3675 = vmatpush2.msra.mxu0 %v3457
    %3676 = vmatprep.mubr.f32.mxu0 %v3151
    %3677 = vmatmul.mubr.f32.gmra.mxu0 %v3390
    %v3678 = vpop.f32.mrf.mxu0
    %v3679 = vadd.f32 %v3532, %v3678
    %v3680 = vpop.f32.mrf.mxu0
    %v3681 = vadd.f32 %v3536, %v3680
    %3682 = vdwg.mxu0
    %v3683 = vxor.u32 %v3608, 2147483648
    %v3684 = vxor.u32 %v3610, 2147483648
    %v3685 = vxor.u32 %v3679, 2147483648
    %v3686 = vmul.f32 %v3683, 1.442695
    %v3687 = vpow.pop %v3686
    %v3688 = vmul.f32 %v3684, 1.442695
    %v3689 = vpow.pop %v3688
    %v3690 = vmul.f32 %v3685, 1.442695
    %v3691 = vpow.pop %v3690
    %v3692 = vadd.f32 %v3687, 1.0
    %v3693 = vadd.f32 %v3689, 1.0
    %v3694 = vadd.f32 %v3691, 1.0
    %v3695 = vrcp.pop %v3692
    %v3696 = vmul.f32 1.0, %v3695
    %v3697 = vrcp.pop %v3693
    %v3698 = vmul.f32 1.0, %v3697
    %v3699 = vrcp.pop %v3694
    %v3700 = vmul.f32 1.0, %v3699
    %v3701 = vtanh.pop %v3681
    %v3702 = vmul.f32 %v3698, %v3149
    %v3703 = vmul.f32 %v3696, %v3701
    %v3704 = vadd.f32 %v3702, %v3703
    %v3705 = vtanh.pop %v3704
    %v3706 = vmul.f32 %v3700, %v3705
    %3707 = vst [vmem:[#allocation3 + $0x28] sm:$0xff] %v3706
    %v3708 = vld [vmem:[#allocation2 + $0xc0] sm:$0xff]
    %v3709 = vld [vmem:[#allocation2 + $0xc8] sm:$0xff]
    %v3710 = vld [vmem:[#allocation2 + $0xd0] sm:$0xff]
    %v3711 = vld [vmem:[#allocation2 + $0xd8] sm:$0xff]
    %v3712 = vld [vmem:[#allocation4] sm:$0xff]
    %v3713 = vld [vmem:[#allocation4 + $0x8] sm:$0xff]
    %v3714 = vld [vmem:[#allocation4 + $0x10] sm:$0xff]
    %v3715 = vld [vmem:[#allocation4 + $0x18] sm:$0xff]
    %v3716 = vld [vmem:[#allocation4 + $0x20] sm:$0xff]
    %v3717 = vld [vmem:[#allocation4 + $0x28] sm:$0xff]
    %v3718 = vld [vmem:[#allocation4 + $0x30] sm:$0xff]
    %v3719 = vld [vmem:[#allocation4 + $0x38] sm:$0xff]
    %v3720 = vld [vmem:[#allocation4 + $0x40] sm:$0xff]
    %v3721 = vld [vmem:[#allocation4 + $0x48] sm:$0xff]
    %v3722 = vld [vmem:[#allocation4 + $0x50] sm:$0xff]
    %v3723 = vld [vmem:[#allocation4 + $0x58] sm:$0xff]
    %v3724 = vld [vmem:[#allocation4 + $0x60] sm:$0xff]
    %v3725 = vld [vmem:[#allocation4 + $0x68] sm:$0xff]
    %v3726 = vld [vmem:[#allocation4 + $0x70] sm:$0xff]
    %v3727 = vld [vmem:[#allocation4 + $0x78] sm:$0xff]
    %v3728 = vld [vmem:[#allocation4 + $0x80] sm:$0xff]
    %v3729 = vld [vmem:[#allocation4 + $0x88] sm:$0xff]
    %v3730 = vld [vmem:[#allocation4 + $0x90] sm:$0xff]
    %v3731 = vld [vmem:[#allocation4 + $0x98] sm:$0xff]
    %v3732 = vld [vmem:[#allocation4 + $0xa0] sm:$0xff]
    %v3733 = vld [vmem:[#allocation4 + $0xa8] sm:$0xff]
    %v3734 = vld [vmem:[#allocation4 + $0xb0] sm:$0xff]
    %v3735 = vld [vmem:[#allocation4 + $0xb8] sm:$0xff]
    %v3736 = vld [vmem:[#allocation4 + $0xc0] sm:$0xff]
    %v3737 = vld [vmem:[#allocation4 + $0xc8] sm:$0xff]
    %v3738 = vld [vmem:[#allocation4 + $0xd0] sm:$0xff]
    %v3739 = vld [vmem:[#allocation4 + $0xd8] sm:$0xff]
    %v3740 = vld [vmem:[#allocation4 + $0xe0] sm:$0xff]
    %v3741 = vld [vmem:[#allocation4 + $0xe8] sm:$0xff]
    %v3742 = vld [vmem:[#allocation4 + $0xf0] sm:$0xff]
    %v3743 = vld [vmem:[#allocation4 + $0xf8] sm:$0xff]
    %v3744 = vld [vmem:[#allocation4 + $0x100] sm:$0xff]
    %v3745 = vld [vmem:[#allocation4 + $0x108] sm:$0xff]
    %v3746 = vld [vmem:[#allocation4 + $0x110] sm:$0xff]
    %v3747 = vld [vmem:[#allocation4 + $0x118] sm:$0xff]
    %v3748 = vld [vmem:[#allocation4 + $0x120] sm:$0xff]
    %v3749 = vld [vmem:[#allocation4 + $0x128] sm:$0xff]
    %v3750 = vld [vmem:[#allocation4 + $0x130] sm:$0xff]
    %v3751 = vld [vmem:[#allocation4 + $0x138] sm:$0xff]
    %v3752 = vld [vmem:[#allocation4 + $0x140] sm:$0xff]
    %v3753 = vld [vmem:[#allocation4 + $0x148] sm:$0xff]
    %v3754 = vld [vmem:[#allocation4 + $0x150] sm:$0xff]
    %v3755 = vld [vmem:[#allocation4 + $0x158] sm:$0xff]
    %v3756 = vld [vmem:[#allocation4 + $0x160] sm:$0xff]
    %v3757 = vld [vmem:[#allocation4 + $0x168] sm:$0xff]
    %v3758 = vld [vmem:[#allocation4 + $0x170] sm:$0xff]
    %v3759 = vld [vmem:[#allocation4 + $0x178] sm:$0xff]
    %v3760 = vld [vmem:[#allocation4 + $0x180] sm:$0xff]
    %v3761 = vld [vmem:[#allocation4 + $0x188] sm:$0xff]
    %v3762 = vld [vmem:[#allocation4 + $0x190] sm:$0xff]
    %v3763 = vld [vmem:[#allocation4 + $0x198] sm:$0xff]
    %v3764 = vld [vmem:[#allocation4 + $0x1a0] sm:$0xff]
    %v3765 = vld [vmem:[#allocation4 + $0x1a8] sm:$0xff]
    %v3766 = vld [vmem:[#allocation4 + $0x1b0] sm:$0xff]
    %v3767 = vld [vmem:[#allocation4 + $0x1b8] sm:$0xff]
    %v3768 = vld [vmem:[#allocation4 + $0x1c0] sm:$0xff]
    %v3769 = vld [vmem:[#allocation4 + $0x1c8] sm:$0xff]
    %v3770 = vld [vmem:[#allocation4 + $0x1d0] sm:$0xff]
    %v3771 = vld [vmem:[#allocation4 + $0x1d8] sm:$0xff]
    %v3772 = vld [vmem:[#allocation4 + $0x1e0] sm:$0xff]
    %v3773 = vld [vmem:[#allocation4 + $0x1e8] sm:$0xff]
    %v3774 = vld [vmem:[#allocation4 + $0x1f0] sm:$0xff]
    %v3775 = vld [vmem:[#allocation4 + $0x1f8] sm:$0xff]
    %3776 = vmatprep.subr.mxu0 %v3773
    %3777 = vmatpush1.msra.mxu0 %v3772
    %3778 = vmatprep.subr.mxu0 %v3769
    %3779 = vmatpush1.msra.mxu0 %v3768
    %3780 = vmatprep.subr.mxu0 %v3765
    %3781 = vmatpush1.msra.mxu0 %v3764
    %3782 = vmatprep.subr.mxu0 %v3761
    %3783 = vmatpush1.msra.mxu0 %v3760
    %3784 = vmatprep.subr.mxu0 %v3757
    %3785 = vmatpush1.msra.mxu0 %v3756
    %3786 = vmatprep.subr.mxu0 %v3753
    %3787 = vmatpush1.msra.mxu0 %v3752
    %3788 = vmatprep.subr.mxu0 %v3749
    %3789 = vmatpush1.msra.mxu0 %v3748
    %3790 = vmatprep.subr.mxu0 %v3745
    %3791 = vmatpush1.msra.mxu0 %v3744
    %3792 = vmatprep.subr.mxu0 %v3741
    %3793 = vmatpush1.msra.mxu0 %v3740
    %3794 = vmatprep.subr.mxu0 %v3737
    %3795 = vmatpush1.msra.mxu0 %v3736
    %3796 = vmatprep.subr.mxu0 %v3733
    %3797 = vmatpush1.msra.mxu0 %v3732
    %3798 = vmatprep.subr.mxu0 %v3729
    %3799 = vmatpush1.msra.mxu0 %v3728
    %3800 = vmatprep.subr.mxu0 %v3725
    %3801 = vmatpush1.msra.mxu0 %v3724
    %3802 = vmatprep.subr.mxu0 %v3721
    %3803 = vmatpush1.msra.mxu0 %v3720
    %3804 = vmatprep.subr.mxu0 %v3717
    %3805 = vmatpush1.msra.mxu0 %v3716
    %3806 = vmatprep.subr.mxu0 %v3713
    %3807 = vmatpush1.msra.mxu0 %v3712
    %3808 = vmatprep.subr.mxu0 0.0
    %3809 = vmatpush2.msra.mxu0 0.0
    %3810 = vmatprep.subr.mxu0 0.0
    %3811 = vmatpush2.msra.mxu0 0.0
    %3812 = vmatprep.subr.mxu0 0.0
    %3813 = vmatpush2.msra.mxu0 0.0
    %3814 = vmatprep.subr.mxu0 0.0
    %3815 = vmatpush2.msra.mxu0 0.0
    %3816 = vmatprep.subr.mxu0 0.0
    %3817 = vmatpush2.msra.mxu0 0.0
    %3818 = vmatprep.subr.mxu0 0.0
    %3819 = vmatpush2.msra.mxu0 0.0
    %3820 = vmatprep.subr.mxu0 0.0
    %3821 = vmatpush2.msra.mxu0 0.0
    %3822 = vmatprep.subr.mxu0 0.0
    %3823 = vmatpush2.msra.mxu0 0.0
    %3824 = vmatprep.subr.mxu0 0.0
    %3825 = vmatpush2.msra.mxu0 0.0
    %3826 = vmatprep.subr.mxu0 0.0
    %3827 = vmatpush2.msra.mxu0 0.0
    %3828 = vmatprep.subr.mxu0 0.0
    %3829 = vmatpush2.msra.mxu0 0.0
    %3830 = vmatprep.subr.mxu0 0.0
    %3831 = vmatpush2.msra.mxu0 0.0
    %3832 = vmatprep.subr.mxu0 0.0
    %3833 = vmatpush2.msra.mxu0 0.0
    %3834 = vmatprep.subr.mxu0 0.0
    %3835 = vmatpush2.msra.mxu0 0.0
    %3836 = vmatprep.subr.mxu0 0.0
    %3837 = vmatpush2.msra.mxu0 0.0
    %3838 = vmatprep.subr.mxu0 0.0
    %3839 = vmatpush2.msra.mxu0 0.0
    %3840 = vmatprep.mubr.f32.mxu0 0.0
    %3841 = vmatmul.mubr.f32.gmra.mxu0 %v3390
    %v3842 = vpop.f32.mrf.mxu0
    %v3843 = vadd.f32 0.0, %v3842
    %v3844 = vpop.f32.mrf.mxu0
    %v3845 = vadd.f32 0.0, %v3844
    %3846 = vdwg.mxu0
    %3847 = vmatprep.subr.mxu0 %v3775
    %3848 = vmatpush1.msra.mxu0 %v3774
    %3849 = vmatprep.subr.mxu0 %v3771
    %3850 = vmatpush1.msra.mxu0 %v3770
    %3851 = vmatprep.subr.mxu0 %v3767
    %3852 = vmatpush1.msra.mxu0 %v3766
    %3853 = vmatprep.subr.mxu0 %v3763
    %3854 = vmatpush1.msra.mxu0 %v3762
    %3855 = vmatprep.subr.mxu0 %v3759
    %3856 = vmatpush1.msra.mxu0 %v3758
    %3857 = vmatprep.subr.mxu0 %v3755
    %3858 = vmatpush1.msra.mxu0 %v3754
    %3859 = vmatprep.subr.mxu0 %v3751
    %3860 = vmatpush1.msra.mxu0 %v3750
    %3861 = vmatprep.subr.mxu0 %v3747
    %3862 = vmatpush1.msra.mxu0 %v3746
    %3863 = vmatprep.subr.mxu0 %v3743
    %3864 = vmatpush1.msra.mxu0 %v3742
    %3865 = vmatprep.subr.mxu0 %v3739
    %3866 = vmatpush1.msra.mxu0 %v3738
    %3867 = vmatprep.subr.mxu0 %v3735
    %3868 = vmatpush1.msra.mxu0 %v3734
    %3869 = vmatprep.subr.mxu0 %v3731
    %3870 = vmatpush1.msra.mxu0 %v3730
    %3871 = vmatprep.subr.mxu0 %v3727
    %3872 = vmatpush1.msra.mxu0 %v3726
    %3873 = vmatprep.subr.mxu0 %v3723
    %3874 = vmatpush1.msra.mxu0 %v3722
    %3875 = vmatprep.subr.mxu0 %v3719
    %3876 = vmatpush1.msra.mxu0 %v3718
    %3877 = vmatprep.subr.mxu0 %v3715
    %3878 = vmatpush1.msra.mxu0 %v3714
    %3879 = vmatprep.subr.mxu0 0.0
    %3880 = vmatpush2.msra.mxu0 0.0
    %3881 = vmatprep.subr.mxu0 0.0
    %3882 = vmatpush2.msra.mxu0 0.0
    %3883 = vmatprep.subr.mxu0 0.0
    %3884 = vmatpush2.msra.mxu0 0.0
    %3885 = vmatprep.subr.mxu0 0.0
    %3886 = vmatpush2.msra.mxu0 0.0
    %3887 = vmatprep.subr.mxu0 0.0
    %3888 = vmatpush2.msra.mxu0 0.0
    %3889 = vmatprep.subr.mxu0 0.0
    %3890 = vmatpush2.msra.mxu0 0.0
    %3891 = vmatprep.subr.mxu0 0.0
    %3892 = vmatpush2.msra.mxu0 0.0
    %3893 = vmatprep.subr.mxu0 0.0
    %3894 = vmatpush2.msra.mxu0 0.0
    %3895 = vmatprep.subr.mxu0 0.0
    %3896 = vmatpush2.msra.mxu0 0.0
    %3897 = vmatprep.subr.mxu0 0.0
    %3898 = vmatpush2.msra.mxu0 0.0
    %3899 = vmatprep.subr.mxu0 0.0
    %3900 = vmatpush2.msra.mxu0 0.0
    %3901 = vmatprep.subr.mxu0 0.0
    %3902 = vmatpush2.msra.mxu0 0.0
    %3903 = vmatprep.subr.mxu0 0.0
    %3904 = vmatpush2.msra.mxu0 0.0
    %3905 = vmatprep.subr.mxu0 0.0
    %3906 = vmatpush2.msra.mxu0 0.0
    %3907 = vmatprep.subr.mxu0 0.0
    %3908 = vmatpush2.msra.mxu0 0.0
    %3909 = vmatprep.subr.mxu0 0.0
    %3910 = vmatpush2.msra.mxu0 0.0
    %3911 = vmatprep.mubr.f32.mxu0 0.0
    %3912 = vmatmul.mubr.f32.gmra.mxu0 %v3390
    %v3913 = vpop.f32.mrf.mxu0
    %v3914 = vadd.f32 0.0, %v3913
    %v3915 = vpop.f32.mrf.mxu0
    %v3916 = vadd.f32 0.0, %v3915
    %3917 = vdwg.mxu0
    %v3918 = vadd.f32 %v3708, %v3843
    %v3919 = vadd.f32 %v3709, %v3845
    %v3920 = vadd.f32 %v3710, %v3914
    %v3921 = vadd.f32 %v3711, %v3916
    %v3922 = vxor.u32 %v3918, 2147483648
    %v3923 = vxor.u32 %v3919, 2147483648
    %v3924 = vxor.u32 %v3920, 2147483648
    %v3925 = vmul.f32 %v3922, 1.442695
    %v3926 = vpow.pop %v3925
    %v3927 = vmul.f32 %v3923, 1.442695
    %v3928 = vpow.pop %v3927
    %v3929 = vmul.f32 %v3924, 1.442695
    %v3930 = vpow.pop %v3929
    %v3931 = vadd.f32 %v3926, 1.0
    %v3932 = vadd.f32 %v3928, 1.0
    %v3933 = vadd.f32 %v3930, 1.0
    %v3934 = vrcp.pop %v3931
    %v3935 = vmul.f32 1.0, %v3934
    %v3936 = vrcp.pop %v3932
    %v3937 = vmul.f32 1.0, %v3936
    %v3938 = vrcp.pop %v3933
    %v3939 = vmul.f32 1.0, %v3938
    %v3940 = vtanh.pop %v3921
    %v3941 = vmul.f32 %v3937, %v3388
    %v3942 = vmul.f32 %v3935, %v3940
    %v3943 = vadd.f32 %v3941, %v3942
    %v3944 = vtanh.pop %v3943
    %v3945 = vmul.f32 %v3939, %v3944
    %v3946 = vld [vmem:[#allocation7] sm:$0xff]
    %v3947 = vld [vmem:[#allocation7 + $0x8] sm:$0xff]
    %v3948 = vld [vmem:[#allocation7 + $0x10] sm:$0xff]
    %v3949 = vld [vmem:[#allocation7 + $0x18] sm:$0xff]
    %v3950 = vld [vmem:[#allocation7 + $0x20] sm:$0xff]
    %v3951 = vld [vmem:[#allocation7 + $0x28] sm:$0xff]
    %v3952 = vld [vmem:[#allocation7 + $0x30] sm:$0xff]
    %v3953 = vld [vmem:[#allocation7 + $0x38] sm:$0xff]
    %v3954 = vld [vmem:[#allocation7 + $0x40] sm:$0xff]
    %v3955 = vld [vmem:[#allocation7 + $0x48] sm:$0xff]
    %v3956 = vld [vmem:[#allocation7 + $0x50] sm:$0xff]
    %v3957 = vld [vmem:[#allocation7 + $0x58] sm:$0xff]
    %v3958 = vld [vmem:[#allocation7 + $0x60] sm:$0xff]
    %v3959 = vld [vmem:[#allocation7 + $0x68] sm:$0xff]
    %v3960 = vld [vmem:[#allocation7 + $0x70] sm:$0xff]
    %v3961 = vld [vmem:[#allocation7 + $0x78] sm:$0xff]
    %v3962 = vld [vmem:[#allocation7 + $0x80] sm:$0xff]
    %v3963 = vld [vmem:[#allocation7 + $0x88] sm:$0xff]
    %v3964 = vld [vmem:[#allocation7 + $0x90] sm:$0xff]
    %v3965 = vld [vmem:[#allocation7 + $0x98] sm:$0xff]
    %v3966 = vld [vmem:[#allocation7 + $0xa0] sm:$0xff]
    %v3967 = vld [vmem:[#allocation7 + $0xa8] sm:$0xff]
    %v3968 = vld [vmem:[#allocation7 + $0xb0] sm:$0xff]
    %v3969 = vld [vmem:[#allocation7 + $0xb8] sm:$0xff]
    %v3970 = vld [vmem:[#allocation7 + $0xc0] sm:$0xff]
    %v3971 = vld [vmem:[#allocation7 + $0xc8] sm:$0xff]
    %v3972 = vld [vmem:[#allocation7 + $0xd0] sm:$0xff]
    %v3973 = vld [vmem:[#allocation7 + $0xd8] sm:$0xff]
    %v3974 = vld [vmem:[#allocation7 + $0xe0] sm:$0xff]
    %v3975 = vld [vmem:[#allocation7 + $0xe8] sm:$0xff]
    %v3976 = vld [vmem:[#allocation7 + $0xf0] sm:$0xff]
    %v3977 = vld [vmem:[#allocation7 + $0xf8] sm:$0xff]
    %v3978 = vld [vmem:[#allocation7 + $0x100] sm:$0xff]
    %v3979 = vld [vmem:[#allocation7 + $0x108] sm:$0xff]
    %v3980 = vld [vmem:[#allocation7 + $0x110] sm:$0xff]
    %v3981 = vld [vmem:[#allocation7 + $0x118] sm:$0xff]
    %v3982 = vld [vmem:[#allocation7 + $0x120] sm:$0xff]
    %v3983 = vld [vmem:[#allocation7 + $0x128] sm:$0xff]
    %v3984 = vld [vmem:[#allocation7 + $0x130] sm:$0xff]
    %v3985 = vld [vmem:[#allocation7 + $0x138] sm:$0xff]
    %v3986 = vld [vmem:[#allocation7 + $0x140] sm:$0xff]
    %v3987 = vld [vmem:[#allocation7 + $0x148] sm:$0xff]
    %v3988 = vld [vmem:[#allocation7 + $0x150] sm:$0xff]
    %v3989 = vld [vmem:[#allocation7 + $0x158] sm:$0xff]
    %v3990 = vld [vmem:[#allocation7 + $0x160] sm:$0xff]
    %v3991 = vld [vmem:[#allocation7 + $0x168] sm:$0xff]
    %v3992 = vld [vmem:[#allocation7 + $0x170] sm:$0xff]
    %v3993 = vld [vmem:[#allocation7 + $0x178] sm:$0xff]
    %v3994 = vld [vmem:[#allocation7 + $0x180] sm:$0xff]
    %v3995 = vld [vmem:[#allocation7 + $0x188] sm:$0xff]
    %v3996 = vld [vmem:[#allocation7 + $0x190] sm:$0xff]
    %v3997 = vld [vmem:[#allocation7 + $0x198] sm:$0xff]
    %v3998 = vld [vmem:[#allocation7 + $0x1a0] sm:$0xff]
    %v3999 = vld [vmem:[#allocation7 + $0x1a8] sm:$0xff]
    %v4000 = vld [vmem:[#allocation7 + $0x1b0] sm:$0xff]
    %v4001 = vld [vmem:[#allocation7 + $0x1b8] sm:$0xff]
    %v4002 = vld [vmem:[#allocation7 + $0x1c0] sm:$0xff]
    %v4003 = vld [vmem:[#allocation7 + $0x1c8] sm:$0xff]
    %v4004 = vld [vmem:[#allocation7 + $0x1d0] sm:$0xff]
    %v4005 = vld [vmem:[#allocation7 + $0x1d8] sm:$0xff]
    %v4006 = vld [vmem:[#allocation7 + $0x1e0] sm:$0xff]
    %v4007 = vld [vmem:[#allocation7 + $0x1e8] sm:$0xff]
    %v4008 = vld [vmem:[#allocation7 + $0x1f0] sm:$0xff]
    %v4009 = vld [vmem:[#allocation7 + $0x1f8] sm:$0xff]
    %v4010 = vld [vmem:[#allocation7 + $0x200] sm:$0xff]
    %v4011 = vld [vmem:[#allocation7 + $0x208] sm:$0xff]
    %v4012 = vld [vmem:[#allocation7 + $0x210] sm:$0xff]
    %v4013 = vld [vmem:[#allocation7 + $0x218] sm:$0xff]
    %v4014 = vld [vmem:[#allocation7 + $0x220] sm:$0xff]
    %v4015 = vld [vmem:[#allocation7 + $0x228] sm:$0xff]
    %v4016 = vld [vmem:[#allocation7 + $0x230] sm:$0xff]
    %v4017 = vld [vmem:[#allocation7 + $0x238] sm:$0xff]
    %v4018 = vld [vmem:[#allocation7 + $0x240] sm:$0xff]
    %v4019 = vld [vmem:[#allocation7 + $0x248] sm:$0xff]
    %v4020 = vld [vmem:[#allocation7 + $0x250] sm:$0xff]
    %v4021 = vld [vmem:[#allocation7 + $0x258] sm:$0xff]
    %v4022 = vld [vmem:[#allocation7 + $0x260] sm:$0xff]
    %v4023 = vld [vmem:[#allocation7 + $0x268] sm:$0xff]
    %v4024 = vld [vmem:[#allocation7 + $0x270] sm:$0xff]
    %v4025 = vld [vmem:[#allocation7 + $0x278] sm:$0xff]
    %v4026 = vld [vmem:[#allocation7 + $0x280] sm:$0xff]
    %v4027 = vld [vmem:[#allocation7 + $0x288] sm:$0xff]
    %v4028 = vld [vmem:[#allocation7 + $0x290] sm:$0xff]
    %v4029 = vld [vmem:[#allocation7 + $0x298] sm:$0xff]
    %v4030 = vld [vmem:[#allocation7 + $0x2a0] sm:$0xff]
    %v4031 = vld [vmem:[#allocation7 + $0x2a8] sm:$0xff]
    %v4032 = vld [vmem:[#allocation7 + $0x2b0] sm:$0xff]
    %v4033 = vld [vmem:[#allocation7 + $0x2b8] sm:$0xff]
    %v4034 = vld [vmem:[#allocation7 + $0x2c0] sm:$0xff]
    %v4035 = vld [vmem:[#allocation7 + $0x2c8] sm:$0xff]
    %v4036 = vld [vmem:[#allocation7 + $0x2d0] sm:$0xff]
    %v4037 = vld [vmem:[#allocation7 + $0x2d8] sm:$0xff]
    %v4038 = vld [vmem:[#allocation7 + $0x2e0] sm:$0xff]
    %v4039 = vld [vmem:[#allocation7 + $0x2e8] sm:$0xff]
    %v4040 = vld [vmem:[#allocation7 + $0x2f0] sm:$0xff]
    %v4041 = vld [vmem:[#allocation7 + $0x2f8] sm:$0xff]
    %v4042 = vld [vmem:[#allocation7 + $0x300] sm:$0xff]
    %v4043 = vld [vmem:[#allocation7 + $0x308] sm:$0xff]
    %v4044 = vld [vmem:[#allocation7 + $0x310] sm:$0xff]
    %v4045 = vld [vmem:[#allocation7 + $0x318] sm:$0xff]
    %v4046 = vld [vmem:[#allocation7 + $0x320] sm:$0xff]
    %v4047 = vld [vmem:[#allocation7 + $0x328] sm:$0xff]
    %v4048 = vld [vmem:[#allocation7 + $0x330] sm:$0xff]
    %v4049 = vld [vmem:[#allocation7 + $0x338] sm:$0xff]
    %v4050 = vld [vmem:[#allocation7 + $0x340] sm:$0xff]
    %v4051 = vld [vmem:[#allocation7 + $0x348] sm:$0xff]
    %v4052 = vld [vmem:[#allocation7 + $0x350] sm:$0xff]
    %v4053 = vld [vmem:[#allocation7 + $0x358] sm:$0xff]
    %v4054 = vld [vmem:[#allocation7 + $0x360] sm:$0xff]
    %v4055 = vld [vmem:[#allocation7 + $0x368] sm:$0xff]
    %v4056 = vld [vmem:[#allocation7 + $0x370] sm:$0xff]
    %v4057 = vld [vmem:[#allocation7 + $0x378] sm:$0xff]
    %v4058 = vld [vmem:[#allocation7 + $0x380] sm:$0xff]
    %v4059 = vld [vmem:[#allocation7 + $0x388] sm:$0xff]
    %v4060 = vld [vmem:[#allocation7 + $0x390] sm:$0xff]
    %v4061 = vld [vmem:[#allocation7 + $0x398] sm:$0xff]
    %v4062 = vld [vmem:[#allocation7 + $0x3a0] sm:$0xff]
    %v4063 = vld [vmem:[#allocation7 + $0x3a8] sm:$0xff]
    %v4064 = vld [vmem:[#allocation7 + $0x3b0] sm:$0xff]
    %v4065 = vld [vmem:[#allocation7 + $0x3b8] sm:$0xff]
    %v4066 = vld [vmem:[#allocation7 + $0x3c0] sm:$0xff]
    %v4067 = vld [vmem:[#allocation7 + $0x3c8] sm:$0xff]
    %v4068 = vld [vmem:[#allocation7 + $0x3d0] sm:$0xff]
    %v4069 = vld [vmem:[#allocation7 + $0x3d8] sm:$0xff]
    %v4070 = vld [vmem:[#allocation7 + $0x3e0] sm:$0xff]
    %v4071 = vld [vmem:[#allocation7 + $0x3e8] sm:$0xff]
    %v4072 = vld [vmem:[#allocation7 + $0x3f0] sm:$0xff]
    %v4073 = vld [vmem:[#allocation7 + $0x3f8] sm:$0xff]
    %v4074 = vld [vmem:[%s5] sm:$0xf]
    %v4076 = vlaneseq
    %v4077 = vshrl.u32 %v4076, 7
    %v4078 = vsub.s32 0, %v4077
    %v4079 = vrot.slane %v4074, %v4078
    %v4080 = vlaneseq
    %v4081 = vshrl.u32 %v4080, 7
    %v4082 = vsub.s32 1, %v4081
    %v4083 = vrot.slane %v4074, %v4082
    %v4084 = vlaneseq
    %v4085 = vshrl.u32 %v4084, 7
    %v4086 = vsub.s32 2, %v4085
    %v4087 = vrot.slane %v4074, %v4086
    %v4088 = vlaneseq
    %v4089 = vshrl.u32 %v4088, 7
    %v4090 = vsub.s32 3, %v4089
    %v4091 = vrot.slane %v4074, %v4090
    %4096 = vmatprep.subr.mxu0 %v4007
    %4097 = vmatpush1.msra.mxu0 %v4006
    %4098 = vmatprep.subr.mxu0 %v4003
    %4099 = vmatpush1.msra.mxu0 %v4002
    %4100 = vmatprep.subr.mxu0 %v3999
    %4101 = vmatpush1.msra.mxu0 %v3998
    %4102 = vmatprep.subr.mxu0 %v3995
    %4103 = vmatpush1.msra.mxu0 %v3994
    %4104 = vmatprep.subr.mxu0 %v3991
    %4105 = vmatpush1.msra.mxu0 %v3990
    %4106 = vmatprep.subr.mxu0 %v3987
    %4107 = vmatpush1.msra.mxu0 %v3986
    %4108 = vmatprep.subr.mxu0 %v3983
    %4109 = vmatpush1.msra.mxu0 %v3982
    %4110 = vmatprep.subr.mxu0 %v3979
    %4111 = vmatpush1.msra.mxu0 %v3978
    %4112 = vmatprep.subr.mxu0 %v3975
    %4113 = vmatpush1.msra.mxu0 %v3974
    %4114 = vmatprep.subr.mxu0 %v3971
    %4115 = vmatpush1.msra.mxu0 %v3970
    %4116 = vmatprep.subr.mxu0 %v3967
    %4117 = vmatpush1.msra.mxu0 %v3966
    %4118 = vmatprep.subr.mxu0 %v3963
    %4119 = vmatpush1.msra.mxu0 %v3962
    %4120 = vmatprep.subr.mxu0 %v3959
    %4121 = vmatpush1.msra.mxu0 %v3958
    %4122 = vmatprep.subr.mxu0 %v3955
    %4123 = vmatpush1.msra.mxu0 %v3954
    %4124 = vmatprep.subr.mxu0 %v3951
    %4125 = vmatpush1.msra.mxu0 %v3950
    %4126 = vmatprep.subr.mxu0 %v3947
    %4127 = vmatpush1.msra.mxu0 %v3946
    %4128 = vmatprep.subr.mxu0 %v4071
    %4129 = vmatpush2.msra.mxu0 %v4070
    %4130 = vmatprep.subr.mxu0 %v4067
    %4131 = vmatpush2.msra.mxu0 %v4066
    %4132 = vmatprep.subr.mxu0 %v4063
    %4133 = vmatpush2.msra.mxu0 %v4062
    %4134 = vmatprep.subr.mxu0 %v4059
    %4135 = vmatpush2.msra.mxu0 %v4058
    %4136 = vmatprep.subr.mxu0 %v4055
    %4137 = vmatpush2.msra.mxu0 %v4054
    %4138 = vmatprep.subr.mxu0 %v4051
    %4139 = vmatpush2.msra.mxu0 %v4050
    %4140 = vmatprep.subr.mxu0 %v4047
    %4141 = vmatpush2.msra.mxu0 %v4046
    %4142 = vmatprep.subr.mxu0 %v4043
    %4143 = vmatpush2.msra.mxu0 %v4042
    %4144 = vmatprep.subr.mxu0 %v4039
    %4145 = vmatpush2.msra.mxu0 %v4038
    %4146 = vmatprep.subr.mxu0 %v4035
    %4147 = vmatpush2.msra.mxu0 %v4034
    %4148 = vmatprep.subr.mxu0 %v4031
    %4149 = vmatpush2.msra.mxu0 %v4030
    %4150 = vmatprep.subr.mxu0 %v4027
    %4151 = vmatpush2.msra.mxu0 %v4026
    %4152 = vmatprep.subr.mxu0 %v4023
    %4153 = vmatpush2.msra.mxu0 %v4022
    %4154 = vmatprep.subr.mxu0 %v4019
    %4155 = vmatpush2.msra.mxu0 %v4018
    %4156 = vmatprep.subr.mxu0 %v4015
    %4157 = vmatpush2.msra.mxu0 %v4014
    %4158 = vmatprep.subr.mxu0 %v4011
    %4159 = vmatpush2.msra.mxu0 %v4010
    %4160 = vmatprep.mubr.f32.mxu0 %v3706
    %4161 = vmatmul.mubr.f32.gmra.mxu0 %v3945
    %v4162 = vpop.f32.mrf.mxu0
    %v4163 = vadd.f32 %v4079, %v4162
    %v4164 = vpop.f32.mrf.mxu0
    %v4165 = vadd.f32 %v4083, %v4164
    %4166 = vdwg.mxu0
    %4167 = vmatprep.subr.mxu0 %v4009
    %4168 = vmatpush1.msra.mxu0 %v4008
    %4169 = vmatprep.subr.mxu0 %v4005
    %4170 = vmatpush1.msra.mxu0 %v4004
    %4171 = vmatprep.subr.mxu0 %v4001
    %4172 = vmatpush1.msra.mxu0 %v4000
    %4173 = vmatprep.subr.mxu0 %v3997
    %4174 = vmatpush1.msra.mxu0 %v3996
    %4175 = vmatprep.subr.mxu0 %v3993
    %4176 = vmatpush1.msra.mxu0 %v3992
    %4177 = vmatprep.subr.mxu0 %v3989
    %4178 = vmatpush1.msra.mxu0 %v3988
    %4179 = vmatprep.subr.mxu0 %v3985
    %4180 = vmatpush1.msra.mxu0 %v3984
    %4181 = vmatprep.subr.mxu0 %v3981
    %4182 = vmatpush1.msra.mxu0 %v3980
    %4183 = vmatprep.subr.mxu0 %v3977
    %4184 = vmatpush1.msra.mxu0 %v3976
    %4185 = vmatprep.subr.mxu0 %v3973
    %4186 = vmatpush1.msra.mxu0 %v3972
    %4187 = vmatprep.subr.mxu0 %v3969
    %4188 = vmatpush1.msra.mxu0 %v3968
    %4189 = vmatprep.subr.mxu0 %v3965
    %4190 = vmatpush1.msra.mxu0 %v3964
    %4191 = vmatprep.subr.mxu0 %v3961
    %4192 = vmatpush1.msra.mxu0 %v3960
    %4193 = vmatprep.subr.mxu0 %v3957
    %4194 = vmatpush1.msra.mxu0 %v3956
    %4195 = vmatprep.subr.mxu0 %v3953
    %4196 = vmatpush1.msra.mxu0 %v3952
    %4197 = vmatprep.subr.mxu0 %v3949
    %4198 = vmatpush1.msra.mxu0 %v3948
    %4199 = vmatprep.subr.mxu0 %v4073
    %4200 = vmatpush2.msra.mxu0 %v4072
    %4201 = vmatprep.subr.mxu0 %v4069
    %4202 = vmatpush2.msra.mxu0 %v4068
    %4203 = vmatprep.subr.mxu0 %v4065
    %4204 = vmatpush2.msra.mxu0 %v4064
    %4205 = vmatprep.subr.mxu0 %v4061
    %4206 = vmatpush2.msra.mxu0 %v4060
    %4207 = vmatprep.subr.mxu0 %v4057
    %4208 = vmatpush2.msra.mxu0 %v4056
    %4209 = vmatprep.subr.mxu0 %v4053
    %4210 = vmatpush2.msra.mxu0 %v4052
    %4211 = vmatprep.subr.mxu0 %v4049
    %4212 = vmatpush2.msra.mxu0 %v4048
    %4213 = vmatprep.subr.mxu0 %v4045
    %4214 = vmatpush2.msra.mxu0 %v4044
    %4215 = vmatprep.subr.mxu0 %v4041
    %4216 = vmatpush2.msra.mxu0 %v4040
    %4217 = vmatprep.subr.mxu0 %v4037
    %4218 = vmatpush2.msra.mxu0 %v4036
    %4219 = vmatprep.subr.mxu0 %v4033
    %4220 = vmatpush2.msra.mxu0 %v4032
    %4221 = vmatprep.subr.mxu0 %v4029
    %4222 = vmatpush2.msra.mxu0 %v4028
    %4223 = vmatprep.subr.mxu0 %v4025
    %4224 = vmatpush2.msra.mxu0 %v4024
    %4225 = vmatprep.subr.mxu0 %v4021
    %4226 = vmatpush2.msra.mxu0 %v4020
    %4227 = vmatprep.subr.mxu0 %v4017
    %4228 = vmatpush2.msra.mxu0 %v4016
    %4229 = vmatprep.subr.mxu0 %v4013
    %4230 = vmatpush2.msra.mxu0 %v4012
    %4231 = vmatprep.mubr.f32.mxu0 %v3706
    %4232 = vmatmul.mubr.f32.gmra.mxu0 %v3945
    %v4233 = vpop.f32.mrf.mxu0
    %v4234 = vadd.f32 %v4087, %v4233
    %v4235 = vpop.f32.mrf.mxu0
    %v4236 = vadd.f32 %v4091, %v4235
    %4237 = vdwg.mxu0
    %v4238 = vxor.u32 %v4163, 2147483648
    %v4239 = vxor.u32 %v4165, 2147483648
    %v4240 = vxor.u32 %v4234, 2147483648
    %v4241 = vmul.f32 %v4238, 1.442695
    %v4242 = vpow.pop %v4241
    %v4243 = vmul.f32 %v4239, 1.442695
    %v4244 = vpow.pop %v4243
    %v4245 = vmul.f32 %v4240, 1.442695
    %v4246 = vpow.pop %v4245
    %v4247 = vadd.f32 %v4242, 1.0
    %v4248 = vadd.f32 %v4244, 1.0
    %v4249 = vadd.f32 %v4246, 1.0
    %v4250 = vrcp.pop %v4247
    %v4251 = vmul.f32 1.0, %v4250
    %v4252 = vrcp.pop %v4248
    %v4253 = vmul.f32 1.0, %v4252
    %v4254 = vrcp.pop %v4249
    %v4255 = vmul.f32 1.0, %v4254
    %v4256 = vtanh.pop %v4236
    %v4257 = vmul.f32 %v4253, %v3704
    %v4258 = vmul.f32 %v4251, %v4256
    %v4259 = vadd.f32 %v4257, %v4258
    %v4260 = vtanh.pop %v4259
    %v4261 = vmul.f32 %v4255, %v4260
    %4262 = vst [vmem:[#allocation3 + $0x30] sm:$0xff] %v4261
    %v4263 = vld [vmem:[#allocation2 + $0xe0] sm:$0xff]
    %v4264 = vld [vmem:[#allocation2 + $0xe8] sm:$0xff]
    %v4265 = vld [vmem:[#allocation2 + $0xf0] sm:$0xff]
    %v4266 = vld [vmem:[#allocation2 + $0xf8] sm:$0xff]
    %v4267 = vld [vmem:[#allocation4] sm:$0xff]
    %v4268 = vld [vmem:[#allocation4 + $0x8] sm:$0xff]
    %v4269 = vld [vmem:[#allocation4 + $0x10] sm:$0xff]
    %v4270 = vld [vmem:[#allocation4 + $0x18] sm:$0xff]
    %v4271 = vld [vmem:[#allocation4 + $0x20] sm:$0xff]
    %v4272 = vld [vmem:[#allocation4 + $0x28] sm:$0xff]
    %v4273 = vld [vmem:[#allocation4 + $0x30] sm:$0xff]
    %v4274 = vld [vmem:[#allocation4 + $0x38] sm:$0xff]
    %v4275 = vld [vmem:[#allocation4 + $0x40] sm:$0xff]
    %v4276 = vld [vmem:[#allocation4 + $0x48] sm:$0xff]
    %v4277 = vld [vmem:[#allocation4 + $0x50] sm:$0xff]
    %v4278 = vld [vmem:[#allocation4 + $0x58] sm:$0xff]
    %v4279 = vld [vmem:[#allocation4 + $0x60] sm:$0xff]
    %v4280 = vld [vmem:[#allocation4 + $0x68] sm:$0xff]
    %v4281 = vld [vmem:[#allocation4 + $0x70] sm:$0xff]
    %v4282 = vld [vmem:[#allocation4 + $0x78] sm:$0xff]
    %v4283 = vld [vmem:[#allocation4 + $0x80] sm:$0xff]
    %v4284 = vld [vmem:[#allocation4 + $0x88] sm:$0xff]
    %v4285 = vld [vmem:[#allocation4 + $0x90] sm:$0xff]
    %v4286 = vld [vmem:[#allocation4 + $0x98] sm:$0xff]
    %v4287 = vld [vmem:[#allocation4 + $0xa0] sm:$0xff]
    %v4288 = vld [vmem:[#allocation4 + $0xa8] sm:$0xff]
    %v4289 = vld [vmem:[#allocation4 + $0xb0] sm:$0xff]
    %v4290 = vld [vmem:[#allocation4 + $0xb8] sm:$0xff]
    %v4291 = vld [vmem:[#allocation4 + $0xc0] sm:$0xff]
    %v4292 = vld [vmem:[#allocation4 + $0xc8] sm:$0xff]
    %v4293 = vld [vmem:[#allocation4 + $0xd0] sm:$0xff]
    %v4294 = vld [vmem:[#allocation4 + $0xd8] sm:$0xff]
    %v4295 = vld [vmem:[#allocation4 + $0xe0] sm:$0xff]
    %v4296 = vld [vmem:[#allocation4 + $0xe8] sm:$0xff]
    %v4297 = vld [vmem:[#allocation4 + $0xf0] sm:$0xff]
    %v4298 = vld [vmem:[#allocation4 + $0xf8] sm:$0xff]
    %v4299 = vld [vmem:[#allocation4 + $0x100] sm:$0xff]
    %v4300 = vld [vmem:[#allocation4 + $0x108] sm:$0xff]
    %v4301 = vld [vmem:[#allocation4 + $0x110] sm:$0xff]
    %v4302 = vld [vmem:[#allocation4 + $0x118] sm:$0xff]
    %v4303 = vld [vmem:[#allocation4 + $0x120] sm:$0xff]
    %v4304 = vld [vmem:[#allocation4 + $0x128] sm:$0xff]
    %v4305 = vld [vmem:[#allocation4 + $0x130] sm:$0xff]
    %v4306 = vld [vmem:[#allocation4 + $0x138] sm:$0xff]
    %v4307 = vld [vmem:[#allocation4 + $0x140] sm:$0xff]
    %v4308 = vld [vmem:[#allocation4 + $0x148] sm:$0xff]
    %v4309 = vld [vmem:[#allocation4 + $0x150] sm:$0xff]
    %v4310 = vld [vmem:[#allocation4 + $0x158] sm:$0xff]
    %v4311 = vld [vmem:[#allocation4 + $0x160] sm:$0xff]
    %v4312 = vld [vmem:[#allocation4 + $0x168] sm:$0xff]
    %v4313 = vld [vmem:[#allocation4 + $0x170] sm:$0xff]
    %v4314 = vld [vmem:[#allocation4 + $0x178] sm:$0xff]
    %v4315 = vld [vmem:[#allocation4 + $0x180] sm:$0xff]
    %v4316 = vld [vmem:[#allocation4 + $0x188] sm:$0xff]
    %v4317 = vld [vmem:[#allocation4 + $0x190] sm:$0xff]
    %v4318 = vld [vmem:[#allocation4 + $0x198] sm:$0xff]
    %v4319 = vld [vmem:[#allocation4 + $0x1a0] sm:$0xff]
    %v4320 = vld [vmem:[#allocation4 + $0x1a8] sm:$0xff]
    %v4321 = vld [vmem:[#allocation4 + $0x1b0] sm:$0xff]
    %v4322 = vld [vmem:[#allocation4 + $0x1b8] sm:$0xff]
    %v4323 = vld [vmem:[#allocation4 + $0x1c0] sm:$0xff]
    %v4324 = vld [vmem:[#allocation4 + $0x1c8] sm:$0xff]
    %v4325 = vld [vmem:[#allocation4 + $0x1d0] sm:$0xff]
    %v4326 = vld [vmem:[#allocation4 + $0x1d8] sm:$0xff]
    %v4327 = vld [vmem:[#allocation4 + $0x1e0] sm:$0xff]
    %v4328 = vld [vmem:[#allocation4 + $0x1e8] sm:$0xff]
    %v4329 = vld [vmem:[#allocation4 + $0x1f0] sm:$0xff]
    %v4330 = vld [vmem:[#allocation4 + $0x1f8] sm:$0xff]
    %4331 = vmatprep.subr.mxu0 %v4328
    %4332 = vmatpush1.msra.mxu0 %v4327
    %4333 = vmatprep.subr.mxu0 %v4324
    %4334 = vmatpush1.msra.mxu0 %v4323
    %4335 = vmatprep.subr.mxu0 %v4320
    %4336 = vmatpush1.msra.mxu0 %v4319
    %4337 = vmatprep.subr.mxu0 %v4316
    %4338 = vmatpush1.msra.mxu0 %v4315
    %4339 = vmatprep.subr.mxu0 %v4312
    %4340 = vmatpush1.msra.mxu0 %v4311
    %4341 = vmatprep.subr.mxu0 %v4308
    %4342 = vmatpush1.msra.mxu0 %v4307
    %4343 = vmatprep.subr.mxu0 %v4304
    %4344 = vmatpush1.msra.mxu0 %v4303
    %4345 = vmatprep.subr.mxu0 %v4300
    %4346 = vmatpush1.msra.mxu0 %v4299
    %4347 = vmatprep.subr.mxu0 %v4296
    %4348 = vmatpush1.msra.mxu0 %v4295
    %4349 = vmatprep.subr.mxu0 %v4292
    %4350 = vmatpush1.msra.mxu0 %v4291
    %4351 = vmatprep.subr.mxu0 %v4288
    %4352 = vmatpush1.msra.mxu0 %v4287
    %4353 = vmatprep.subr.mxu0 %v4284
    %4354 = vmatpush1.msra.mxu0 %v4283
    %4355 = vmatprep.subr.mxu0 %v4280
    %4356 = vmatpush1.msra.mxu0 %v4279
    %4357 = vmatprep.subr.mxu0 %v4276
    %4358 = vmatpush1.msra.mxu0 %v4275
    %4359 = vmatprep.subr.mxu0 %v4272
    %4360 = vmatpush1.msra.mxu0 %v4271
    %4361 = vmatprep.subr.mxu0 %v4268
    %4362 = vmatpush1.msra.mxu0 %v4267
    %4363 = vmatprep.subr.mxu0 0.0
    %4364 = vmatpush2.msra.mxu0 0.0
    %4365 = vmatprep.subr.mxu0 0.0
    %4366 = vmatpush2.msra.mxu0 0.0
    %4367 = vmatprep.subr.mxu0 0.0
    %4368 = vmatpush2.msra.mxu0 0.0
    %4369 = vmatprep.subr.mxu0 0.0
    %4370 = vmatpush2.msra.mxu0 0.0
    %4371 = vmatprep.subr.mxu0 0.0
    %4372 = vmatpush2.msra.mxu0 0.0
    %4373 = vmatprep.subr.mxu0 0.0
    %4374 = vmatpush2.msra.mxu0 0.0
    %4375 = vmatprep.subr.mxu0 0.0
    %4376 = vmatpush2.msra.mxu0 0.0
    %4377 = vmatprep.subr.mxu0 0.0
    %4378 = vmatpush2.msra.mxu0 0.0
    %4379 = vmatprep.subr.mxu0 0.0
    %4380 = vmatpush2.msra.mxu0 0.0
    %4381 = vmatprep.subr.mxu0 0.0
    %4382 = vmatpush2.msra.mxu0 0.0
    %4383 = vmatprep.subr.mxu0 0.0
    %4384 = vmatpush2.msra.mxu0 0.0
    %4385 = vmatprep.subr.mxu0 0.0
    %4386 = vmatpush2.msra.mxu0 0.0
    %4387 = vmatprep.subr.mxu0 0.0
    %4388 = vmatpush2.msra.mxu0 0.0
    %4389 = vmatprep.subr.mxu0 0.0
    %4390 = vmatpush2.msra.mxu0 0.0
    %4391 = vmatprep.subr.mxu0 0.0
    %4392 = vmatpush2.msra.mxu0 0.0
    %4393 = vmatprep.subr.mxu0 0.0
    %4394 = vmatpush2.msra.mxu0 0.0
    %4395 = vmatprep.mubr.f32.mxu0 0.0
    %4396 = vmatmul.mubr.f32.gmra.mxu0 %v3945
    %v4397 = vpop.f32.mrf.mxu0
    %v4398 = vadd.f32 0.0, %v4397
    %v4399 = vpop.f32.mrf.mxu0
    %v4400 = vadd.f32 0.0, %v4399
    %4401 = vdwg.mxu0
    %4402 = vmatprep.subr.mxu0 %v4330
    %4403 = vmatpush1.msra.mxu0 %v4329
    %4404 = vmatprep.subr.mxu0 %v4326
    %4405 = vmatpush1.msra.mxu0 %v4325
    %4406 = vmatprep.subr.mxu0 %v4322
    %4407 = vmatpush1.msra.mxu0 %v4321
    %4408 = vmatprep.subr.mxu0 %v4318
    %4409 = vmatpush1.msra.mxu0 %v4317
    %4410 = vmatprep.subr.mxu0 %v4314
    %4411 = vmatpush1.msra.mxu0 %v4313
    %4412 = vmatprep.subr.mxu0 %v4310
    %4413 = vmatpush1.msra.mxu0 %v4309
    %4414 = vmatprep.subr.mxu0 %v4306
    %4415 = vmatpush1.msra.mxu0 %v4305
    %4416 = vmatprep.subr.mxu0 %v4302
    %4417 = vmatpush1.msra.mxu0 %v4301
    %4418 = vmatprep.subr.mxu0 %v4298
    %4419 = vmatpush1.msra.mxu0 %v4297
    %4420 = vmatprep.subr.mxu0 %v4294
    %4421 = vmatpush1.msra.mxu0 %v4293
    %4422 = vmatprep.subr.mxu0 %v4290
    %4423 = vmatpush1.msra.mxu0 %v4289
    %4424 = vmatprep.subr.mxu0 %v4286
    %4425 = vmatpush1.msra.mxu0 %v4285
    %4426 = vmatprep.subr.mxu0 %v4282
    %4427 = vmatpush1.msra.mxu0 %v4281
    %4428 = vmatprep.subr.mxu0 %v4278
    %4429 = vmatpush1.msra.mxu0 %v4277
    %4430 = vmatprep.subr.mxu0 %v4274
    %4431 = vmatpush1.msra.mxu0 %v4273
    %4432 = vmatprep.subr.mxu0 %v4270
    %4433 = vmatpush1.msra.mxu0 %v4269
    %4434 = vmatprep.subr.mxu0 0.0
    %4435 = vmatpush2.msra.mxu0 0.0
    %4436 = vmatprep.subr.mxu0 0.0
    %4437 = vmatpush2.msra.mxu0 0.0
    %4438 = vmatprep.subr.mxu0 0.0
    %4439 = vmatpush2.msra.mxu0 0.0
    %4440 = vmatprep.subr.mxu0 0.0
    %4441 = vmatpush2.msra.mxu0 0.0
    %4442 = vmatprep.subr.mxu0 0.0
    %4443 = vmatpush2.msra.mxu0 0.0
    %4444 = vmatprep.subr.mxu0 0.0
    %4445 = vmatpush2.msra.mxu0 0.0
    %4446 = vmatprep.subr.mxu0 0.0
    %4447 = vmatpush2.msra.mxu0 0.0
    %4448 = vmatprep.subr.mxu0 0.0
    %4449 = vmatpush2.msra.mxu0 0.0
    %4450 = vmatprep.subr.mxu0 0.0
    %4451 = vmatpush2.msra.mxu0 0.0
    %4452 = vmatprep.subr.mxu0 0.0
    %4453 = vmatpush2.msra.mxu0 0.0
    %4454 = vmatprep.subr.mxu0 0.0
    %4455 = vmatpush2.msra.mxu0 0.0
    %4456 = vmatprep.subr.mxu0 0.0
    %4457 = vmatpush2.msra.mxu0 0.0
    %4458 = vmatprep.subr.mxu0 0.0
    %4459 = vmatpush2.msra.mxu0 0.0
    %4460 = vmatprep.subr.mxu0 0.0
    %4461 = vmatpush2.msra.mxu0 0.0
    %4462 = vmatprep.subr.mxu0 0.0
    %4463 = vmatpush2.msra.mxu0 0.0
    %4464 = vmatprep.subr.mxu0 0.0
    %4465 = vmatpush2.msra.mxu0 0.0
    %4466 = vmatprep.mubr.f32.mxu0 0.0
    %4467 = vmatmul.mubr.f32.gmra.mxu0 %v3945
    %v4468 = vpop.f32.mrf.mxu0
    %v4469 = vadd.f32 0.0, %v4468
    %v4470 = vpop.f32.mrf.mxu0
    %v4471 = vadd.f32 0.0, %v4470
    %4472 = vdwg.mxu0
    %v4473 = vadd.f32 %v4263, %v4398
    %v4474 = vadd.f32 %v4264, %v4400
    %v4475 = vadd.f32 %v4265, %v4469
    %v4476 = vadd.f32 %v4266, %v4471
    %v4477 = vxor.u32 %v4473, 2147483648
    %v4478 = vxor.u32 %v4474, 2147483648
    %v4479 = vxor.u32 %v4475, 2147483648
    %v4480 = vmul.f32 %v4477, 1.442695
    %v4481 = vpow.pop %v4480
    %v4482 = vmul.f32 %v4478, 1.442695
    %v4483 = vpow.pop %v4482
    %v4484 = vmul.f32 %v4479, 1.442695
    %v4485 = vpow.pop %v4484
    %v4486 = vadd.f32 %v4481, 1.0
    %v4487 = vadd.f32 %v4483, 1.0
    %v4488 = vadd.f32 %v4485, 1.0
    %v4489 = vrcp.pop %v4486
    %v4490 = vmul.f32 1.0, %v4489
    %v4491 = vrcp.pop %v4487
    %v4492 = vmul.f32 1.0, %v4491
    %v4493 = vrcp.pop %v4488
    %v4494 = vmul.f32 1.0, %v4493
    %v4495 = vtanh.pop %v4476
    %v4496 = vmul.f32 %v4492, %v3943
    %v4497 = vmul.f32 %v4490, %v4495
    %v4498 = vadd.f32 %v4496, %v4497
    %v4499 = vtanh.pop %v4498
    %v4500 = vmul.f32 %v4494, %v4499
    %v4501 = vld [vmem:[#allocation7] sm:$0xff]
    %v4502 = vld [vmem:[#allocation7 + $0x8] sm:$0xff]
    %v4503 = vld [vmem:[#allocation7 + $0x10] sm:$0xff]
    %v4504 = vld [vmem:[#allocation7 + $0x18] sm:$0xff]
    %v4505 = vld [vmem:[#allocation7 + $0x20] sm:$0xff]
    %v4506 = vld [vmem:[#allocation7 + $0x28] sm:$0xff]
    %v4507 = vld [vmem:[#allocation7 + $0x30] sm:$0xff]
    %v4508 = vld [vmem:[#allocation7 + $0x38] sm:$0xff]
    %v4509 = vld [vmem:[#allocation7 + $0x40] sm:$0xff]
    %v4510 = vld [vmem:[#allocation7 + $0x48] sm:$0xff]
    %v4511 = vld [vmem:[#allocation7 + $0x50] sm:$0xff]
    %v4512 = vld [vmem:[#allocation7 + $0x58] sm:$0xff]
    %v4513 = vld [vmem:[#allocation7 + $0x60] sm:$0xff]
    %v4514 = vld [vmem:[#allocation7 + $0x68] sm:$0xff]
    %v4515 = vld [vmem:[#allocation7 + $0x70] sm:$0xff]
    %v4516 = vld [vmem:[#allocation7 + $0x78] sm:$0xff]
    %v4517 = vld [vmem:[#allocation7 + $0x80] sm:$0xff]
    %v4518 = vld [vmem:[#allocation7 + $0x88] sm:$0xff]
    %v4519 = vld [vmem:[#allocation7 + $0x90] sm:$0xff]
    %v4520 = vld [vmem:[#allocation7 + $0x98] sm:$0xff]
    %v4521 = vld [vmem:[#allocation7 + $0xa0] sm:$0xff]
    %v4522 = vld [vmem:[#allocation7 + $0xa8] sm:$0xff]
    %v4523 = vld [vmem:[#allocation7 + $0xb0] sm:$0xff]
    %v4524 = vld [vmem:[#allocation7 + $0xb8] sm:$0xff]
    %v4525 = vld [vmem:[#allocation7 + $0xc0] sm:$0xff]
    %v4526 = vld [vmem:[#allocation7 + $0xc8] sm:$0xff]
    %v4527 = vld [vmem:[#allocation7 + $0xd0] sm:$0xff]
    %v4528 = vld [vmem:[#allocation7 + $0xd8] sm:$0xff]
    %v4529 = vld [vmem:[#allocation7 + $0xe0] sm:$0xff]
    %v4530 = vld [vmem:[#allocation7 + $0xe8] sm:$0xff]
    %v4531 = vld [vmem:[#allocation7 + $0xf0] sm:$0xff]
    %v4532 = vld [vmem:[#allocation7 + $0xf8] sm:$0xff]
    %v4533 = vld [vmem:[#allocation7 + $0x100] sm:$0xff]
    %v4534 = vld [vmem:[#allocation7 + $0x108] sm:$0xff]
    %v4535 = vld [vmem:[#allocation7 + $0x110] sm:$0xff]
    %v4536 = vld [vmem:[#allocation7 + $0x118] sm:$0xff]
    %v4537 = vld [vmem:[#allocation7 + $0x120] sm:$0xff]
    %v4538 = vld [vmem:[#allocation7 + $0x128] sm:$0xff]
    %v4539 = vld [vmem:[#allocation7 + $0x130] sm:$0xff]
    %v4540 = vld [vmem:[#allocation7 + $0x138] sm:$0xff]
    %v4541 = vld [vmem:[#allocation7 + $0x140] sm:$0xff]
    %v4542 = vld [vmem:[#allocation7 + $0x148] sm:$0xff]
    %v4543 = vld [vmem:[#allocation7 + $0x150] sm:$0xff]
    %v4544 = vld [vmem:[#allocation7 + $0x158] sm:$0xff]
    %v4545 = vld [vmem:[#allocation7 + $0x160] sm:$0xff]
    %v4546 = vld [vmem:[#allocation7 + $0x168] sm:$0xff]
    %v4547 = vld [vmem:[#allocation7 + $0x170] sm:$0xff]
    %v4548 = vld [vmem:[#allocation7 + $0x178] sm:$0xff]
    %v4549 = vld [vmem:[#allocation7 + $0x180] sm:$0xff]
    %v4550 = vld [vmem:[#allocation7 + $0x188] sm:$0xff]
    %v4551 = vld [vmem:[#allocation7 + $0x190] sm:$0xff]
    %v4552 = vld [vmem:[#allocation7 + $0x198] sm:$0xff]
    %v4553 = vld [vmem:[#allocation7 + $0x1a0] sm:$0xff]
    %v4554 = vld [vmem:[#allocation7 + $0x1a8] sm:$0xff]
    %v4555 = vld [vmem:[#allocation7 + $0x1b0] sm:$0xff]
    %v4556 = vld [vmem:[#allocation7 + $0x1b8] sm:$0xff]
    %v4557 = vld [vmem:[#allocation7 + $0x1c0] sm:$0xff]
    %v4558 = vld [vmem:[#allocation7 + $0x1c8] sm:$0xff]
    %v4559 = vld [vmem:[#allocation7 + $0x1d0] sm:$0xff]
    %v4560 = vld [vmem:[#allocation7 + $0x1d8] sm:$0xff]
    %v4561 = vld [vmem:[#allocation7 + $0x1e0] sm:$0xff]
    %v4562 = vld [vmem:[#allocation7 + $0x1e8] sm:$0xff]
    %v4563 = vld [vmem:[#allocation7 + $0x1f0] sm:$0xff]
    %v4564 = vld [vmem:[#allocation7 + $0x1f8] sm:$0xff]
    %v4565 = vld [vmem:[#allocation7 + $0x200] sm:$0xff]
    %v4566 = vld [vmem:[#allocation7 + $0x208] sm:$0xff]
    %v4567 = vld [vmem:[#allocation7 + $0x210] sm:$0xff]
    %v4568 = vld [vmem:[#allocation7 + $0x218] sm:$0xff]
    %v4569 = vld [vmem:[#allocation7 + $0x220] sm:$0xff]
    %v4570 = vld [vmem:[#allocation7 + $0x228] sm:$0xff]
    %v4571 = vld [vmem:[#allocation7 + $0x230] sm:$0xff]
    %v4572 = vld [vmem:[#allocation7 + $0x238] sm:$0xff]
    %v4573 = vld [vmem:[#allocation7 + $0x240] sm:$0xff]
    %v4574 = vld [vmem:[#allocation7 + $0x248] sm:$0xff]
    %v4575 = vld [vmem:[#allocation7 + $0x250] sm:$0xff]
    %v4576 = vld [vmem:[#allocation7 + $0x258] sm:$0xff]
    %v4577 = vld [vmem:[#allocation7 + $0x260] sm:$0xff]
    %v4578 = vld [vmem:[#allocation7 + $0x268] sm:$0xff]
    %v4579 = vld [vmem:[#allocation7 + $0x270] sm:$0xff]
    %v4580 = vld [vmem:[#allocation7 + $0x278] sm:$0xff]
    %v4581 = vld [vmem:[#allocation7 + $0x280] sm:$0xff]
    %v4582 = vld [vmem:[#allocation7 + $0x288] sm:$0xff]
    %v4583 = vld [vmem:[#allocation7 + $0x290] sm:$0xff]
    %v4584 = vld [vmem:[#allocation7 + $0x298] sm:$0xff]
    %v4585 = vld [vmem:[#allocation7 + $0x2a0] sm:$0xff]
    %v4586 = vld [vmem:[#allocation7 + $0x2a8] sm:$0xff]
    %v4587 = vld [vmem:[#allocation7 + $0x2b0] sm:$0xff]
    %v4588 = vld [vmem:[#allocation7 + $0x2b8] sm:$0xff]
    %v4589 = vld [vmem:[#allocation7 + $0x2c0] sm:$0xff]
    %v4590 = vld [vmem:[#allocation7 + $0x2c8] sm:$0xff]
    %v4591 = vld [vmem:[#allocation7 + $0x2d0] sm:$0xff]
    %v4592 = vld [vmem:[#allocation7 + $0x2d8] sm:$0xff]
    %v4593 = vld [vmem:[#allocation7 + $0x2e0] sm:$0xff]
    %v4594 = vld [vmem:[#allocation7 + $0x2e8] sm:$0xff]
    %v4595 = vld [vmem:[#allocation7 + $0x2f0] sm:$0xff]
    %v4596 = vld [vmem:[#allocation7 + $0x2f8] sm:$0xff]
    %v4597 = vld [vmem:[#allocation7 + $0x300] sm:$0xff]
    %v4598 = vld [vmem:[#allocation7 + $0x308] sm:$0xff]
    %v4599 = vld [vmem:[#allocation7 + $0x310] sm:$0xff]
    %v4600 = vld [vmem:[#allocation7 + $0x318] sm:$0xff]
    %v4601 = vld [vmem:[#allocation7 + $0x320] sm:$0xff]
    %v4602 = vld [vmem:[#allocation7 + $0x328] sm:$0xff]
    %v4603 = vld [vmem:[#allocation7 + $0x330] sm:$0xff]
    %v4604 = vld [vmem:[#allocation7 + $0x338] sm:$0xff]
    %v4605 = vld [vmem:[#allocation7 + $0x340] sm:$0xff]
    %v4606 = vld [vmem:[#allocation7 + $0x348] sm:$0xff]
    %v4607 = vld [vmem:[#allocation7 + $0x350] sm:$0xff]
    %v4608 = vld [vmem:[#allocation7 + $0x358] sm:$0xff]
    %v4609 = vld [vmem:[#allocation7 + $0x360] sm:$0xff]
    %v4610 = vld [vmem:[#allocation7 + $0x368] sm:$0xff]
    %v4611 = vld [vmem:[#allocation7 + $0x370] sm:$0xff]
    %v4612 = vld [vmem:[#allocation7 + $0x378] sm:$0xff]
    %v4613 = vld [vmem:[#allocation7 + $0x380] sm:$0xff]
    %v4614 = vld [vmem:[#allocation7 + $0x388] sm:$0xff]
    %v4615 = vld [vmem:[#allocation7 + $0x390] sm:$0xff]
    %v4616 = vld [vmem:[#allocation7 + $0x398] sm:$0xff]
    %v4617 = vld [vmem:[#allocation7 + $0x3a0] sm:$0xff]
    %v4618 = vld [vmem:[#allocation7 + $0x3a8] sm:$0xff]
    %v4619 = vld [vmem:[#allocation7 + $0x3b0] sm:$0xff]
    %v4620 = vld [vmem:[#allocation7 + $0x3b8] sm:$0xff]
    %v4621 = vld [vmem:[#allocation7 + $0x3c0] sm:$0xff]
    %v4622 = vld [vmem:[#allocation7 + $0x3c8] sm:$0xff]
    %v4623 = vld [vmem:[#allocation7 + $0x3d0] sm:$0xff]
    %v4624 = vld [vmem:[#allocation7 + $0x3d8] sm:$0xff]
    %v4625 = vld [vmem:[#allocation7 + $0x3e0] sm:$0xff]
    %v4626 = vld [vmem:[#allocation7 + $0x3e8] sm:$0xff]
    %v4627 = vld [vmem:[#allocation7 + $0x3f0] sm:$0xff]
    %v4628 = vld [vmem:[#allocation7 + $0x3f8] sm:$0xff]
    %v4629 = vld [vmem:[%s5] sm:$0xf]
    %v4631 = vlaneseq
    %v4632 = vshrl.u32 %v4631, 7
    %v4633 = vsub.s32 0, %v4632
    %v4634 = vrot.slane %v4629, %v4633
    %v4635 = vlaneseq
    %v4636 = vshrl.u32 %v4635, 7
    %v4637 = vsub.s32 1, %v4636
    %v4638 = vrot.slane %v4629, %v4637
    %v4639 = vlaneseq
    %v4640 = vshrl.u32 %v4639, 7
    %v4641 = vsub.s32 2, %v4640
    %v4642 = vrot.slane %v4629, %v4641
    %v4643 = vlaneseq
    %v4644 = vshrl.u32 %v4643, 7
    %v4645 = vsub.s32 3, %v4644
    %v4646 = vrot.slane %v4629, %v4645
    %4651 = vmatprep.subr.mxu0 %v4562
    %4652 = vmatpush1.msra.mxu0 %v4561
    %4653 = vmatprep.subr.mxu0 %v4558
    %4654 = vmatpush1.msra.mxu0 %v4557
    %4655 = vmatprep.subr.mxu0 %v4554
    %4656 = vmatpush1.msra.mxu0 %v4553
    %4657 = vmatprep.subr.mxu0 %v4550
    %4658 = vmatpush1.msra.mxu0 %v4549
    %4659 = vmatprep.subr.mxu0 %v4546
    %4660 = vmatpush1.msra.mxu0 %v4545
    %4661 = vmatprep.subr.mxu0 %v4542
    %4662 = vmatpush1.msra.mxu0 %v4541
    %4663 = vmatprep.subr.mxu0 %v4538
    %4664 = vmatpush1.msra.mxu0 %v4537
    %4665 = vmatprep.subr.mxu0 %v4534
    %4666 = vmatpush1.msra.mxu0 %v4533
    %4667 = vmatprep.subr.mxu0 %v4530
    %4668 = vmatpush1.msra.mxu0 %v4529
    %4669 = vmatprep.subr.mxu0 %v4526
    %4670 = vmatpush1.msra.mxu0 %v4525
    %4671 = vmatprep.subr.mxu0 %v4522
    %4672 = vmatpush1.msra.mxu0 %v4521
    %4673 = vmatprep.subr.mxu0 %v4518
    %4674 = vmatpush1.msra.mxu0 %v4517
    %4675 = vmatprep.subr.mxu0 %v4514
    %4676 = vmatpush1.msra.mxu0 %v4513
    %4677 = vmatprep.subr.mxu0 %v4510
    %4678 = vmatpush1.msra.mxu0 %v4509
    %4679 = vmatprep.subr.mxu0 %v4506
    %4680 = vmatpush1.msra.mxu0 %v4505
    %4681 = vmatprep.subr.mxu0 %v4502
    %4682 = vmatpush1.msra.mxu0 %v4501
    %4683 = vmatprep.subr.mxu0 %v4626
    %4684 = vmatpush2.msra.mxu0 %v4625
    %4685 = vmatprep.subr.mxu0 %v4622
    %4686 = vmatpush2.msra.mxu0 %v4621
    %4687 = vmatprep.subr.mxu0 %v4618
    %4688 = vmatpush2.msra.mxu0 %v4617
    %4689 = vmatprep.subr.mxu0 %v4614
    %4690 = vmatpush2.msra.mxu0 %v4613
    %4691 = vmatprep.subr.mxu0 %v4610
    %4692 = vmatpush2.msra.mxu0 %v4609
    %4693 = vmatprep.subr.mxu0 %v4606
    %4694 = vmatpush2.msra.mxu0 %v4605
    %4695 = vmatprep.subr.mxu0 %v4602
    %4696 = vmatpush2.msra.mxu0 %v4601
    %4697 = vmatprep.subr.mxu0 %v4598
    %4698 = vmatpush2.msra.mxu0 %v4597
    %4699 = vmatprep.subr.mxu0 %v4594
    %4700 = vmatpush2.msra.mxu0 %v4593
    %4701 = vmatprep.subr.mxu0 %v4590
    %4702 = vmatpush2.msra.mxu0 %v4589
    %4703 = vmatprep.subr.mxu0 %v4586
    %4704 = vmatpush2.msra.mxu0 %v4585
    %4705 = vmatprep.subr.mxu0 %v4582
    %4706 = vmatpush2.msra.mxu0 %v4581
    %4707 = vmatprep.subr.mxu0 %v4578
    %4708 = vmatpush2.msra.mxu0 %v4577
    %4709 = vmatprep.subr.mxu0 %v4574
    %4710 = vmatpush2.msra.mxu0 %v4573
    %4711 = vmatprep.subr.mxu0 %v4570
    %4712 = vmatpush2.msra.mxu0 %v4569
    %4713 = vmatprep.subr.mxu0 %v4566
    %4714 = vmatpush2.msra.mxu0 %v4565
    %4715 = vmatprep.mubr.f32.mxu0 %v4261
    %4716 = vmatmul.mubr.f32.gmra.mxu0 %v4500
    %v4717 = vpop.f32.mrf.mxu0
    %v4718 = vadd.f32 %v4634, %v4717
    %v4719 = vpop.f32.mrf.mxu0
    %v4720 = vadd.f32 %v4638, %v4719
    %4721 = vdwg.mxu0
    %4722 = vmatprep.subr.mxu0 %v4564
    %4723 = vmatpush1.msra.mxu0 %v4563
    %4724 = vmatprep.subr.mxu0 %v4560
    %4725 = vmatpush1.msra.mxu0 %v4559
    %4726 = vmatprep.subr.mxu0 %v4556
    %4727 = vmatpush1.msra.mxu0 %v4555
    %4728 = vmatprep.subr.mxu0 %v4552
    %4729 = vmatpush1.msra.mxu0 %v4551
    %4730 = vmatprep.subr.mxu0 %v4548
    %4731 = vmatpush1.msra.mxu0 %v4547
    %4732 = vmatprep.subr.mxu0 %v4544
    %4733 = vmatpush1.msra.mxu0 %v4543
    %4734 = vmatprep.subr.mxu0 %v4540
    %4735 = vmatpush1.msra.mxu0 %v4539
    %4736 = vmatprep.subr.mxu0 %v4536
    %4737 = vmatpush1.msra.mxu0 %v4535
    %4738 = vmatprep.subr.mxu0 %v4532
    %4739 = vmatpush1.msra.mxu0 %v4531
    %4740 = vmatprep.subr.mxu0 %v4528
    %4741 = vmatpush1.msra.mxu0 %v4527
    %4742 = vmatprep.subr.mxu0 %v4524
    %4743 = vmatpush1.msra.mxu0 %v4523
    %4744 = vmatprep.subr.mxu0 %v4520
    %4745 = vmatpush1.msra.mxu0 %v4519
    %4746 = vmatprep.subr.mxu0 %v4516
    %4747 = vmatpush1.msra.mxu0 %v4515
    %4748 = vmatprep.subr.mxu0 %v4512
    %4749 = vmatpush1.msra.mxu0 %v4511
    %4750 = vmatprep.subr.mxu0 %v4508
    %4751 = vmatpush1.msra.mxu0 %v4507
    %4752 = vmatprep.subr.mxu0 %v4504
    %4753 = vmatpush1.msra.mxu0 %v4503
    %4754 = vmatprep.subr.mxu0 %v4628
    %4755 = vmatpush2.msra.mxu0 %v4627
    %4756 = vmatprep.subr.mxu0 %v4624
    %4757 = vmatpush2.msra.mxu0 %v4623
    %4758 = vmatprep.subr.mxu0 %v4620
    %4759 = vmatpush2.msra.mxu0 %v4619
    %4760 = vmatprep.subr.mxu0 %v4616
    %4761 = vmatpush2.msra.mxu0 %v4615
    %4762 = vmatprep.subr.mxu0 %v4612
    %4763 = vmatpush2.msra.mxu0 %v4611
    %4764 = vmatprep.subr.mxu0 %v4608
    %4765 = vmatpush2.msra.mxu0 %v4607
    %4766 = vmatprep.subr.mxu0 %v4604
    %4767 = vmatpush2.msra.mxu0 %v4603
    %4768 = vmatprep.subr.mxu0 %v4600
    %4769 = vmatpush2.msra.mxu0 %v4599
    %4770 = vmatprep.subr.mxu0 %v4596
    %4771 = vmatpush2.msra.mxu0 %v4595
    %4772 = vmatprep.subr.mxu0 %v4592
    %4773 = vmatpush2.msra.mxu0 %v4591
    %4774 = vmatprep.subr.mxu0 %v4588
    %4775 = vmatpush2.msra.mxu0 %v4587
    %4776 = vmatprep.subr.mxu0 %v4584
    %4777 = vmatpush2.msra.mxu0 %v4583
    %4778 = vmatprep.subr.mxu0 %v4580
    %4779 = vmatpush2.msra.mxu0 %v4579
    %4780 = vmatprep.subr.mxu0 %v4576
    %4781 = vmatpush2.msra.mxu0 %v4575
    %4782 = vmatprep.subr.mxu0 %v4572
    %4783 = vmatpush2.msra.mxu0 %v4571
    %4784 = vmatprep.subr.mxu0 %v4568
    %4785 = vmatpush2.msra.mxu0 %v4567
    %4786 = vmatprep.mubr.f32.mxu0 %v4261
    %4787 = vmatmul.mubr.f32.gmra.mxu0 %v4500
    %v4788 = vpop.f32.mrf.mxu0
    %v4789 = vadd.f32 %v4642, %v4788
    %v4790 = vpop.f32.mrf.mxu0
    %v4791 = vadd.f32 %v4646, %v4790
    %4792 = vdwg.mxu0
    %v4793 = vxor.u32 %v4718, 2147483648
    %v4794 = vxor.u32 %v4720, 2147483648
    %v4795 = vxor.u32 %v4789, 2147483648
    %v4796 = vmul.f32 %v4793, 1.442695
    %v4797 = vpow.pop %v4796
    %v4798 = vmul.f32 %v4794, 1.442695
    %v4799 = vpow.pop %v4798
    %v4800 = vmul.f32 %v4795, 1.442695
    %v4801 = vpow.pop %v4800
    %v4802 = vadd.f32 %v4797, 1.0
    %v4803 = vadd.f32 %v4799, 1.0
    %v4804 = vadd.f32 %v4801, 1.0
    %v4805 = vrcp.pop %v4802
    %v4806 = vmul.f32 1.0, %v4805
    %v4807 = vrcp.pop %v4803
    %v4808 = vmul.f32 1.0, %v4807
    %v4809 = vrcp.pop %v4804
    %v4810 = vmul.f32 1.0, %v4809
    %v4811 = vtanh.pop %v4791
    %v4812 = vmul.f32 %v4808, %v4259
    %v4813 = vmul.f32 %v4806, %v4811
    %v4814 = vadd.f32 %v4812, %v4813
    %v4815 = vtanh.pop %v4814
    %v4816 = vmul.f32 %v4810, %v4815
    %4817 = vst [vmem:[#allocation3 + $0x38] sm:$0xff] %v4816
    %v4818 = vld [vmem:[#allocation3] sm:$0xff]
    %v4819 = vld [vmem:[#allocation3 + $0x8] sm:$0xff]
    %v4820 = vld [vmem:[#allocation3 + $0x10] sm:$0xff]
    %v4821 = vld [vmem:[#allocation3 + $0x18] sm:$0xff]
    %v4822 = vld [vmem:[#allocation3 + $0x20] sm:$0xff]
    %v4823 = vld [vmem:[#allocation3 + $0x28] sm:$0xff]
    %v4824 = vld [vmem:[#allocation3 + $0x30] sm:$0xff]
    %v4825 = vld [vmem:[#allocation3 + $0x38] sm:$0xff]
    %v4826 = vld [vmem:[#allocation9] sm:$0xff]
    %v4827 = vld [vmem:[#allocation9 + $0x8] sm:$0xff]
    %v4828 = vld [vmem:[#allocation9 + $0x10] sm:$0xff]
    %v4829 = vld [vmem:[#allocation9 + $0x18] sm:$0xff]
    %v4830 = vld [vmem:[#allocation9 + $0x20] sm:$0xff]
    %v4831 = vld [vmem:[#allocation9 + $0x28] sm:$0xff]
    %v4832 = vld [vmem:[#allocation9 + $0x30] sm:$0xff]
    %v4833 = vld [vmem:[#allocation9 + $0x38] sm:$0xff]
    %v4834 = vld [vmem:[#allocation9 + $0x40] sm:$0xff]
    %v4835 = vld [vmem:[#allocation9 + $0x48] sm:$0xff]
    %v4836 = vld [vmem:[#allocation9 + $0x50] sm:$0xff]
    %v4837 = vld [vmem:[#allocation9 + $0x58] sm:$0xff]
    %v4838 = vld [vmem:[#allocation9 + $0x60] sm:$0xff]
    %v4839 = vld [vmem:[#allocation9 + $0x68] sm:$0xff]
    %v4840 = vld [vmem:[#allocation9 + $0x70] sm:$0xff]
    %v4841 = vld [vmem:[#allocation9 + $0x78] sm:$0xff]
    %v4842 = vld [vmem:[%s7] sm:$0x1]
    %v4844 = vlaneseq
    %v4845 = vshrl.u32 %v4844, 7
    %v4846 = vsub.s32 0, %v4845
    %v4847 = vrot.slane %v4842, %v4846
    %4849 = vmatprep.subr.mxu0 0.0
    %4850 = vmatpush1.msra.mxu0 %v4841
    %4851 = vmatprep.subr.mxu0 0.0
    %4852 = vmatpush1.msra.mxu0 %v4840
    %4853 = vmatprep.subr.mxu0 0.0
    %4854 = vmatpush1.msra.mxu0 %v4839
    %4855 = vmatprep.subr.mxu0 0.0
    %4856 = vmatpush1.msra.mxu0 %v4838
    %4857 = vmatprep.subr.mxu0 0.0
    %4858 = vmatpush1.msra.mxu0 %v4837
    %4859 = vmatprep.subr.mxu0 0.0
    %4860 = vmatpush1.msra.mxu0 %v4836
    %4861 = vmatprep.subr.mxu0 0.0
    %4862 = vmatpush1.msra.mxu0 %v4835
    %4863 = vmatprep.subr.mxu0 0.0
    %4864 = vmatpush1.msra.mxu0 %v4834
    %4865 = vmatprep.subr.mxu0 0.0
    %4866 = vmatpush1.msra.mxu0 %v4833
    %4867 = vmatprep.subr.mxu0 0.0
    %4868 = vmatpush1.msra.mxu0 %v4832
    %4869 = vmatprep.subr.mxu0 0.0
    %4870 = vmatpush1.msra.mxu0 %v4831
    %4871 = vmatprep.subr.mxu0 0.0
    %4872 = vmatpush1.msra.mxu0 %v4830
    %4873 = vmatprep.subr.mxu0 0.0
    %4874 = vmatpush1.msra.mxu0 %v4829
    %4875 = vmatprep.subr.mxu0 0.0
    %4876 = vmatpush1.msra.mxu0 %v4828
    %4877 = vmatprep.subr.mxu0 0.0
    %4878 = vmatpush1.msra.mxu0 %v4827
    %4879 = vmatprep.subr.mxu0 0.0
    %4880 = vmatpush1.msra.mxu0 %v4826
    %4881 = vmatprep.subr.mxu0 0.0
    %4882 = vmatpush2.msra.mxu0 0.0
    %4883 = vmatprep.subr.mxu0 0.0
    %4884 = vmatpush2.msra.mxu0 0.0
    %4885 = vmatprep.subr.mxu0 0.0
    %4886 = vmatpush2.msra.mxu0 0.0
    %4887 = vmatprep.subr.mxu0 0.0
    %4888 = vmatpush2.msra.mxu0 0.0
    %4889 = vmatprep.subr.mxu0 0.0
    %4890 = vmatpush2.msra.mxu0 0.0
    %4891 = vmatprep.subr.mxu0 0.0
    %4892 = vmatpush2.msra.mxu0 0.0
    %4893 = vmatprep.subr.mxu0 0.0
    %4894 = vmatpush2.msra.mxu0 0.0
    %4895 = vmatprep.subr.mxu0 0.0
    %4896 = vmatpush2.msra.mxu0 0.0
    %4897 = vmatprep.subr.mxu0 0.0
    %4898 = vmatpush2.msra.mxu0 0.0
    %4899 = vmatprep.subr.mxu0 0.0
    %4900 = vmatpush2.msra.mxu0 0.0
    %4901 = vmatprep.subr.mxu0 0.0
    %4902 = vmatpush2.msra.mxu0 0.0
    %4903 = vmatprep.subr.mxu0 0.0
    %4904 = vmatpush2.msra.mxu0 0.0
    %4905 = vmatprep.subr.mxu0 0.0
    %4906 = vmatpush2.msra.mxu0 0.0
    %4907 = vmatprep.subr.mxu0 0.0
    %4908 = vmatpush2.msra.mxu0 0.0
    %4909 = vmatprep.subr.mxu0 0.0
    %4910 = vmatpush2.msra.mxu0 0.0
    %4911 = vmatprep.subr.mxu0 0.0
    %4912 = vmatpush2.msra.mxu0 0.0
    %4913 = vmatprep.mubr.f32.mxu0 0.0
    %4914 = vmatmul.mubr.f32.gmra.mxu0 %v4818
    %v4915 = vpop.f32.mrf.mxu0
    %v4916 = vadd.f32 %v4847, %v4915
    %v4917 = vpop.f32.mrf.mxu0
    %4918 = vmatprep.mubr.f32.mxu0 0.0
    %4919 = vmatmul.mubr.f32.gmra.mxu0 %v4819
    %v4920 = vpop.f32.mrf.mxu0
    %v4921 = vadd.f32 %v4847, %v4920
    %v4922 = vpop.f32.mrf.mxu0
    %4923 = vmatprep.mubr.f32.mxu0 0.0
    %4924 = vmatmul.mubr.f32.gmra.mxu0 %v4820
    %v4925 = vpop.f32.mrf.mxu0
    %v4926 = vadd.f32 %v4847, %v4925
    %v4927 = vpop.f32.mrf.mxu0
    %4928 = vmatprep.mubr.f32.mxu0 0.0
    %4929 = vmatmul.mubr.f32.gmra.mxu0 %v4821
    %v4930 = vpop.f32.mrf.mxu0
    %v4931 = vadd.f32 %v4847, %v4930
    %v4932 = vpop.f32.mrf.mxu0
    %4933 = vmatprep.mubr.f32.mxu0 0.0
    %4934 = vmatmul.mubr.f32.gmra.mxu0 %v4822
    %v4935 = vpop.f32.mrf.mxu0
    %v4936 = vadd.f32 %v4847, %v4935
    %v4937 = vpop.f32.mrf.mxu0
    %4938 = vmatprep.mubr.f32.mxu0 0.0
    %4939 = vmatmul.mubr.f32.gmra.mxu0 %v4823
    %v4940 = vpop.f32.mrf.mxu0
    %v4941 = vadd.f32 %v4847, %v4940
    %v4942 = vpop.f32.mrf.mxu0
    %4943 = vmatprep.mubr.f32.mxu0 0.0
    %4944 = vmatmul.mubr.f32.gmra.mxu0 %v4824
    %v4945 = vpop.f32.mrf.mxu0
    %v4946 = vadd.f32 %v4847, %v4945
    %v4947 = vpop.f32.mrf.mxu0
    %4948 = vmatprep.mubr.f32.mxu0 0.0
    %4949 = vmatmul.mubr.f32.gmra.mxu0 %v4825
    %v4950 = vpop.f32.mrf.mxu0
    %v4951 = vadd.f32 %v4847, %v4950
    %v4952 = vpop.f32.mrf.mxu0
    %4953 = vdwg.mxu0
    %4954 = vst [vmem:[#allocation10] sm:$0xff] %v4916
    %4955 = vst [vmem:[#allocation10 + $0x8] sm:$0xff] %v4921
    %4956 = vst [vmem:[#allocation10 + $0x10] sm:$0xff] %v4926
    %4957 = vst [vmem:[#allocation10 + $0x18] sm:$0xff] %v4931
    %4958 = vst [vmem:[#allocation10 + $0x20] sm:$0xff] %v4936
    %4959 = vst [vmem:[#allocation10 + $0x28] sm:$0xff] %v4941
    %4960 = vst [vmem:[#allocation10 + $0x30] sm:$0xff] %v4946
    %4961 = vst [vmem:[#allocation10 + $0x38] sm:$0xff] %v4951
    // Predicated region
    $region46: #{tpu_custom_call.1} parent=1 // pred_check
      _
    $region47: #{tpu_custom_call.1} parent=1 // pred_check_branch
      %4963 = sbr.rel (0) target = $region49
    $region48: #{tpu_custom_call.1} parent=1 // pred_region
      %s4965 = ssub.s32 1024, 1024
      %4966 = vsyncadd [#allocation6], %s4965
      %s4967 = sshll.u32 [#allocation10], 4
      %s4968 = int_to_ptr.vmem [resolvable:$true] %s4967
      %4973 = dma.vmem_to_hbm [thread:$0]  %s4968, 1024, %s8, [#allocation6], 128, 128, 8
    $region49: #{tpu_custom_call.1} parent=1 // pred_fallthru
      _
    // Predicated region
    $region50: #{tpu_custom_call.1} parent=1 // pred_check
      _
    $region51: #{tpu_custom_call.1} parent=1 // pred_check_branch
      %4975 = sbr.rel (0) target = $region53
    $region52: #{tpu_custom_call.1} parent=1 // pred_region
      %4976 = dma.done [#allocation6], 1024
    $region53: #{tpu_custom_call.1} parent=1 // pred_fallthru
      _
    %4977 = vsyncpa [#allocation5], 1
    %4978 = vsyncpa [#allocation8], 1
    %4979 = vsyncpa [#allocation6], 1

</llo_original>
